<compile_context>
chip_gen: v5e
topology: v5e:2x2
jax: 0.10.0
libtpu: 0.0.40
codegen_flags: <defaults>
</compile_context>

<pallas_src>
import functools

import numpy as np
import jax
import jax.numpy as jnp
from jax.experimental import pallas as pl
from jax.experimental.pallas import tpu as pltpu

# ---- configuration of InjectionUNet (small but faithful) ---------------------
IN_CH, OUT_CH, INJ_CH = 2, 2, 3
DEPTH, BLOCK_DEPTH = 3, 2          # (default depth is 5; 3 keeps spatial=8 divisible)
NFM, MULT = 4, 2                   # num_feature_maps, feature_map_multiplier
KS = 3                             # kernel_size
PAD = 1                            # (k + (k-1)*(dil-1)) // 2 with dilation=1
NUM_1x1 = 3
EPS = 1e-5                         # InstanceNorm3d eps
NEG_SLOPE = 0.01                   # LeakyReLU default

assert NUM_1x1 == 3, "fused reduce head is written for num_1x1_at_end == 3"


# ---- Pallas kernels ----------------------------------------------------------
def _fused_matmul_kernel(x_ref, w_ref, b_ref, o_ref, *, do_norm, do_act):
    """(Cout, K) @ (K, TP) + b  [-> InstanceNorm over TP] [-> LeakyReLU].

    x_ref: (1, K, TP)  one sample / one P-tile, compute dtype (bf16 or f32)
    w_ref: (Cout, K)   compute dtype
    b_ref: (Cout, 1)   float32
    o_ref: (1, Cout, TP)  compute dtype; TP (spatial) is the lane axis so the
                          stores are lane-dense.
    """
    x = x_ref[0]
    w = w_ref[...]
    y = jnp.dot(w, x, preferred_element_type=jnp.float32)     # f32 accumulate
    y = y + b_ref[...]
    if do_norm:
        # InstanceNorm3d (affine=False).  Valid because the block spans the
        # whole spatial extent of this sample (see TODO about P-tiled stats).
        m = jnp.mean(y, axis=1, keepdims=True)
        v = jnp.mean(jnp.square(y - m), axis=1, keepdims=True)
        y = (y - m) * jax.lax.rsqrt(v + EPS)
    if do_act:
        y = jnp.where(y >= 0, y, NEG_SLOPE * y)
    o_ref[0] = y.astype(o_ref.dtype)


def _reduce_stack_kernel(x_ref, w1_ref, b1_ref, w2_ref, b2_ref, w3_ref, b3_ref,
                         o_ref, *, cdtype):
    """Fused 1x1 -> LReLU -> 1x1 -> LReLU -> 1x1 head; intermediates stay in VMEM.

    The injection channels are already folded into the per-sample bias b1.
    """
    x = x_ref[0]                                               # (C0, TP)
    h = jnp.dot(w1_ref[...], x, preferred_element_type=jnp.float32) + b1_ref[0]
    h = jnp.where(h >= 0, h, NEG_SLOPE * h)
    h = jnp.dot(w2_ref[...], h.astype(cdtype),
                preferred_element_type=jnp.float32) + b2_ref[...]
    h = jnp.where(h >= 0, h, NEG_SLOPE * h)
    y = jnp.dot(w3_ref[...], h.astype(cdtype),
                preferred_element_type=jnp.float32) + b3_ref[...]
    o_ref[0] = y.astype(o_ref.dtype)


# ---- Pallas wrappers ---------------------------------------------------------
def _ptile(P, needs_full_p):
    """Largest lane tile that divides P; norm layers need the whole P."""
    if needs_full_p:
        return P
    for t in (2048, 1024, 512, 256):
        if P > t and P % t == 0:
            return t
    return P


def fused_matmul(x, w, b, *, do_norm, do_act):
    """x: (N, K, P); w: (C, K); b: (C,)  ->  (N, C, P) in x.dtype."""
    N, Kd, P = x.shape
    C = w.shape[0]
    TP = _ptile(P, do_norm)            # norm layers need the whole P per sample
    n_pt = P // TP
    kern = functools.partial(_fused_matmul_kernel, do_norm=do_norm, do_act=do_act)
    return pl.pallas_call(
        kern,
        out_shape=jax.ShapeDtypeStruct((N, C, P), x.dtype),
        grid=(N, n_pt),
        in_specs=[
            pl.BlockSpec((1, Kd, TP), lambda n, t: (n, 0, t)),
            pl.BlockSpec((C, Kd), lambda n, t: (0, 0)),
            pl.BlockSpec((C, 1), lambda n, t: (0, 0)),
        ],
        out_specs=pl.BlockSpec((1, C, TP), lambda n, t: (n, 0, t)),
        compiler_params=pltpu.CompilerParams(
            dimension_semantics=("parallel", "parallel")),
    )(x, w, b.reshape(C, 1).astype(jnp.float32))


def reduce_stack(h, injection, params, cdtype):
    """Fused reduce-0/1/2 head.  torch.cat((x, injection), 1) + conv == folding
    the injection columns of reduce-0 into a per-sample bias (exact)."""
    N, C0, D, H, W = h.shape
    P = D * H * W
    (w1, b1) = params['reduce-0']
    (w2, b2) = params['reduce-1']
    (w3, b3) = params['reduce-2']
    C1, C2, C3 = w1.shape[0], w2.shape[0], w3.shape[0]
    w1_h, w1_i = w1[:, :C0], w1[:, C0:]
    b1_eff = b1[None, :] + injection.astype(jnp.float32) @ w1_i.T        # (N, C1)
    b1_eff = b1_eff[:, :, None].astype(jnp.float32)                      # (N, C1, 1)

    TP = _ptile(P, False)
    n_pt = P // TP
    kern = functools.partial(_reduce_stack_kernel, cdtype=cdtype)
    y = pl.pallas_call(
        kern,
        out_shape=jax.ShapeDtypeStruct((N, C3, P), jnp.float32),
        grid=(N, n_pt),
        in_specs=[
            pl.BlockSpec((1, C0, TP), lambda n, t: (n, 0, t)),
            pl.BlockSpec((C1, C0), lambda n, t: (0, 0)),
            pl.BlockSpec((1, C1, 1), lambda n, t: (n, 0, 0)),
            pl.BlockSpec((C2, C1), lambda n, t: (0, 0)),
            pl.BlockSpec((C2, 1), lambda n, t: (0, 0)),
            pl.BlockSpec((C3, C2), lambda n, t: (0, 0)),
            pl.BlockSpec((C3, 1), lambda n, t: (0, 0)),
        ],
        out_specs=pl.BlockSpec((1, C3, TP), lambda n, t: (n, 0, t)),
        compiler_params=pltpu.CompilerParams(
            dimension_semantics=("parallel", "parallel")),
    )(h.reshape(N, C0, P),
      w1_h.astype(cdtype), b1_eff,
      w2.astype(cdtype), b2.reshape(C2, 1).astype(jnp.float32),
      w3.astype(cdtype), b3.reshape(C3, 1).astype(jnp.float32))
    return y.reshape(N, C3, D, H, W)


# ---- JAX glue: im2col (channels-first), subpixel upconv, pooling -------------
def _im2col_cf(xp, D, H, W, ks):
    """xp: padded (N, C, D+, H+, W+) -> (N, ks^3*C, D*H*W); tap-major / ch-minor."""
    N, C = xp.shape[0], xp.shape[1]
    cols = []
    for kd in range(ks):
        for kh in range(ks):
            for kw in range(ks):
                cols.append(xp[:, :, kd:kd + D, kh:kh + H, kw:kw + W]
                            .reshape(N, C, D * H * W))
    return jnp.concatenate(cols, axis=1)


def conv3x3_in_lrelu(h, w, b, cdtype):
    """Conv3d(k=3, pad=1, bias) -> InstanceNorm3d -> LeakyReLU (NCDHW)."""
    N, Cin, D, H, W = h.shape
    Cout = w.shape[0]
    xp = jnp.pad(h, ((0, 0), (0, 0), (PAD, PAD), (PAD, PAD), (PAD, PAD)))
    patches = _im2col_cf(xp, D, H, W, KS).astype(cdtype)        # (N, 27*Cin, P)
    wm = w.transpose(0, 2, 3, 4, 1).reshape(Cout, KS ** 3 * Cin).astype(cdtype)
    y = fused_matmul(patches, wm, b, do_norm=True, do_act=True)
    return y.reshape(N, Cout, D, H, W)


# ConvTranspose3d(k=3, s=2, p=1, op=1): output o = 2*i - 1 + k  =>
#   even output (q=0): window shift s=0 uses tap k=1; s=1 contributes nothing.
#   odd  output (q=1): shift s=0 uses tap k=2; shift s=1 uses tap k=0.
_UPCONV_KMAP = {(0, 0): 1, (1, 0): 2, (1, 1): 0}


def _upconv_weight_matrix(w_t):
    """w_t: (Cin, Cout, 3, 3, 3) -> (8*Cout, 8*Cin) subpixel matrix.

    Rows ordered (qd, qh, qw, cout); cols ordered (sd, sh, sw, cin).  Entries
    with an invalid (q, s) pairing on any axis are structurally zero."""
    Cin, Cout = w_t.shape[0], w_t.shape[1]
    zero = jnp.zeros((Cout, Cin), w_t.dtype)
    rows = []
    for qd in range(2):
        for qh in range(2):
            for qw in range(2):
                cols = []
                for sd in range(2):
                    for sh in range(2):
                        for sw in range(2):
                            valid = ((qd, sd) in _UPCONV_KMAP and
                                     (qh, sh) in _UPCONV_KMAP and
                                     (qw, sw) in _UPCONV_KMAP)
                            if valid:
                                blk = w_t[:, :, _UPCONV_KMAP[(qd, sd)],
                                          _UPCONV_KMAP[(qh, sh)],
                                          _UPCONV_KMAP[(qw, sw)]].T   # (Cout, Cin)
                            else:
                                blk = zero
                            cols.append(blk)
                rows.append(jnp.concatenate(cols, axis=1))            # (Cout, 8*Cin)
    return jnp.concatenate(rows, axis=0)                              # (8*Cout, 8*Cin)


def upconv3x3_s2(h, w_t, b, cdtype):
    """ConvTranspose3d(k=3, s=2, p=1, op=1, bias) as ONE Pallas matmul:
    2x2x2-window conv producing 8*Cout subpixel channels, then pixel-shuffle."""
    N, Cin, D, H, W = h.shape
    Cout = w_t.shape[1]
    xp = jnp.pad(h, ((0, 0), (0, 0), (0, 1), (0, 1), (0, 1)))   # one trailing zero/axis
    patches = _im2col_cf(xp, D, H, W, 2).astype(cdtype)          # (N, 8*Cin, P)
    wm = _upconv_weight_matrix(w_t).astype(cdtype)               # (8*Cout, 8*Cin)
    bm = jnp.tile(b, 8)                                          # (8*Cout,)
    y = fused_matmul(patches, wm, bm, do_norm=False, do_act=False)
    y = y.reshape(N, 2, 2, 2, Cout, D, H, W)
    # out[n, c, 2d+qd, 2h+qh, 2w+qw] = y[n, qd, qh, qw, c, d, h, w]
    out = y.transpose(0, 4, 5, 1, 6, 2, 7, 3).reshape(N, Cout, 2 * D, 2 * H, 2 * W)
    return out


def avgpool2(h):
    """AvgPool3d(kernel_size=2) as an XLA reshape+mean (no stacked-slice HBM trip)."""
    N, C, D, H, W = h.shape
    y = h.reshape(N, C, D // 2, 2, H // 2, 2, W // 2, 2).astype(jnp.float32)
    return y.mean(axis=(3, 5, 7)).astype(h.dtype)


# ---- parameters (deterministic, synthetic, PyTorch layouts) ------------------
def init_params(key):
    params = {}

    def conv_init(k_, cin, cout, ks):
        kw_, kb_ = jax.random.split(k_)
        std = 1.0 / float(np.sqrt(cin * ks ** 3))
        w = jax.random.normal(kw_, (cout, cin, ks, ks, ks), jnp.float32) * std
        b = jax.random.normal(kb_, (cout,), jnp.float32) * 0.01
        return w, b

    def upconv_init(k_, cin, cout, ks):
        kw_, kb_ = jax.random.split(k_)
        std = 1.0 / float(np.sqrt(cin * ks ** 3))
        w = jax.random.normal(kw_, (cin, cout, ks, ks, ks), jnp.float32) * std
        b = jax.random.normal(kb_, (cout,), jnp.float32) * 0.01
        return w, b

    ki = iter(jax.random.split(key, 64))

    for d in range(DEPTH):
        convs = []
        for i in range(BLOCK_DEPTH):
            if d == DEPTH - 1 and i > 0:
                continue
            out_size = NFM * MULT ** d
            if d == 0 and i == 0:
                in_size = IN_CH
            elif i == 0:
                in_size = NFM * MULT ** (d - 1)
            else:
                in_size = out_size
            convs.append(conv_init(next(ki), in_size, out_size, KS))
        params[f'encode-{d}'] = convs

    for d in reversed(range(DEPTH)):
        convs = []
        for i in range(BLOCK_DEPTH):
            if d == DEPTH - 1 and i > 0:
                continue
            out_size = NFM * MULT ** d
            if i == 0 and d < DEPTH - 1:
                in_size = NFM * MULT ** (d + 1)
            else:
                in_size = out_size
            convs.append(conv_init(next(ki), in_size, out_size, KS))
        up = None
        if d > 0:
            up = upconv_init(next(ki), out_size, out_size // 2, KS)
        params[f'decode-{d}'] = (convs, up)

    out_size = NFM + INJ_CH
    in_size = out_size
    for i in range(NUM_1x1):
        if i == NUM_1x1 - 1:
            out_size = OUT_CH
        kw_, kb_ = jax.random.split(next(ki))
        w = jax.random.normal(kw_, (out_size, in_size), jnp.float32) / float(np.sqrt(in_size))
        b = jax.random.normal(kb_, (out_size,), jnp.float32) * 0.01
        params[f'reduce-{i}'] = (w, b)
    return params


# ---- Pallas forward (matches InjectionUNet.forward) --------------------------
def forward(params, x, injection, *, compute_dtype=jnp.bfloat16):
    h = x.astype(compute_dtype)

    def encode(d, h):
        if d > 0:
            h = avgpool2(h)
        for w, b in params[f'encode-{d}']:
            h = conv3x3_in_lrelu(h, w, b, compute_dtype)
        return h

    def decode(d, h):
        convs, up = params[f'decode-{d}']
        for w, b in convs:
            h = conv3x3_in_lrelu(h, w, b, compute_dtype)
        if up is not None:
            h = upconv3x3_s2(h, up[0], up[1], compute_dtype)
        return h

    enc = [h]
    for d in range(DEPTH - 1):
        enc.append(encode(d, enc[-1]))
    bottom = encode(DEPTH - 1, enc[-1])
    h = decode(DEPTH - 1, bottom)
    for d in reversed(range(DEPTH - 1)):
        skip = enc[-(DEPTH - 1 - d)]
        h = decode(d, jnp.concatenate([skip, h], axis=1))

    return reduce_stack(h, injection, params, compute_dtype)   # NCDHW, float32


# ---- independent pure-XLA reference (lax convs, f32, HIGHEST precision) ------
def _conv3d_ref(x, w, b):
    y = jax.lax.conv_general_dilated(
        x, w, window_strides=(1, 1, 1), padding=[(PAD, PAD)] * 3,
        dimension_numbers=('NCDHW', 'OIDHW', 'NCDHW'),
        precision=jax.lax.Precision.HIGHEST)
    return y + b[None, :, None, None, None]


def _in_lrelu_ref(y):
    m = y.mean(axis=(2, 3, 4), keepdims=True)
    v = jnp.square(y - m).mean(axis=(2, 3, 4), keepdims=True)
    y = (y - m) * jax.lax.rsqrt(v + EPS)
    return jnp.where(y >= 0, y, NEG_SLOPE * y)


def _upconv_ref(x, w_t, b):
    # ConvTranspose3d(k, s=2, p=1, op=1) == conv(dilate_2(x), flip(w)) with pad (1, 2).
    w_f = jnp.flip(w_t, (2, 3, 4))
    y = jax.lax.conv_general_dilated(
        x, w_f, window_strides=(1, 1, 1), padding=[(1, 2)] * 3,
        lhs_dilation=(2, 2, 2),
        dimension_numbers=('NCDHW', 'IODHW', 'NCDHW'),
        precision=jax.lax.Precision.HIGHEST)
    return y + b[None, :, None, None, None]


def forward_reference(params, x, injection):
    def encode(d, h):
        if d > 0:
            N, C, D, H, W = h.shape
            h = h.reshape(N, C, D // 2, 2, H // 2, 2, W // 2, 2).mean(axis=(3, 5, 7))
        for w, b in params[f'encode-{d}']:
            h = _in_lrelu_ref(_conv3d_ref(h, w, b))
        return h

    def decode(d, h):
        convs, up = params[f'decode-{d}']
        for w, b in convs:
            h = _in_lrelu_ref(_conv3d_ref(h, w, b))
        if up is not None:
            h = _upconv_ref(h, up[0], up[1])
        return h

    enc = [x]
    for d in range(DEPTH - 1):
        enc.append(encode(d, enc[-1]))
    bottom = encode(DEPTH - 1, enc[-1])
    h = decode(DEPTH - 1, bottom)
    for d in reversed(range(DEPTH - 1)):
        h = decode(d, jnp.concatenate([enc[-(DEPTH - 1 - d)], h], axis=1))

    if INJ_CH > 0:
        inj = jnp.broadcast_to(injection[:, :, None, None, None],
                               (h.shape[0], INJ_CH) + h.shape[2:]).astype(h.dtype)
        h = jnp.concatenate([h, inj], axis=1)
    for i in range(NUM_1x1):
        w, b = params[f'reduce-{i}']
        h = jnp.einsum('ncdhw,oc->nodhw', h, w,
                       precision=jax.lax.Precision.HIGHEST) + b[None, :, None, None, None]
        if i != NUM_1x1 - 1:
            h = jnp.where(h >= 0, h, NEG_SLOPE * h)
    return h


# ---- demo --------------------------------------------------------------------
if __name__ == "__main__":
    key = jax.random.PRNGKey(0)
    kp, kx, kj = jax.random.split(key, 3)
    params = init_params(kp)

    N, S = 2, 8
    x = jax.random.normal(kx, (N, IN_CH, S, S, S), jnp.float32)      # NCDHW like torch
    injection = jax.random.normal(kj, (N, INJ_CH), jnp.float32)

    fwd_bf16 = jax.jit(functools.partial(forward, compute_dtype=jnp.bfloat16))
    fwd_f32 = jax.jit(functools.partial(forward, compute_dtype=jnp.float32))
    fwd_ref = jax.jit(forward_reference)

    out = jax.block_until_ready(fwd_bf16(params, x, injection))      # optimized path
    out_f32 = jax.block_until_ready(fwd_f32(params, x, injection))   # f32 kernel path
    ref = jax.block_until_ready(fwd_ref(params, x, injection))       # lax reference

    assert out.shape == (N, OUT_CH, S, S, S), out.shape
    assert out_f32.shape == ref.shape == out.shape
    assert bool(jnp.all(jnp.isfinite(out)))
    assert bool(jnp.all(jnp.isfinite(out_f32)))
    assert bool(jnp.all(jnp.isfinite(ref)))

    # Tight structural check: f32 Pallas kernels vs independent lax reference.
    d32 = float(jnp.max(jnp.abs(out_f32 - ref)))
    assert d32 < 2e-3, f"f32 Pallas vs lax reference max abs diff too large: {d32}"

    # bf16-operand path: bounded relative drift vs f32 reference (bf16 operands,
    # f32 accumulation/epilogue — cannot meet f32-level tolerances by design).
    rel = float(jnp.linalg.norm(out.astype(jnp.float32) - ref) / jnp.linalg.norm(ref))
    dbf = float(jnp.max(jnp.abs(out.astype(jnp.float32) - ref)))
    assert rel < 0.08, f"bf16 Pallas relative error too large: {rel}"
    assert dbf < 0.25, f"bf16 Pallas max abs diff too large: {dbf}"

    print("KERNEL_OK")
</pallas_src>

<mosaic_0001>
module attributes {stable_mosaic.version = 11 : i64} {
  func.func @_fused_matmul_kernel(%arg0: i32, %arg1: i32, %arg2: memref<1x54x512xbf16, #tpu.memory_space<vmem>>, %arg3: memref<4x54xbf16, #tpu.memory_space<vmem>>, %arg4: memref<4x1xf32, #tpu.memory_space<vmem>>, %arg5: memref<1x4x512xbf16, #tpu.memory_space<vmem>>) attributes {dimension_semantics = [#tpu.dimension_semantics<parallel>, #tpu.dimension_semantics<parallel>], iteration_bounds = array<i64: 2, 1>, scalar_prefetch = 0 : i64, scratch_operands = 0 : i64, tpu.core_type = #tpu.core_type<tc>, window_params = [{transform_indices = @transform_0, window_bounds = array<i64: 1, 54, 512>}, {pipeline_mode = #tpu.pipeline_mode<synchronous>, transform_indices = @transform_1, window_bounds = array<i64: 4, 54>}, {pipeline_mode = #tpu.pipeline_mode<synchronous>, transform_indices = @transform_2, window_bounds = array<i64: 4, 1>}, {transform_indices = @transform_3, window_bounds = array<i64: 1, 4, 512>}]} {
    %c0 = arith.constant 0 : index
    %c0_0 = arith.constant 0 : index
    %c0_1 = arith.constant 0 : index
    %0 = vector.load %arg2[%c0, %c0_0, %c0_1] : memref<1x54x512xbf16, #tpu.memory_space<vmem>>, vector<1x54x512xbf16>
    %1 = vector.shape_cast %0 : vector<1x54x512xbf16> to vector<54x512xbf16>
    %c0_2 = arith.constant 0 : index
    %c0_3 = arith.constant 0 : index
    %2 = vector.load %arg3[%c0_2, %c0_3] : memref<4x54xbf16, #tpu.memory_space<vmem>>, vector<4x54xbf16>
    %cst = arith.constant dense<0.000000e+00> : vector<4x512xf32>
    %3 = tpu.matmul %2, %1, %cst {dimension_numbers = #tpu.dot_dimension_numbers<[1], [0], [0], [1], [0, 0, 1, 1], [], []>} : vector<4x54xbf16>, vector<54x512xbf16>, vector<4x512xf32> -> vector<4x512xf32>
    %c0_4 = arith.constant 0 : index
    %c0_5 = arith.constant 0 : index
    %4 = vector.load %arg4[%c0_4, %c0_5] : memref<4x1xf32, #tpu.memory_space<vmem>>, vector<4x1xf32>
    %5 = vector.broadcast %4 : vector<4x1xf32> to vector<4x512xf32>
    %6 = arith.addf %3, %5 : vector<4x512xf32>
    %cst_6 = arith.constant dense<0.000000e+00> : vector<4xf32>
    %7 = vector.multi_reduction <add>, %6, %cst_6 [1] : vector<4x512xf32> to vector<4xf32>
    %8 = vector.shape_cast %7 : vector<4xf32> to vector<4x1xf32>
    %cst_7 = arith.constant 5.120000e+02 : f32
    %9 = vector.broadcast %cst_7 : f32 to vector<4x1xf32>
    %10 = arith.divf %8, %9 : vector<4x1xf32>
    %11 = vector.broadcast %10 : vector<4x1xf32> to vector<4x512xf32>
    %12 = arith.subf %6, %11 : vector<4x512xf32>
    %13 = arith.mulf %12, %12 : vector<4x512xf32>
    %cst_8 = arith.constant dense<0.000000e+00> : vector<4xf32>
    %14 = vector.multi_reduction <add>, %13, %cst_8 [1] : vector<4x512xf32> to vector<4xf32>
    %15 = vector.shape_cast %14 : vector<4xf32> to vector<4x1xf32>
    %cst_9 = arith.constant 5.120000e+02 : f32
    %16 = vector.broadcast %cst_9 : f32 to vector<4x1xf32>
    %17 = arith.divf %15, %16 : vector<4x1xf32>
    %18 = vector.broadcast %10 : vector<4x1xf32> to vector<4x512xf32>
    %19 = arith.subf %6, %18 : vector<4x512xf32>
    %cst_10 = arith.constant 9.99999974E-6 : f32
    %20 = vector.broadcast %cst_10 : f32 to vector<4x1xf32>
    %21 = arith.addf %17, %20 : vector<4x1xf32>
    %22 = math.rsqrt %21 : vector<4x1xf32>
    %23 = vector.broadcast %22 : vector<4x1xf32> to vector<4x512xf32>
    %24 = arith.mulf %19, %23 : vector<4x512xf32>
    %cst_11 = arith.constant 0.000000e+00 : f32
    %25 = vector.broadcast %cst_11 : f32 to vector<4x512xf32>
    %26 = arith.cmpf oge, %24, %25 : vector<4x512xf32>
    %cst_12 = arith.constant 0.00999999977 : f32
    %27 = vector.broadcast %cst_12 : f32 to vector<4x512xf32>
    %28 = arith.mulf %27, %24 : vector<4x512xf32>
    %29 = arith.select %26, %24, %28 : vector<4x512xi1>, vector<4x512xf32>
    %30 = arith.truncf %29 : vector<4x512xf32> to vector<4x512xbf16>
    %c0_13 = arith.constant 0 : index
    %c0_14 = arith.constant 0 : index
    %c0_15 = arith.constant 0 : index
    %31 = vector.load %arg5[%c0_13, %c0_14, %c0_15] : memref<1x4x512xbf16, #tpu.memory_space<vmem>>, vector<1x4x512xbf16>
    %32 = vector.shape_cast %31 : vector<1x4x512xbf16> to vector<4x512xbf16>
    %33 = vector.shape_cast %30 : vector<4x512xbf16> to vector<1x4x512xbf16>
    tpu.vector_store %arg5[%c0_13, %c0_14, %c0_15], %33 {strides = array<i32>} : memref<1x4x512xbf16, #tpu.memory_space<vmem>>, vector<1x4x512xbf16>,
    return
  }
  func.func @transform_0(%arg0: i32, %arg1: i32) -> (i32, i32, i32) {
    %c0_i32 = arith.constant 0 : i32
    %c0_i32_0 = arith.constant 0 : i32
    return %arg0, %c0_i32, %arg1 : i32, i32, i32
  }
  func.func @transform_1(%arg0: i32, %arg1: i32) -> (i32, i32) {
    %c0_i32 = arith.constant 0 : i32
    %c0_i32_0 = arith.constant 0 : i32
    %c0_i32_1 = arith.constant 0 : i32
    return %c0_i32, %c0_i32_0 : i32, i32
  }
  func.func @transform_2(%arg0: i32, %arg1: i32) -> (i32, i32) {
    %c0_i32 = arith.constant 0 : i32
    %c0_i32_0 = arith.constant 0 : i32
    %c0_i32_1 = arith.constant 0 : i32
    return %c0_i32, %c0_i32_0 : i32, i32
  }
  func.func @transform_3(%arg0: i32, %arg1: i32) -> (i32, i32, i32) {
    %c0_i32 = arith.constant 0 : i32
    %c0_i32_0 = arith.constant 0 : i32
    return %arg0, %c0_i32, %arg1 : i32, i32, i32
  }
}

module attributes {stable_mosaic.version = 11 : i64} {
  func.func @_fused_matmul_kernel(%arg0: i32, %arg1: i32, %arg2: memref<1x108x512xbf16, #tpu.memory_space<vmem>>, %arg3: memref<4x108xbf16, #tpu.memory_space<vmem>>, %arg4: memref<4x1xf32, #tpu.memory_space<vmem>>, %arg5: memref<1x4x512xbf16, #tpu.memory_space<vmem>>) attributes {dimension_semantics = [#tpu.dimension_semantics<parallel>, #tpu.dimension_semantics<parallel>], iteration_bounds = array<i64: 2, 1>, scalar_prefetch = 0 : i64, scratch_operands = 0 : i64, tpu.core_type = #tpu.core_type<tc>, window_params = [{transform_indices = @transform_0, window_bounds = array<i64: 1, 108, 512>}, {pipeline_mode = #tpu.pipeline_mode<synchronous>, transform_indices = @transform_1, window_bounds = array<i64: 4, 108>}, {pipeline_mode = #tpu.pipeline_mode<synchronous>, transform_indices = @transform_2, window_bounds = array<i64: 4, 1>}, {transform_indices = @transform_3, window_bounds = array<i64: 1, 4, 512>}]} {
    %c0 = arith.constant 0 : index
    %c0_0 = arith.constant 0 : index
    %c0_1 = arith.constant 0 : index
    %0 = vector.load %arg2[%c0, %c0_0, %c0_1] : memref<1x108x512xbf16, #tpu.memory_space<vmem>>, vector<1x108x512xbf16>
    %1 = vector.shape_cast %0 : vector<1x108x512xbf16> to vector<108x512xbf16>
    %c0_2 = arith.constant 0 : index
    %c0_3 = arith.constant 0 : index
    %2 = vector.load %arg3[%c0_2, %c0_3] : memref<4x108xbf16, #tpu.memory_space<vmem>>, vector<4x108xbf16>
    %cst = arith.constant dense<0.000000e+00> : vector<4x512xf32>
    %3 = tpu.matmul %2, %1, %cst {dimension_numbers = #tpu.dot_dimension_numbers<[1], [0], [0], [1], [0, 0, 1, 1], [], []>} : vector<4x108xbf16>, vector<108x512xbf16>, vector<4x512xf32> -> vector<4x512xf32>
    %c0_4 = arith.constant 0 : index
    %c0_5 = arith.constant 0 : index
    %4 = vector.load %arg4[%c0_4, %c0_5] : memref<4x1xf32, #tpu.memory_space<vmem>>, vector<4x1xf32>
    %5 = vector.broadcast %4 : vector<4x1xf32> to vector<4x512xf32>
    %6 = arith.addf %3, %5 : vector<4x512xf32>
    %cst_6 = arith.constant dense<0.000000e+00> : vector<4xf32>
    %7 = vector.multi_reduction <add>, %6, %cst_6 [1] : vector<4x512xf32> to vector<4xf32>
    %8 = vector.shape_cast %7 : vector<4xf32> to vector<4x1xf32>
    %cst_7 = arith.constant 5.120000e+02 : f32
    %9 = vector.broadcast %cst_7 : f32 to vector<4x1xf32>
    %10 = arith.divf %8, %9 : vector<4x1xf32>
    %11 = vector.broadcast %10 : vector<4x1xf32> to vector<4x512xf32>
    %12 = arith.subf %6, %11 : vector<4x512xf32>
    %13 = arith.mulf %12, %12 : vector<4x512xf32>
    %cst_8 = arith.constant dense<0.000000e+00> : vector<4xf32>
    %14 = vector.multi_reduction <add>, %13, %cst_8 [1] : vector<4x512xf32> to vector<4xf32>
    %15 = vector.shape_cast %14 : vector<4xf32> to vector<4x1xf32>
    %cst_9 = arith.constant 5.120000e+02 : f32
    %16 = vector.broadcast %cst_9 : f32 to vector<4x1xf32>
    %17 = arith.divf %15, %16 : vector<4x1xf32>
    %18 = vector.broadcast %10 : vector<4x1xf32> to vector<4x512xf32>
    %19 = arith.subf %6, %18 : vector<4x512xf32>
    %cst_10 = arith.constant 9.99999974E-6 : f32
    %20 = vector.broadcast %cst_10 : f32 to vector<4x1xf32>
    %21 = arith.addf %17, %20 : vector<4x1xf32>
    %22 = math.rsqrt %21 : vector<4x1xf32>
    %23 = vector.broadcast %22 : vector<4x1xf32> to vector<4x512xf32>
    %24 = arith.mulf %19, %23 : vector<4x512xf32>
    %cst_11 = arith.constant 0.000000e+00 : f32
    %25 = vector.broadcast %cst_11 : f32 to vector<4x512xf32>
    %26 = arith.cmpf oge, %24, %25 : vector<4x512xf32>
    %cst_12 = arith.constant 0.00999999977 : f32
    %27 = vector.broadcast %cst_12 : f32 to vector<4x512xf32>
    %28 = arith.mulf %27, %24 : vector<4x512xf32>
    %29 = arith.select %26, %24, %28 : vector<4x512xi1>, vector<4x512xf32>
    %30 = arith.truncf %29 : vector<4x512xf32> to vector<4x512xbf16>
    %c0_13 = arith.constant 0 : index
    %c0_14 = arith.constant 0 : index
    %c0_15 = arith.constant 0 : index
    %31 = vector.load %arg5[%c0_13, %c0_14, %c0_15] : memref<1x4x512xbf16, #tpu.memory_space<vmem>>, vector<1x4x512xbf16>
    %32 = vector.shape_cast %31 : vector<1x4x512xbf16> to vector<4x512xbf16>
    %33 = vector.shape_cast %30 : vector<4x512xbf16> to vector<1x4x512xbf16>
    tpu.vector_store %arg5[%c0_13, %c0_14, %c0_15], %33 {strides = array<i32>} : memref<1x4x512xbf16, #tpu.memory_space<vmem>>, vector<1x4x512xbf16>,
    return
  }
  func.func @transform_0(%arg0: i32, %arg1: i32) -> (i32, i32, i32) {
    %c0_i32 = arith.constant 0 : i32
    %c0_i32_0 = arith.constant 0 : i32
    return %arg0, %c0_i32, %arg1 : i32, i32, i32
  }
  func.func @transform_1(%arg0: i32, %arg1: i32) -> (i32, i32) {
    %c0_i32 = arith.constant 0 : i32
    %c0_i32_0 = arith.constant 0 : i32
    %c0_i32_1 = arith.constant 0 : i32
    return %c0_i32, %c0_i32_0 : i32, i32
  }
  func.func @transform_2(%arg0: i32, %arg1: i32) -> (i32, i32) {
    %c0_i32 = arith.constant 0 : i32
    %c0_i32_0 = arith.constant 0 : i32
    %c0_i32_1 = arith.constant 0 : i32
    return %c0_i32, %c0_i32_0 : i32, i32
  }
  func.func @transform_3(%arg0: i32, %arg1: i32) -> (i32, i32, i32) {
    %c0_i32 = arith.constant 0 : i32
    %c0_i32_0 = arith.constant 0 : i32
    return %arg0, %c0_i32, %arg1 : i32, i32, i32
  }
}

module attributes {stable_mosaic.version = 11 : i64} {
  func.func @_fused_matmul_kernel(%arg0: i32, %arg1: i32, %arg2: memref<1x108x64xbf16, #tpu.memory_space<vmem>>, %arg3: memref<8x108xbf16, #tpu.memory_space<vmem>>, %arg4: memref<8x1xf32, #tpu.memory_space<vmem>>, %arg5: memref<1x8x64xbf16, #tpu.memory_space<vmem>>) attributes {dimension_semantics = [#tpu.dimension_semantics<parallel>, #tpu.dimension_semantics<parallel>], iteration_bounds = array<i64: 2, 1>, scalar_prefetch = 0 : i64, scratch_operands = 0 : i64, tpu.core_type = #tpu.core_type<tc>, window_params = [{transform_indices = @transform_0, window_bounds = array<i64: 1, 108, 64>}, {pipeline_mode = #tpu.pipeline_mode<synchronous>, transform_indices = @transform_1, window_bounds = array<i64: 8, 108>}, {pipeline_mode = #tpu.pipeline_mode<synchronous>, transform_indices = @transform_2, window_bounds = array<i64: 8, 1>}, {transform_indices = @transform_3, window_bounds = array<i64: 1, 8, 64>}]} {
    %c0 = arith.constant 0 : index
    %c0_0 = arith.constant 0 : index
    %c0_1 = arith.constant 0 : index
    %0 = vector.load %arg2[%c0, %c0_0, %c0_1] : memref<1x108x64xbf16, #tpu.memory_space<vmem>>, vector<1x108x64xbf16>
    %1 = vector.shape_cast %0 : vector<1x108x64xbf16> to vector<108x64xbf16>
    %c0_2 = arith.constant 0 : index
    %c0_3 = arith.constant 0 : index
    %2 = vector.load %arg3[%c0_2, %c0_3] : memref<8x108xbf16, #tpu.memory_space<vmem>>, vector<8x108xbf16>
    %cst = arith.constant dense<0.000000e+00> : vector<8x64xf32>
    %3 = tpu.matmul %2, %1, %cst {dimension_numbers = #tpu.dot_dimension_numbers<[1], [0], [0], [1], [0, 0, 1, 1], [], []>} : vector<8x108xbf16>, vector<108x64xbf16>, vector<8x64xf32> -> vector<8x64xf32>
    %c0_4 = arith.constant 0 : index
    %c0_5 = arith.constant 0 : index
    %4 = vector.load %arg4[%c0_4, %c0_5] : memref<8x1xf32, #tpu.memory_space<vmem>>, vector<8x1xf32>
    %5 = vector.broadcast %4 : vector<8x1xf32> to vector<8x64xf32>
    %6 = arith.addf %3, %5 : vector<8x64xf32>
    %cst_6 = arith.constant dense<0.000000e+00> : vector<8xf32>
    %7 = vector.multi_reduction <add>, %6, %cst_6 [1] : vector<8x64xf32> to vector<8xf32>
    %8 = vector.shape_cast %7 : vector<8xf32> to vector<8x1xf32>
    %cst_7 = arith.constant 6.400000e+01 : f32
    %9 = vector.broadcast %cst_7 : f32 to vector<8x1xf32>
    %10 = arith.divf %8, %9 : vector<8x1xf32>
    %11 = vector.broadcast %10 : vector<8x1xf32> to vector<8x64xf32>
    %12 = arith.subf %6, %11 : vector<8x64xf32>
    %13 = arith.mulf %12, %12 : vector<8x64xf32>
    %cst_8 = arith.constant dense<0.000000e+00> : vector<8xf32>
    %14 = vector.multi_reduction <add>, %13, %cst_8 [1] : vector<8x64xf32> to vector<8xf32>
    %15 = vector.shape_cast %14 : vector<8xf32> to vector<8x1xf32>
    %cst_9 = arith.constant 6.400000e+01 : f32
    %16 = vector.broadcast %cst_9 : f32 to vector<8x1xf32>
    %17 = arith.divf %15, %16 : vector<8x1xf32>
    %18 = vector.broadcast %10 : vector<8x1xf32> to vector<8x64xf32>
    %19 = arith.subf %6, %18 : vector<8x64xf32>
    %cst_10 = arith.constant 9.99999974E-6 : f32
    %20 = vector.broadcast %cst_10 : f32 to vector<8x1xf32>
    %21 = arith.addf %17, %20 : vector<8x1xf32>
    %22 = math.rsqrt %21 : vector<8x1xf32>
    %23 = vector.broadcast %22 : vector<8x1xf32> to vector<8x64xf32>
    %24 = arith.mulf %19, %23 : vector<8x64xf32>
    %cst_11 = arith.constant 0.000000e+00 : f32
    %25 = vector.broadcast %cst_11 : f32 to vector<8x64xf32>
    %26 = arith.cmpf oge, %24, %25 : vector<8x64xf32>
    %cst_12 = arith.constant 0.00999999977 : f32
    %27 = vector.broadcast %cst_12 : f32 to vector<8x64xf32>
    %28 = arith.mulf %27, %24 : vector<8x64xf32>
    %29 = arith.select %26, %24, %28 : vector<8x64xi1>, vector<8x64xf32>
    %30 = arith.truncf %29 : vector<8x64xf32> to vector<8x64xbf16>
    %c0_13 = arith.constant 0 : index
    %c0_14 = arith.constant 0 : index
    %c0_15 = arith.constant 0 : index
    %31 = vector.load %arg5[%c0_13, %c0_14, %c0_15] : memref<1x8x64xbf16, #tpu.memory_space<vmem>>, vector<1x8x64xbf16>
    %32 = vector.shape_cast %31 : vector<1x8x64xbf16> to vector<8x64xbf16>
    %33 = vector.shape_cast %30 : vector<8x64xbf16> to vector<1x8x64xbf16>
    tpu.vector_store %arg5[%c0_13, %c0_14, %c0_15], %33 {strides = array<i32>} : memref<1x8x64xbf16, #tpu.memory_space<vmem>>, vector<1x8x64xbf16>,
    return
  }
  func.func @transform_0(%arg0: i32, %arg1: i32) -> (i32, i32, i32) {
    %c0_i32 = arith.constant 0 : i32
    %c0_i32_0 = arith.constant 0 : i32
    return %arg0, %c0_i32, %arg1 : i32, i32, i32
  }
  func.func @transform_1(%arg0: i32, %arg1: i32) -> (i32, i32) {
    %c0_i32 = arith.constant 0 : i32
    %c0_i32_0 = arith.constant 0 : i32
    %c0_i32_1 = arith.constant 0 : i32
    return %c0_i32, %c0_i32_0 : i32, i32
  }
  func.func @transform_2(%arg0: i32, %arg1: i32) -> (i32, i32) {
    %c0_i32 = arith.constant 0 : i32
    %c0_i32_0 = arith.constant 0 : i32
    %c0_i32_1 = arith.constant 0 : i32
    return %c0_i32, %c0_i32_0 : i32, i32
  }
  func.func @transform_3(%arg0: i32, %arg1: i32) -> (i32, i32, i32) {
    %c0_i32 = arith.constant 0 : i32
    %c0_i32_0 = arith.constant 0 : i32
    return %arg0, %c0_i32, %arg1 : i32, i32, i32
  }
}

module attributes {stable_mosaic.version = 11 : i64} {
  func.func @_fused_matmul_kernel(%arg0: i32, %arg1: i32, %arg2: memref<1x216x64xbf16, #tpu.memory_space<vmem>>, %arg3: memref<8x216xbf16, #tpu.memory_space<vmem>>, %arg4: memref<8x1xf32, #tpu.memory_space<vmem>>, %arg5: memref<1x8x64xbf16, #tpu.memory_space<vmem>>) attributes {dimension_semantics = [#tpu.dimension_semantics<parallel>, #tpu.dimension_semantics<parallel>], iteration_bounds = array<i64: 2, 1>, scalar_prefetch = 0 : i64, scratch_operands = 0 : i64, tpu.core_type = #tpu.core_type<tc>, window_params = [{transform_indices = @transform_0, window_bounds = array<i64: 1, 216, 64>}, {pipeline_mode = #tpu.pipeline_mode<synchronous>, transform_indices = @transform_1, window_bounds = array<i64: 8, 216>}, {pipeline_mode = #tpu.pipeline_mode<synchronous>, transform_indices = @transform_2, window_bounds = array<i64: 8, 1>}, {transform_indices = @transform_3, window_bounds = array<i64: 1, 8, 64>}]} {
    %c0 = arith.constant 0 : index
    %c0_0 = arith.constant 0 : index
    %c0_1 = arith.constant 0 : index
    %0 = vector.load %arg2[%c0, %c0_0, %c0_1] : memref<1x216x64xbf16, #tpu.memory_space<vmem>>, vector<1x216x64xbf16>
    %1 = vector.shape_cast %0 : vector<1x216x64xbf16> to vector<216x64xbf16>
    %c0_2 = arith.constant 0 : index
    %c0_3 = arith.constant 0 : index
    %2 = vector.load %arg3[%c0_2, %c0_3] : memref<8x216xbf16, #tpu.memory_space<vmem>>, vector<8x216xbf16>
    %cst = arith.constant dense<0.000000e+00> : vector<8x64xf32>
    %3 = tpu.matmul %2, %1, %cst {dimension_numbers = #tpu.dot_dimension_numbers<[1], [0], [0], [1], [0, 0, 1, 1], [], []>} : vector<8x216xbf16>, vector<216x64xbf16>, vector<8x64xf32> -> vector<8x64xf32>
    %c0_4 = arith.constant 0 : index
    %c0_5 = arith.constant 0 : index
    %4 = vector.load %arg4[%c0_4, %c0_5] : memref<8x1xf32, #tpu.memory_space<vmem>>, vector<8x1xf32>
    %5 = vector.broadcast %4 : vector<8x1xf32> to vector<8x64xf32>
    %6 = arith.addf %3, %5 : vector<8x64xf32>
    %cst_6 = arith.constant dense<0.000000e+00> : vector<8xf32>
    %7 = vector.multi_reduction <add>, %6, %cst_6 [1] : vector<8x64xf32> to vector<8xf32>
    %8 = vector.shape_cast %7 : vector<8xf32> to vector<8x1xf32>
    %cst_7 = arith.constant 6.400000e+01 : f32
    %9 = vector.broadcast %cst_7 : f32 to vector<8x1xf32>
    %10 = arith.divf %8, %9 : vector<8x1xf32>
    %11 = vector.broadcast %10 : vector<8x1xf32> to vector<8x64xf32>
    %12 = arith.subf %6, %11 : vector<8x64xf32>
    %13 = arith.mulf %12, %12 : vector<8x64xf32>
    %cst_8 = arith.constant dense<0.000000e+00> : vector<8xf32>
    %14 = vector.multi_reduction <add>, %13, %cst_8 [1] : vector<8x64xf32> to vector<8xf32>
    %15 = vector.shape_cast %14 : vector<8xf32> to vector<8x1xf32>
    %cst_9 = arith.constant 6.400000e+01 : f32
    %16 = vector.broadcast %cst_9 : f32 to vector<8x1xf32>
    %17 = arith.divf %15, %16 : vector<8x1xf32>
    %18 = vector.broadcast %10 : vector<8x1xf32> to vector<8x64xf32>
    %19 = arith.subf %6, %18 : vector<8x64xf32>
    %cst_10 = arith.constant 9.99999974E-6 : f32
    %20 = vector.broadcast %cst_10 : f32 to vector<8x1xf32>
    %21 = arith.addf %17, %20 : vector<8x1xf32>
    %22 = math.rsqrt %21 : vector<8x1xf32>
    %23 = vector.broadcast %22 : vector<8x1xf32> to vector<8x64xf32>
    %24 = arith.mulf %19, %23 : vector<8x64xf32>
    %cst_11 = arith.constant 0.000000e+00 : f32
    %25 = vector.broadcast %cst_11 : f32 to vector<8x64xf32>
    %26 = arith.cmpf oge, %24, %25 : vector<8x64xf32>
    %cst_12 = arith.constant 0.00999999977 : f32
    %27 = vector.broadcast %cst_12 : f32 to vector<8x64xf32>
    %28 = arith.mulf %27, %24 : vector<8x64xf32>
    %29 = arith.select %26, %24, %28 : vector<8x64xi1>, vector<8x64xf32>
    %30 = arith.truncf %29 : vector<8x64xf32> to vector<8x64xbf16>
    %c0_13 = arith.constant 0 : index
    %c0_14 = arith.constant 0 : index
    %c0_15 = arith.constant 0 : index
    %31 = vector.load %arg5[%c0_13, %c0_14, %c0_15] : memref<1x8x64xbf16, #tpu.memory_space<vmem>>, vector<1x8x64xbf16>
    %32 = vector.shape_cast %31 : vector<1x8x64xbf16> to vector<8x64xbf16>
    %33 = vector.shape_cast %30 : vector<8x64xbf16> to vector<1x8x64xbf16>
    tpu.vector_store %arg5[%c0_13, %c0_14, %c0_15], %33 {strides = array<i32>} : memref<1x8x64xbf16, #tpu.memory_space<vmem>>, vector<1x8x64xbf16>,
    return
  }
  func.func @transform_0(%arg0: i32, %arg1: i32) -> (i32, i32, i32) {
    %c0_i32 = arith.constant 0 : i32
    %c0_i32_0 = arith.constant 0 : i32
    return %arg0, %c0_i32, %arg1 : i32, i32, i32
  }
  func.func @transform_1(%arg0: i32, %arg1: i32) -> (i32, i32) {
    %c0_i32 = arith.constant 0 : i32
    %c0_i32_0 = arith.constant 0 : i32
    %c0_i32_1 = arith.constant 0 : i32
    return %c0_i32, %c0_i32_0 : i32, i32
  }
  func.func @transform_2(%arg0: i32, %arg1: i32) -> (i32, i32) {
    %c0_i32 = arith.constant 0 : i32
    %c0_i32_0 = arith.constant 0 : i32
    %c0_i32_1 = arith.constant 0 : i32
    return %c0_i32, %c0_i32_0 : i32, i32
  }
  func.func @transform_3(%arg0: i32, %arg1: i32) -> (i32, i32, i32) {
    %c0_i32 = arith.constant 0 : i32
    %c0_i32_0 = arith.constant 0 : i32
    return %arg0, %c0_i32, %arg1 : i32, i32, i32
  }
}

module attributes {stable_mosaic.version = 11 : i64} {
  func.func @_fused_matmul_kernel(%arg0: i32, %arg1: i32, %arg2: memref<1x216x8xbf16, #tpu.memory_space<vmem>>, %arg3: memref<16x216xbf16, #tpu.memory_space<vmem>>, %arg4: memref<16x1xf32, #tpu.memory_space<vmem>>, %arg5: memref<1x16x8xbf16, #tpu.memory_space<vmem>>) attributes {dimension_semantics = [#tpu.dimension_semantics<parallel>, #tpu.dimension_semantics<parallel>], iteration_bounds = array<i64: 2, 1>, scalar_prefetch = 0 : i64, scratch_operands = 0 : i64, tpu.core_type = #tpu.core_type<tc>, window_params = [{transform_indices = @transform_0, window_bounds = array<i64: 1, 216, 8>}, {pipeline_mode = #tpu.pipeline_mode<synchronous>, transform_indices = @transform_1, window_bounds = array<i64: 16, 216>}, {pipeline_mode = #tpu.pipeline_mode<synchronous>, transform_indices = @transform_2, window_bounds = array<i64: 16, 1>}, {transform_indices = @transform_3, window_bounds = array<i64: 1, 16, 8>}]} {
    %c0 = arith.constant 0 : index
    %c0_0 = arith.constant 0 : index
    %c0_1 = arith.constant 0 : index
    %0 = vector.load %arg2[%c0, %c0_0, %c0_1] : memref<1x216x8xbf16, #tpu.memory_space<vmem>>, vector<1x216x8xbf16>
    %1 = vector.shape_cast %0 : vector<1x216x8xbf16> to vector<216x8xbf16>
    %c0_2 = arith.constant 0 : index
    %c0_3 = arith.constant 0 : index
    %2 = vector.load %arg3[%c0_2, %c0_3] : memref<16x216xbf16, #tpu.memory_space<vmem>>, vector<16x216xbf16>
    %cst = arith.constant dense<0.000000e+00> : vector<16x8xf32>
    %3 = tpu.matmul %2, %1, %cst {dimension_numbers = #tpu.dot_dimension_numbers<[1], [0], [0], [1], [0, 0, 1, 1], [], []>} : vector<16x216xbf16>, vector<216x8xbf16>, vector<16x8xf32> -> vector<16x8xf32>
    %c0_4 = arith.constant 0 : index
    %c0_5 = arith.constant 0 : index
    %4 = vector.load %arg4[%c0_4, %c0_5] : memref<16x1xf32, #tpu.memory_space<vmem>>, vector<16x1xf32>
    %5 = vector.broadcast %4 : vector<16x1xf32> to vector<16x8xf32>
    %6 = arith.addf %3, %5 : vector<16x8xf32>
    %cst_6 = arith.constant dense<0.000000e+00> : vector<16xf32>
    %7 = vector.multi_reduction <add>, %6, %cst_6 [1] : vector<16x8xf32> to vector<16xf32>
    %8 = vector.shape_cast %7 : vector<16xf32> to vector<16x1xf32>
    %cst_7 = arith.constant 8.000000e+00 : f32
    %9 = vector.broadcast %cst_7 : f32 to vector<16x1xf32>
    %10 = arith.divf %8, %9 : vector<16x1xf32>
    %11 = vector.broadcast %10 : vector<16x1xf32> to vector<16x8xf32>
    %12 = arith.subf %6, %11 : vector<16x8xf32>
    %13 = arith.mulf %12, %12 : vector<16x8xf32>
    %cst_8 = arith.constant dense<0.000000e+00> : vector<16xf32>
    %14 = vector.multi_reduction <add>, %13, %cst_8 [1] : vector<16x8xf32> to vector<16xf32>
    %15 = vector.shape_cast %14 : vector<16xf32> to vector<16x1xf32>
    %cst_9 = arith.constant 8.000000e+00 : f32
    %16 = vector.broadcast %cst_9 : f32 to vector<16x1xf32>
    %17 = arith.divf %15, %16 : vector<16x1xf32>
    %18 = vector.broadcast %10 : vector<16x1xf32> to vector<16x8xf32>
    %19 = arith.subf %6, %18 : vector<16x8xf32>
    %cst_10 = arith.constant 9.99999974E-6 : f32
    %20 = vector.broadcast %cst_10 : f32 to vector<16x1xf32>
    %21 = arith.addf %17, %20 : vector<16x1xf32>
    %22 = math.rsqrt %21 : vector<16x1xf32>
    %23 = vector.broadcast %22 : vector<16x1xf32> to vector<16x8xf32>
    %24 = arith.mulf %19, %23 : vector<16x8xf32>
    %cst_11 = arith.constant 0.000000e+00 : f32
    %25 = vector.broadcast %cst_11 : f32 to vector<16x8xf32>
    %26 = arith.cmpf oge, %24, %25 : vector<16x8xf32>
    %cst_12 = arith.constant 0.00999999977 : f32
    %27 = vector.broadcast %cst_12 : f32 to vector<16x8xf32>
    %28 = arith.mulf %27, %24 : vector<16x8xf32>
    %29 = arith.select %26, %24, %28 : vector<16x8xi1>, vector<16x8xf32>
    %30 = arith.truncf %29 : vector<16x8xf32> to vector<16x8xbf16>
    %c0_13 = arith.constant 0 : index
    %c0_14 = arith.constant 0 : index
    %c0_15 = arith.constant 0 : index
    %31 = vector.load %arg5[%c0_13, %c0_14, %c0_15] : memref<1x16x8xbf16, #tpu.memory_space<vmem>>, vector<1x16x8xbf16>
    %32 = vector.shape_cast %31 : vector<1x16x8xbf16> to vector<16x8xbf16>
    %33 = vector.shape_cast %30 : vector<16x8xbf16> to vector<1x16x8xbf16>
    tpu.vector_store %arg5[%c0_13, %c0_14, %c0_15], %33 {strides = array<i32>} : memref<1x16x8xbf16, #tpu.memory_space<vmem>>, vector<1x16x8xbf16>,
    return
  }
  func.func @transform_0(%arg0: i32, %arg1: i32) -> (i32, i32, i32) {
    %c0_i32 = arith.constant 0 : i32
    %c0_i32_0 = arith.constant 0 : i32
    return %arg0, %c0_i32, %arg1 : i32, i32, i32
  }
  func.func @transform_1(%arg0: i32, %arg1: i32) -> (i32, i32) {
    %c0_i32 = arith.constant 0 : i32
    %c0_i32_0 = arith.constant 0 : i32
    %c0_i32_1 = arith.constant 0 : i32
    return %c0_i32, %c0_i32_0 : i32, i32
  }
  func.func @transform_2(%arg0: i32, %arg1: i32) -> (i32, i32) {
    %c0_i32 = arith.constant 0 : i32
    %c0_i32_0 = arith.constant 0 : i32
    %c0_i32_1 = arith.constant 0 : i32
    return %c0_i32, %c0_i32_0 : i32, i32
  }
  func.func @transform_3(%arg0: i32, %arg1: i32) -> (i32, i32, i32) {
    %c0_i32 = arith.constant 0 : i32
    %c0_i32_0 = arith.constant 0 : i32
    return %arg0, %c0_i32, %arg1 : i32, i32, i32
  }
}

module attributes {stable_mosaic.version = 11 : i64} {
  func.func @_fused_matmul_kernel(%arg0: i32, %arg1: i32, %arg2: memref<1x432x8xbf16, #tpu.memory_space<vmem>>, %arg3: memref<16x432xbf16, #tpu.memory_space<vmem>>, %arg4: memref<16x1xf32, #tpu.memory_space<vmem>>, %arg5: memref<1x16x8xbf16, #tpu.memory_space<vmem>>) attributes {dimension_semantics = [#tpu.dimension_semantics<parallel>, #tpu.dimension_semantics<parallel>], iteration_bounds = array<i64: 2, 1>, scalar_prefetch = 0 : i64, scratch_operands = 0 : i64, tpu.core_type = #tpu.core_type<tc>, window_params = [{transform_indices = @transform_0, window_bounds = array<i64: 1, 432, 8>}, {pipeline_mode = #tpu.pipeline_mode<synchronous>, transform_indices = @transform_1, window_bounds = array<i64: 16, 432>}, {pipeline_mode = #tpu.pipeline_mode<synchronous>, transform_indices = @transform_2, window_bounds = array<i64: 16, 1>}, {transform_indices = @transform_3, window_bounds = array<i64: 1, 16, 8>}]} {
    %c0 = arith.constant 0 : index
    %c0_0 = arith.constant 0 : index
    %c0_1 = arith.constant 0 : index
    %0 = vector.load %arg2[%c0, %c0_0, %c0_1] : memref<1x432x8xbf16, #tpu.memory_space<vmem>>, vector<1x432x8xbf16>
    %1 = vector.shape_cast %0 : vector<1x432x8xbf16> to vector<432x8xbf16>
    %c0_2 = arith.constant 0 : index
    %c0_3 = arith.constant 0 : index
    %2 = vector.load %arg3[%c0_2, %c0_3] : memref<16x432xbf16, #tpu.memory_space<vmem>>, vector<16x432xbf16>
    %cst = arith.constant dense<0.000000e+00> : vector<16x8xf32>
    %3 = tpu.matmul %2, %1, %cst {dimension_numbers = #tpu.dot_dimension_numbers<[1], [0], [0], [1], [0, 0, 1, 1], [], []>} : vector<16x432xbf16>, vector<432x8xbf16>, vector<16x8xf32> -> vector<16x8xf32>
    %c0_4 = arith.constant 0 : index
    %c0_5 = arith.constant 0 : index
    %4 = vector.load %arg4[%c0_4, %c0_5] : memref<16x1xf32, #tpu.memory_space<vmem>>, vector<16x1xf32>
    %5 = vector.broadcast %4 : vector<16x1xf32> to vector<16x8xf32>
    %6 = arith.addf %3, %5 : vector<16x8xf32>
    %cst_6 = arith.constant dense<0.000000e+00> : vector<16xf32>
    %7 = vector.multi_reduction <add>, %6, %cst_6 [1] : vector<16x8xf32> to vector<16xf32>
    %8 = vector.shape_cast %7 : vector<16xf32> to vector<16x1xf32>
    %cst_7 = arith.constant 8.000000e+00 : f32
    %9 = vector.broadcast %cst_7 : f32 to vector<16x1xf32>
    %10 = arith.divf %8, %9 : vector<16x1xf32>
    %11 = vector.broadcast %10 : vector<16x1xf32> to vector<16x8xf32>
    %12 = arith.subf %6, %11 : vector<16x8xf32>
    %13 = arith.mulf %12, %12 : vector<16x8xf32>
    %cst_8 = arith.constant dense<0.000000e+00> : vector<16xf32>
    %14 = vector.multi_reduction <add>, %13, %cst_8 [1] : vector<16x8xf32> to vector<16xf32>
    %15 = vector.shape_cast %14 : vector<16xf32> to vector<16x1xf32>
    %cst_9 = arith.constant 8.000000e+00 : f32
    %16 = vector.broadcast %cst_9 : f32 to vector<16x1xf32>
    %17 = arith.divf %15, %16 : vector<16x1xf32>
    %18 = vector.broadcast %10 : vector<16x1xf32> to vector<16x8xf32>
    %19 = arith.subf %6, %18 : vector<16x8xf32>
    %cst_10 = arith.constant 9.99999974E-6 : f32
    %20 = vector.broadcast %cst_10 : f32 to vector<16x1xf32>
    %21 = arith.addf %17, %20 : vector<16x1xf32>
    %22 = math.rsqrt %21 : vector<16x1xf32>
    %23 = vector.broadcast %22 : vector<16x1xf32> to vector<16x8xf32>
    %24 = arith.mulf %19, %23 : vector<16x8xf32>
    %cst_11 = arith.constant 0.000000e+00 : f32
    %25 = vector.broadcast %cst_11 : f32 to vector<16x8xf32>
    %26 = arith.cmpf oge, %24, %25 : vector<16x8xf32>
    %cst_12 = arith.constant 0.00999999977 : f32
    %27 = vector.broadcast %cst_12 : f32 to vector<16x8xf32>
    %28 = arith.mulf %27, %24 : vector<16x8xf32>
    %29 = arith.select %26, %24, %28 : vector<16x8xi1>, vector<16x8xf32>
    %30 = arith.truncf %29 : vector<16x8xf32> to vector<16x8xbf16>
    %c0_13 = arith.constant 0 : index
    %c0_14 = arith.constant 0 : index
    %c0_15 = arith.constant 0 : index
    %31 = vector.load %arg5[%c0_13, %c0_14, %c0_15] : memref<1x16x8xbf16, #tpu.memory_space<vmem>>, vector<1x16x8xbf16>
    %32 = vector.shape_cast %31 : vector<1x16x8xbf16> to vector<16x8xbf16>
    %33 = vector.shape_cast %30 : vector<16x8xbf16> to vector<1x16x8xbf16>
    tpu.vector_store %arg5[%c0_13, %c0_14, %c0_15], %33 {strides = array<i32>} : memref<1x16x8xbf16, #tpu.memory_space<vmem>>, vector<1x16x8xbf16>,
    return
  }
  func.func @transform_0(%arg0: i32, %arg1: i32) -> (i32, i32, i32) {
    %c0_i32 = arith.constant 0 : i32
    %c0_i32_0 = arith.constant 0 : i32
    return %arg0, %c0_i32, %arg1 : i32, i32, i32
  }
  func.func @transform_1(%arg0: i32, %arg1: i32) -> (i32, i32) {
    %c0_i32 = arith.constant 0 : i32
    %c0_i32_0 = arith.constant 0 : i32
    %c0_i32_1 = arith.constant 0 : i32
    return %c0_i32, %c0_i32_0 : i32, i32
  }
  func.func @transform_2(%arg0: i32, %arg1: i32) -> (i32, i32) {
    %c0_i32 = arith.constant 0 : i32
    %c0_i32_0 = arith.constant 0 : i32
    %c0_i32_1 = arith.constant 0 : i32
    return %c0_i32, %c0_i32_0 : i32, i32
  }
  func.func @transform_3(%arg0: i32, %arg1: i32) -> (i32, i32, i32) {
    %c0_i32 = arith.constant 0 : i32
    %c0_i32_0 = arith.constant 0 : i32
    return %arg0, %c0_i32, %arg1 : i32, i32, i32
  }
}

module attributes {stable_mosaic.version = 11 : i64} {
  func.func @_fused_matmul_kernel(%arg0: i32, %arg1: i32, %arg2: memref<1x128x8xbf16, #tpu.memory_space<vmem>>, %arg3: memref<64x128xbf16, #tpu.memory_space<vmem>>, %arg4: memref<64x1xf32, #tpu.memory_space<vmem>>, %arg5: memref<1x64x8xbf16, #tpu.memory_space<vmem>>) attributes {dimension_semantics = [#tpu.dimension_semantics<parallel>, #tpu.dimension_semantics<parallel>], iteration_bounds = array<i64: 2, 1>, scalar_prefetch = 0 : i64, scratch_operands = 0 : i64, tpu.core_type = #tpu.core_type<tc>, window_params = [{transform_indices = @transform_0, window_bounds = array<i64: 1, 128, 8>}, {pipeline_mode = #tpu.pipeline_mode<synchronous>, transform_indices = @transform_1, window_bounds = array<i64: 64, 128>}, {pipeline_mode = #tpu.pipeline_mode<synchronous>, transform_indices = @transform_2, window_bounds = array<i64: 64, 1>}, {transform_indices = @transform_3, window_bounds = array<i64: 1, 64, 8>}]} {
    %c0 = arith.constant 0 : index
    %c0_0 = arith.constant 0 : index
    %c0_1 = arith.constant 0 : index
    %0 = vector.load %arg2[%c0, %c0_0, %c0_1] : memref<1x128x8xbf16, #tpu.memory_space<vmem>>, vector<1x128x8xbf16>
    %1 = vector.shape_cast %0 : vector<1x128x8xbf16> to vector<128x8xbf16>
    %c0_2 = arith.constant 0 : index
    %c0_3 = arith.constant 0 : index
    %2 = vector.load %arg3[%c0_2, %c0_3] : memref<64x128xbf16, #tpu.memory_space<vmem>>, vector<64x128xbf16>
    %cst = arith.constant dense<0.000000e+00> : vector<64x8xf32>
    %3 = tpu.matmul %2, %1, %cst {dimension_numbers = #tpu.dot_dimension_numbers<[1], [0], [0], [1], [0, 0, 1, 1], [], []>} : vector<64x128xbf16>, vector<128x8xbf16>, vector<64x8xf32> -> vector<64x8xf32>
    %c0_4 = arith.constant 0 : index
    %c0_5 = arith.constant 0 : index
    %4 = vector.load %arg4[%c0_4, %c0_5] : memref<64x1xf32, #tpu.memory_space<vmem>>, vector<64x1xf32>
    %5 = vector.broadcast %4 : vector<64x1xf32> to vector<64x8xf32>
    %6 = arith.addf %3, %5 : vector<64x8xf32>
    %7 = arith.truncf %6 : vector<64x8xf32> to vector<64x8xbf16>
    %c0_6 = arith.constant 0 : index
    %c0_7 = arith.constant 0 : index
    %c0_8 = arith.constant 0 : index
    %8 = vector.load %arg5[%c0_6, %c0_7, %c0_8] : memref<1x64x8xbf16, #tpu.memory_space<vmem>>, vector<1x64x8xbf16>
    %9 = vector.shape_cast %8 : vector<1x64x8xbf16> to vector<64x8xbf16>
    %10 = vector.shape_cast %7 : vector<64x8xbf16> to vector<1x64x8xbf16>
    tpu.vector_store %arg5[%c0_6, %c0_7, %c0_8], %10 {strides = array<i32>} : memref<1x64x8xbf16, #tpu.memory_space<vmem>>, vector<1x64x8xbf16>,
    return
  }
  func.func @transform_0(%arg0: i32, %arg1: i32) -> (i32, i32, i32) {
    %c0_i32 = arith.constant 0 : i32
    %c0_i32_0 = arith.constant 0 : i32
    return %arg0, %c0_i32, %arg1 : i32, i32, i32
  }
  func.func @transform_1(%arg0: i32, %arg1: i32) -> (i32, i32) {
    %c0_i32 = arith.constant 0 : i32
    %c0_i32_0 = arith.constant 0 : i32
    %c0_i32_1 = arith.constant 0 : i32
    return %c0_i32, %c0_i32_0 : i32, i32
  }
  func.func @transform_2(%arg0: i32, %arg1: i32) -> (i32, i32) {
    %c0_i32 = arith.constant 0 : i32
    %c0_i32_0 = arith.constant 0 : i32
    %c0_i32_1 = arith.constant 0 : i32
    return %c0_i32, %c0_i32_0 : i32, i32
  }
  func.func @transform_3(%arg0: i32, %arg1: i32) -> (i32, i32, i32) {
    %c0_i32 = arith.constant 0 : i32
    %c0_i32_0 = arith.constant 0 : i32
    return %arg0, %c0_i32, %arg1 : i32, i32, i32
  }
}

module attributes {stable_mosaic.version = 11 : i64} {
  func.func @_fused_matmul_kernel(%arg0: i32, %arg1: i32, %arg2: memref<1x432x64xbf16, #tpu.memory_space<vmem>>, %arg3: memref<8x432xbf16, #tpu.memory_space<vmem>>, %arg4: memref<8x1xf32, #tpu.memory_space<vmem>>, %arg5: memref<1x8x64xbf16, #tpu.memory_space<vmem>>) attributes {dimension_semantics = [#tpu.dimension_semantics<parallel>, #tpu.dimension_semantics<parallel>], iteration_bounds = array<i64: 2, 1>, scalar_prefetch = 0 : i64, scratch_operands = 0 : i64, tpu.core_type = #tpu.core_type<tc>, window_params = [{transform_indices = @transform_0, window_bounds = array<i64: 1, 432, 64>}, {pipeline_mode = #tpu.pipeline_mode<synchronous>, transform_indices = @transform_1, window_bounds = array<i64: 8, 432>}, {pipeline_mode = #tpu.pipeline_mode<synchronous>, transform_indices = @transform_2, window_bounds = array<i64: 8, 1>}, {transform_indices = @transform_3, window_bounds = array<i64: 1, 8, 64>}]} {
    %c0 = arith.constant 0 : index
    %c0_0 = arith.constant 0 : index
    %c0_1 = arith.constant 0 : index
    %0 = vector.load %arg2[%c0, %c0_0, %c0_1] : memref<1x432x64xbf16, #tpu.memory_space<vmem>>, vector<1x432x64xbf16>
    %1 = vector.shape_cast %0 : vector<1x432x64xbf16> to vector<432x64xbf16>
    %c0_2 = arith.constant 0 : index
    %c0_3 = arith.constant 0 : index
    %2 = vector.load %arg3[%c0_2, %c0_3] : memref<8x432xbf16, #tpu.memory_space<vmem>>, vector<8x432xbf16>
    %cst = arith.constant dense<0.000000e+00> : vector<8x64xf32>
    %3 = tpu.matmul %2, %1, %cst {dimension_numbers = #tpu.dot_dimension_numbers<[1], [0], [0], [1], [0, 0, 1, 1], [], []>} : vector<8x432xbf16>, vector<432x64xbf16>, vector<8x64xf32> -> vector<8x64xf32>
    %c0_4 = arith.constant 0 : index
    %c0_5 = arith.constant 0 : index
    %4 = vector.load %arg4[%c0_4, %c0_5] : memref<8x1xf32, #tpu.memory_space<vmem>>, vector<8x1xf32>
    %5 = vector.broadcast %4 : vector<8x1xf32> to vector<8x64xf32>
    %6 = arith.addf %3, %5 : vector<8x64xf32>
    %cst_6 = arith.constant dense<0.000000e+00> : vector<8xf32>
    %7 = vector.multi_reduction <add>, %6, %cst_6 [1] : vector<8x64xf32> to vector<8xf32>
    %8 = vector.shape_cast %7 : vector<8xf32> to vector<8x1xf32>
    %cst_7 = arith.constant 6.400000e+01 : f32
    %9 = vector.broadcast %cst_7 : f32 to vector<8x1xf32>
    %10 = arith.divf %8, %9 : vector<8x1xf32>
    %11 = vector.broadcast %10 : vector<8x1xf32> to vector<8x64xf32>
    %12 = arith.subf %6, %11 : vector<8x64xf32>
    %13 = arith.mulf %12, %12 : vector<8x64xf32>
    %cst_8 = arith.constant dense<0.000000e+00> : vector<8xf32>
    %14 = vector.multi_reduction <add>, %13, %cst_8 [1] : vector<8x64xf32> to vector<8xf32>
    %15 = vector.shape_cast %14 : vector<8xf32> to vector<8x1xf32>
    %cst_9 = arith.constant 6.400000e+01 : f32
    %16 = vector.broadcast %cst_9 : f32 to vector<8x1xf32>
    %17 = arith.divf %15, %16 : vector<8x1xf32>
    %18 = vector.broadcast %10 : vector<8x1xf32> to vector<8x64xf32>
    %19 = arith.subf %6, %18 : vector<8x64xf32>
    %cst_10 = arith.constant 9.99999974E-6 : f32
    %20 = vector.broadcast %cst_10 : f32 to vector<8x1xf32>
    %21 = arith.addf %17, %20 : vector<8x1xf32>
    %22 = math.rsqrt %21 : vector<8x1xf32>
    %23 = vector.broadcast %22 : vector<8x1xf32> to vector<8x64xf32>
    %24 = arith.mulf %19, %23 : vector<8x64xf32>
    %cst_11 = arith.constant 0.000000e+00 : f32
    %25 = vector.broadcast %cst_11 : f32 to vector<8x64xf32>
    %26 = arith.cmpf oge, %24, %25 : vector<8x64xf32>
    %cst_12 = arith.constant 0.00999999977 : f32
    %27 = vector.broadcast %cst_12 : f32 to vector<8x64xf32>
    %28 = arith.mulf %27, %24 : vector<8x64xf32>
    %29 = arith.select %26, %24, %28 : vector<8x64xi1>, vector<8x64xf32>
    %30 = arith.truncf %29 : vector<8x64xf32> to vector<8x64xbf16>
    %c0_13 = arith.constant 0 : index
    %c0_14 = arith.constant 0 : index
    %c0_15 = arith.constant 0 : index
    %31 = vector.load %arg5[%c0_13, %c0_14, %c0_15] : memref<1x8x64xbf16, #tpu.memory_space<vmem>>, vector<1x8x64xbf16>
    %32 = vector.shape_cast %31 : vector<1x8x64xbf16> to vector<8x64xbf16>
    %33 = vector.shape_cast %30 : vector<8x64xbf16> to vector<1x8x64xbf16>
    tpu.vector_store %arg5[%c0_13, %c0_14, %c0_15], %33 {strides = array<i32>} : memref<1x8x64xbf16, #tpu.memory_space<vmem>>, vector<1x8x64xbf16>,
    return
  }
  func.func @transform_0(%arg0: i32, %arg1: i32) -> (i32, i32, i32) {
    %c0_i32 = arith.constant 0 : i32
    %c0_i32_0 = arith.constant 0 : i32
    return %arg0, %c0_i32, %arg1 : i32, i32, i32
  }
  func.func @transform_1(%arg0: i32, %arg1: i32) -> (i32, i32) {
    %c0_i32 = arith.constant 0 : i32
    %c0_i32_0 = arith.constant 0 : i32
    %c0_i32_1 = arith.constant 0 : i32
    return %c0_i32, %c0_i32_0 : i32, i32
  }
  func.func @transform_2(%arg0: i32, %arg1: i32) -> (i32, i32) {
    %c0_i32 = arith.constant 0 : i32
    %c0_i32_0 = arith.constant 0 : i32
    %c0_i32_1 = arith.constant 0 : i32
    return %c0_i32, %c0_i32_0 : i32, i32
  }
  func.func @transform_3(%arg0: i32, %arg1: i32) -> (i32, i32, i32) {
    %c0_i32 = arith.constant 0 : i32
    %c0_i32_0 = arith.constant 0 : i32
    return %arg0, %c0_i32, %arg1 : i32, i32, i32
  }
}

module attributes {stable_mosaic.version = 11 : i64} {
  func.func @_fused_matmul_kernel(%arg0: i32, %arg1: i32, %arg2: memref<1x64x64xbf16, #tpu.memory_space<vmem>>, %arg3: memref<32x64xbf16, #tpu.memory_space<vmem>>, %arg4: memref<32x1xf32, #tpu.memory_space<vmem>>, %arg5: memref<1x32x64xbf16, #tpu.memory_space<vmem>>) attributes {dimension_semantics = [#tpu.dimension_semantics<parallel>, #tpu.dimension_semantics<parallel>], iteration_bounds = array<i64: 2, 1>, scalar_prefetch = 0 : i64, scratch_operands = 0 : i64, tpu.core_type = #tpu.core_type<tc>, window_params = [{transform_indices = @transform_0, window_bounds = array<i64: 1, 64, 64>}, {pipeline_mode = #tpu.pipeline_mode<synchronous>, transform_indices = @transform_1, window_bounds = array<i64: 32, 64>}, {pipeline_mode = #tpu.pipeline_mode<synchronous>, transform_indices = @transform_2, window_bounds = array<i64: 32, 1>}, {transform_indices = @transform_3, window_bounds = array<i64: 1, 32, 64>}]} {
    %c0 = arith.constant 0 : index
    %c0_0 = arith.constant 0 : index
    %c0_1 = arith.constant 0 : index
    %0 = vector.load %arg2[%c0, %c0_0, %c0_1] : memref<1x64x64xbf16, #tpu.memory_space<vmem>>, vector<1x64x64xbf16>
    %1 = vector.shape_cast %0 : vector<1x64x64xbf16> to vector<64x64xbf16>
    %c0_2 = arith.constant 0 : index
    %c0_3 = arith.constant 0 : index
    %2 = vector.load %arg3[%c0_2, %c0_3] : memref<32x64xbf16, #tpu.memory_space<vmem>>, vector<32x64xbf16>
    %cst = arith.constant dense<0.000000e+00> : vector<32x64xf32>
    %3 = tpu.matmul %2, %1, %cst {dimension_numbers = #tpu.dot_dimension_numbers<[1], [0], [0], [1], [0, 0, 1, 1], [], []>} : vector<32x64xbf16>, vector<64x64xbf16>, vector<32x64xf32> -> vector<32x64xf32>
    %c0_4 = arith.constant 0 : index
    %c0_5 = arith.constant 0 : index
    %4 = vector.load %arg4[%c0_4, %c0_5] : memref<32x1xf32, #tpu.memory_space<vmem>>, vector<32x1xf32>
    %5 = vector.broadcast %4 : vector<32x1xf32> to vector<32x64xf32>
    %6 = arith.addf %3, %5 : vector<32x64xf32>
    %7 = arith.truncf %6 : vector<32x64xf32> to vector<32x64xbf16>
    %c0_6 = arith.constant 0 : index
    %c0_7 = arith.constant 0 : index
    %c0_8 = arith.constant 0 : index
    %8 = vector.load %arg5[%c0_6, %c0_7, %c0_8] : memref<1x32x64xbf16, #tpu.memory_space<vmem>>, vector<1x32x64xbf16>
    %9 = vector.shape_cast %8 : vector<1x32x64xbf16> to vector<32x64xbf16>
    %10 = vector.shape_cast %7 : vector<32x64xbf16> to vector<1x32x64xbf16>
    tpu.vector_store %arg5[%c0_6, %c0_7, %c0_8], %10 {strides = array<i32>} : memref<1x32x64xbf16, #tpu.memory_space<vmem>>, vector<1x32x64xbf16>,
    return
  }
  func.func @transform_0(%arg0: i32, %arg1: i32) -> (i32, i32, i32) {
    %c0_i32 = arith.constant 0 : i32
    %c0_i32_0 = arith.constant 0 : i32
    return %arg0, %c0_i32, %arg1 : i32, i32, i32
  }
  func.func @transform_1(%arg0: i32, %arg1: i32) -> (i32, i32) {
    %c0_i32 = arith.constant 0 : i32
    %c0_i32_0 = arith.constant 0 : i32
    %c0_i32_1 = arith.constant 0 : i32
    return %c0_i32, %c0_i32_0 : i32, i32
  }
  func.func @transform_2(%arg0: i32, %arg1: i32) -> (i32, i32) {
    %c0_i32 = arith.constant 0 : i32
    %c0_i32_0 = arith.constant 0 : i32
    %c0_i32_1 = arith.constant 0 : i32
    return %c0_i32, %c0_i32_0 : i32, i32
  }
  func.func @transform_3(%arg0: i32, %arg1: i32) -> (i32, i32, i32) {
    %c0_i32 = arith.constant 0 : i32
    %c0_i32_0 = arith.constant 0 : i32
    return %arg0, %c0_i32, %arg1 : i32, i32, i32
  }
}

module attributes {stable_mosaic.version = 11 : i64} {
  func.func @_fused_matmul_kernel(%arg0: i32, %arg1: i32, %arg2: memref<1x216x512xbf16, #tpu.memory_space<vmem>>, %arg3: memref<4x216xbf16, #tpu.memory_space<vmem>>, %arg4: memref<4x1xf32, #tpu.memory_space<vmem>>, %arg5: memref<1x4x512xbf16, #tpu.memory_space<vmem>>) attributes {dimension_semantics = [#tpu.dimension_semantics<parallel>, #tpu.dimension_semantics<parallel>], iteration_bounds = array<i64: 2, 1>, scalar_prefetch = 0 : i64, scratch_operands = 0 : i64, tpu.core_type = #tpu.core_type<tc>, window_params = [{transform_indices = @transform_0, window_bounds = array<i64: 1, 216, 512>}, {pipeline_mode = #tpu.pipeline_mode<synchronous>, transform_indices = @transform_1, window_bounds = array<i64: 4, 216>}, {pipeline_mode = #tpu.pipeline_mode<synchronous>, transform_indices = @transform_2, window_bounds = array<i64: 4, 1>}, {transform_indices = @transform_3, window_bounds = array<i64: 1, 4, 512>}]} {
    %c0 = arith.constant 0 : index
    %c0_0 = arith.constant 0 : index
    %c0_1 = arith.constant 0 : index
    %0 = vector.load %arg2[%c0, %c0_0, %c0_1] : memref<1x216x512xbf16, #tpu.memory_space<vmem>>, vector<1x216x512xbf16>
    %1 = vector.shape_cast %0 : vector<1x216x512xbf16> to vector<216x512xbf16>
    %c0_2 = arith.constant 0 : index
    %c0_3 = arith.constant 0 : index
    %2 = vector.load %arg3[%c0_2, %c0_3] : memref<4x216xbf16, #tpu.memory_space<vmem>>, vector<4x216xbf16>
    %cst = arith.constant dense<0.000000e+00> : vector<4x512xf32>
    %3 = tpu.matmul %2, %1, %cst {dimension_numbers = #tpu.dot_dimension_numbers<[1], [0], [0], [1], [0, 0, 1, 1], [], []>} : vector<4x216xbf16>, vector<216x512xbf16>, vector<4x512xf32> -> vector<4x512xf32>
    %c0_4 = arith.constant 0 : index
    %c0_5 = arith.constant 0 : index
    %4 = vector.load %arg4[%c0_4, %c0_5] : memref<4x1xf32, #tpu.memory_space<vmem>>, vector<4x1xf32>
    %5 = vector.broadcast %4 : vector<4x1xf32> to vector<4x512xf32>
    %6 = arith.addf %3, %5 : vector<4x512xf32>
    %cst_6 = arith.constant dense<0.000000e+00> : vector<4xf32>
    %7 = vector.multi_reduction <add>, %6, %cst_6 [1] : vector<4x512xf32> to vector<4xf32>
    %8 = vector.shape_cast %7 : vector<4xf32> to vector<4x1xf32>
    %cst_7 = arith.constant 5.120000e+02 : f32
    %9 = vector.broadcast %cst_7 : f32 to vector<4x1xf32>
    %10 = arith.divf %8, %9 : vector<4x1xf32>
    %11 = vector.broadcast %10 : vector<4x1xf32> to vector<4x512xf32>
    %12 = arith.subf %6, %11 : vector<4x512xf32>
    %13 = arith.mulf %12, %12 : vector<4x512xf32>
    %cst_8 = arith.constant dense<0.000000e+00> : vector<4xf32>
    %14 = vector.multi_reduction <add>, %13, %cst_8 [1] : vector<4x512xf32> to vector<4xf32>
    %15 = vector.shape_cast %14 : vector<4xf32> to vector<4x1xf32>
    %cst_9 = arith.constant 5.120000e+02 : f32
    %16 = vector.broadcast %cst_9 : f32 to vector<4x1xf32>
    %17 = arith.divf %15, %16 : vector<4x1xf32>
    %18 = vector.broadcast %10 : vector<4x1xf32> to vector<4x512xf32>
    %19 = arith.subf %6, %18 : vector<4x512xf32>
    %cst_10 = arith.constant 9.99999974E-6 : f32
    %20 = vector.broadcast %cst_10 : f32 to vector<4x1xf32>
    %21 = arith.addf %17, %20 : vector<4x1xf32>
    %22 = math.rsqrt %21 : vector<4x1xf32>
    %23 = vector.broadcast %22 : vector<4x1xf32> to vector<4x512xf32>
    %24 = arith.mulf %19, %23 : vector<4x512xf32>
    %cst_11 = arith.constant 0.000000e+00 : f32
    %25 = vector.broadcast %cst_11 : f32 to vector<4x512xf32>
    %26 = arith.cmpf oge, %24, %25 : vector<4x512xf32>
    %cst_12 = arith.constant 0.00999999977 : f32
    %27 = vector.broadcast %cst_12 : f32 to vector<4x512xf32>
    %28 = arith.mulf %27, %24 : vector<4x512xf32>
    %29 = arith.select %26, %24, %28 : vector<4x512xi1>, vector<4x512xf32>
    %30 = arith.truncf %29 : vector<4x512xf32> to vector<4x512xbf16>
    %c0_13 = arith.constant 0 : index
    %c0_14 = arith.constant 0 : index
    %c0_15 = arith.constant 0 : index
    %31 = vector.load %arg5[%c0_13, %c0_14, %c0_15] : memref<1x4x512xbf16, #tpu.memory_space<vmem>>, vector<1x4x512xbf16>
    %32 = vector.shape_cast %31 : vector<1x4x512xbf16> to vector<4x512xbf16>
    %33 = vector.shape_cast %30 : vector<4x512xbf16> to vector<1x4x512xbf16>
    tpu.vector_store %arg5[%c0_13, %c0_14, %c0_15], %33 {strides = array<i32>} : memref<1x4x512xbf16, #tpu.memory_space<vmem>>, vector<1x4x512xbf16>,
    return
  }
  func.func @transform_0(%arg0: i32, %arg1: i32) -> (i32, i32, i32) {
    %c0_i32 = arith.constant 0 : i32
    %c0_i32_0 = arith.constant 0 : i32
    return %arg0, %c0_i32, %arg1 : i32, i32, i32
  }
  func.func @transform_1(%arg0: i32, %arg1: i32) -> (i32, i32) {
    %c0_i32 = arith.constant 0 : i32
    %c0_i32_0 = arith.constant 0 : i32
    %c0_i32_1 = arith.constant 0 : i32
    return %c0_i32, %c0_i32_0 : i32, i32
  }
  func.func @transform_2(%arg0: i32, %arg1: i32) -> (i32, i32) {
    %c0_i32 = arith.constant 0 : i32
    %c0_i32_0 = arith.constant 0 : i32
    %c0_i32_1 = arith.constant 0 : i32
    return %c0_i32, %c0_i32_0 : i32, i32
  }
  func.func @transform_3(%arg0: i32, %arg1: i32) -> (i32, i32, i32) {
    %c0_i32 = arith.constant 0 : i32
    %c0_i32_0 = arith.constant 0 : i32
    return %arg0, %c0_i32, %arg1 : i32, i32, i32
  }
}

module attributes {stable_mosaic.version = 11 : i64} {
  func.func @_reduce_stack_kernel(%arg0: i32, %arg1: i32, %arg2: memref<1x4x256xbf16, #tpu.memory_space<vmem>>, %arg3: memref<7x4xbf16, #tpu.memory_space<vmem>>, %arg4: memref<1x7x1xf32, #tpu.memory_space<vmem>>, %arg5: memref<7x7xbf16, #tpu.memory_space<vmem>>, %arg6: memref<7x1xf32, #tpu.memory_space<vmem>>, %arg7: memref<2x7xbf16, #tpu.memory_space<vmem>>, %arg8: memref<2x1xf32, #tpu.memory_space<vmem>>, %arg9: memref<1x2x256xf32, #tpu.memory_space<vmem>>) attributes {dimension_semantics = [#tpu.dimension_semantics<parallel>, #tpu.dimension_semantics<parallel>], iteration_bounds = array<i64: 2, 2>, scalar_prefetch = 0 : i64, scratch_operands = 0 : i64, tpu.core_type = #tpu.core_type<tc>, window_params = [{transform_indices = @transform_0, window_bounds = array<i64: 1, 4, 256>}, {pipeline_mode = #tpu.pipeline_mode<synchronous>, transform_indices = @transform_1, window_bounds = array<i64: 7, 4>}, {transform_indices = @transform_2, window_bounds = array<i64: 1, 7, 1>}, {pipeline_mode = #tpu.pipeline_mode<synchronous>, transform_indices = @transform_3, window_bounds = array<i64: 7, 7>}, {pipeline_mode = #tpu.pipeline_mode<synchronous>, transform_indices = @transform_4, window_bounds = array<i64: 7, 1>}, {pipeline_mode = #tpu.pipeline_mode<synchronous>, transform_indices = @transform_5, window_bounds = array<i64: 2, 7>}, {pipeline_mode = #tpu.pipeline_mode<synchronous>, transform_indices = @transform_6, window_bounds = array<i64: 2, 1>}, {transform_indices = @transform_7, window_bounds = array<i64: 1, 2, 256>}]} {
    %c0 = arith.constant 0 : index
    %c0_0 = arith.constant 0 : index
    %c0_1 = arith.constant 0 : index
    %0 = vector.load %arg2[%c0, %c0_0, %c0_1] : memref<1x4x256xbf16, #tpu.memory_space<vmem>>, vector<1x4x256xbf16>
    %1 = vector.shape_cast %0 : vector<1x4x256xbf16> to vector<4x256xbf16>
    %c0_2 = arith.constant 0 : index
    %c0_3 = arith.constant 0 : index
    %2 = vector.load %arg3[%c0_2, %c0_3] : memref<7x4xbf16, #tpu.memory_space<vmem>>, vector<7x4xbf16>
    %cst = arith.constant dense<0.000000e+00> : vector<7x256xf32>
    %3 = tpu.matmul %2, %1, %cst {dimension_numbers = #tpu.dot_dimension_numbers<[1], [0], [0], [1], [0, 0, 1, 1], [], []>} : vector<7x4xbf16>, vector<4x256xbf16>, vector<7x256xf32> -> vector<7x256xf32>
    %c0_4 = arith.constant 0 : index
    %c0_5 = arith.constant 0 : index
    %c0_6 = arith.constant 0 : index
    %4 = vector.load %arg4[%c0_4, %c0_5, %c0_6] : memref<1x7x1xf32, #tpu.memory_space<vmem>>, vector<1x7x1xf32>
    %5 = vector.shape_cast %4 : vector<1x7x1xf32> to vector<7x1xf32>
    %6 = vector.broadcast %5 : vector<7x1xf32> to vector<7x256xf32>
    %7 = arith.addf %3, %6 : vector<7x256xf32>
    %cst_7 = arith.constant 0.000000e+00 : f32
    %8 = vector.broadcast %cst_7 : f32 to vector<7x256xf32>
    %9 = arith.cmpf oge, %7, %8 : vector<7x256xf32>
    %cst_8 = arith.constant 0.00999999977 : f32
    %10 = vector.broadcast %cst_8 : f32 to vector<7x256xf32>
    %11 = arith.mulf %10, %7 : vector<7x256xf32>
    %12 = arith.select %9, %7, %11 : vector<7x256xi1>, vector<7x256xf32>
    %c0_9 = arith.constant 0 : index
    %c0_10 = arith.constant 0 : index
    %13 = vector.load %arg5[%c0_9, %c0_10] : memref<7x7xbf16, #tpu.memory_space<vmem>>, vector<7x7xbf16>
    %14 = arith.truncf %12 : vector<7x256xf32> to vector<7x256xbf16>
    %cst_11 = arith.constant dense<0.000000e+00> : vector<7x256xf32>
    %15 = tpu.matmul %13, %14, %cst_11 {dimension_numbers = #tpu.dot_dimension_numbers<[1], [0], [0], [1], [0, 0, 1, 1], [], []>} : vector<7x7xbf16>, vector<7x256xbf16>, vector<7x256xf32> -> vector<7x256xf32>
    %c0_12 = arith.constant 0 : index
    %c0_13 = arith.constant 0 : index
    %16 = vector.load %arg6[%c0_12, %c0_13] : memref<7x1xf32, #tpu.memory_space<vmem>>, vector<7x1xf32>
    %17 = vector.broadcast %16 : vector<7x1xf32> to vector<7x256xf32>
    %18 = arith.addf %15, %17 : vector<7x256xf32>
    %cst_14 = arith.constant 0.000000e+00 : f32
    %19 = vector.broadcast %cst_14 : f32 to vector<7x256xf32>
    %20 = arith.cmpf oge, %18, %19 : vector<7x256xf32>
    %cst_15 = arith.constant 0.00999999977 : f32
    %21 = vector.broadcast %cst_15 : f32 to vector<7x256xf32>
    %22 = arith.mulf %21, %18 : vector<7x256xf32>
    %23 = arith.select %20, %18, %22 : vector<7x256xi1>, vector<7x256xf32>
    %c0_16 = arith.constant 0 : index
    %c0_17 = arith.constant 0 : index
    %24 = vector.load %arg7[%c0_16, %c0_17] : memref<2x7xbf16, #tpu.memory_space<vmem>>, vector<2x7xbf16>
    %25 = arith.truncf %23 : vector<7x256xf32> to vector<7x256xbf16>
    %cst_18 = arith.constant dense<0.000000e+00> : vector<2x256xf32>
    %26 = tpu.matmul %24, %25, %cst_18 {dimension_numbers = #tpu.dot_dimension_numbers<[1], [0], [0], [1], [0, 0, 1, 1], [], []>} : vector<2x7xbf16>, vector<7x256xbf16>, vector<2x256xf32> -> vector<2x256xf32>
    %c0_19 = arith.constant 0 : index
    %c0_20 = arith.constant 0 : index
    %27 = vector.load %arg8[%c0_19, %c0_20] : memref<2x1xf32, #tpu.memory_space<vmem>>, vector<2x1xf32>
    %28 = vector.broadcast %27 : vector<2x1xf32> to vector<2x256xf32>
    %29 = arith.addf %26, %28 : vector<2x256xf32>
    %c0_21 = arith.constant 0 : index
    %c0_22 = arith.constant 0 : index
    %c0_23 = arith.constant 0 : index
    %30 = vector.load %arg9[%c0_21, %c0_22, %c0_23] : memref<1x2x256xf32, #tpu.memory_space<vmem>>, vector<1x2x256xf32>
    %31 = vector.shape_cast %30 : vector<1x2x256xf32> to vector<2x256xf32>
    %32 = vector.shape_cast %29 : vector<2x256xf32> to vector<1x2x256xf32>
    tpu.vector_store %arg9[%c0_21, %c0_22, %c0_23], %32 {strides = array<i32>} : memref<1x2x256xf32, #tpu.memory_space<vmem>>, vector<1x2x256xf32>,
    return
  }
  func.func @transform_0(%arg0: i32, %arg1: i32) -> (i32, i32, i32) {
    %c0_i32 = arith.constant 0 : i32
    %c0_i32_0 = arith.constant 0 : i32
    return %arg0, %c0_i32, %arg1 : i32, i32, i32
  }
  func.func @transform_1(%arg0: i32, %arg1: i32) -> (i32, i32) {
    %c0_i32 = arith.constant 0 : i32
    %c0_i32_0 = arith.constant 0 : i32
    %c0_i32_1 = arith.constant 0 : i32
    return %c0_i32, %c0_i32_0 : i32, i32
  }
  func.func @transform_2(%arg0: i32, %arg1: i32) -> (i32, i32, i32) {
    %c0_i32 = arith.constant 0 : i32
    %c0_i32_0 = arith.constant 0 : i32
    %c0_i32_1 = arith.constant 0 : i32
    return %arg0, %c0_i32, %c0_i32_0 : i32, i32, i32
  }
  func.func @transform_3(%arg0: i32, %arg1: i32) -> (i32, i32) {
    %c0_i32 = arith.constant 0 : i32
    %c0_i32_0 = arith.constant 0 : i32
    %c0_i32_1 = arith.constant 0 : i32
    return %c0_i32, %c0_i32_0 : i32, i32
  }
  func.func @transform_4(%arg0: i32, %arg1: i32) -> (i32, i32) {
    %c0_i32 = arith.constant 0 : i32
    %c0_i32_0 = arith.constant 0 : i32
    %c0_i32_1 = arith.constant 0 : i32
    return %c0_i32, %c0_i32_0 : i32, i32
  }
  func.func @transform_5(%arg0: i32, %arg1: i32) -> (i32, i32) {
    %c0_i32 = arith.constant 0 : i32
    %c0_i32_0 = arith.constant 0 : i32
    %c0_i32_1 = arith.constant 0 : i32
    return %c0_i32, %c0_i32_0 : i32, i32
  }
  func.func @transform_6(%arg0: i32, %arg1: i32) -> (i32, i32) {
    %c0_i32 = arith.constant 0 : i32
    %c0_i32_0 = arith.constant 0 : i32
    %c0_i32_1 = arith.constant 0 : i32
    return %c0_i32, %c0_i32_0 : i32, i32
  }
  func.func @transform_7(%arg0: i32, %arg1: i32) -> (i32, i32, i32) {
    %c0_i32 = arith.constant 0 : i32
    %c0_i32_0 = arith.constant 0 : i32
    return %arg0, %c0_i32, %arg1 : i32, i32, i32
  }
}

</mosaic_0001>

<llo_original>
// kernel: tile.18
$region0: #{tile.18}
  #allocation2 [shape = 's32[1]{0}', space=sflag, size = 0x4, scoped, tag = 'scoped memory for tile.18']
  %s0 = inlined_call_operand.hbm [shape: f32[4], index: 0, kind: input, shape index: {}]
  %s1 = inlined_call_operand.vmem [shape: f32[8,4], index: 1, kind: output, shape index: {}]
  $region1: #{tile.18} parent=0
    #allocation0 [shape = 'u8[512]{0}', space=vmem, size = 0x400, scoped, tag = 'operand span for operand 0']
    #allocation1 [shape = 's32[1]{0}', space=sflag, size = 0x4, scoped, tag = 'scoped memory for tile.18']
    %2 = vsyncpa [#allocation1], 0
    // Predicated region
    $region2: #{tile.18} parent=1 // pred_check
      _
    $region3: #{tile.18} parent=1 // pred_check_branch
      %4 = sbr.rel (0) target = $region5
    $region4: #{tile.18} parent=1 // pred_region
      %6 = vsyncadd [#allocation1], 0
      %s8 = sshll.u32 %s0, 4
      %s9 = int_to_ptr.hbm [resolvable:$true] %s8
      %s10 = sshll.u32 [#allocation0], 4
      %s11 = int_to_ptr.vmem [resolvable:$true] %s10
      %13 = dma.hbm_to_vmem [thread:$0]  %s9, 16, %s11, [#allocation1]
    $region5: #{tile.18} parent=1 // pred_fallthru
      _
    // Predicated region
    $region6: #{tile.18} parent=1 // pred_check
      _
    $region7: #{tile.18} parent=1 // pred_check_branch
      %15 = sbr.rel (0) target = $region9
    $region8: #{tile.18} parent=1 // pred_region
      %17 = dma.done [#allocation1], 16
    $region9: #{tile.18} parent=1 // pred_fallthru
      _
    %v18 = vld [vmem:[#allocation0] ss:$0 sm:$0xff]
    %19 = vst [vmem:[%s1] sm:$0xff] %v18
    %20 = vsyncpa [#allocation1], 1

// kernel: tile.13
$region0: #{tile.13}
  #allocation2 [shape = 's32[1]{0}', space=sflag, size = 0x4, scoped, tag = 'scoped memory for tile.13']
  %s0 = inlined_call_operand.hbm [shape: f32[8], index: 0, kind: input, shape index: {}]
  %s1 = inlined_call_operand.vmem [shape: f32[8,8], index: 1, kind: output, shape index: {}]
  $region1: #{tile.13} parent=0
    #allocation0 [shape = 'u8[512]{0}', space=vmem, size = 0x400, scoped, tag = 'operand span for operand 0']
    #allocation1 [shape = 's32[1]{0}', space=sflag, size = 0x4, scoped, tag = 'scoped memory for tile.13']
    %2 = vsyncpa [#allocation1], 0
    // Predicated region
    $region2: #{tile.13} parent=1 // pred_check
      _
    $region3: #{tile.13} parent=1 // pred_check_branch
      %4 = sbr.rel (0) target = $region5
    $region4: #{tile.13} parent=1 // pred_region
      %6 = vsyncadd [#allocation1], 0
      %s8 = sshll.u32 %s0, 4
      %s9 = int_to_ptr.hbm [resolvable:$true] %s8
      %s10 = sshll.u32 [#allocation0], 4
      %s11 = int_to_ptr.vmem [resolvable:$true] %s10
      %13 = dma.hbm_to_vmem [thread:$0]  %s9, 16, %s11, [#allocation1]
    $region5: #{tile.13} parent=1 // pred_fallthru
      _
    // Predicated region
    $region6: #{tile.13} parent=1 // pred_check
      _
    $region7: #{tile.13} parent=1 // pred_check_branch
      %15 = sbr.rel (0) target = $region9
    $region8: #{tile.13} parent=1 // pred_region
      %17 = dma.done [#allocation1], 16
    $region9: #{tile.13} parent=1 // pred_fallthru
      _
    %v18 = vld [vmem:[#allocation0] ss:$0 sm:$0xff]
    %19 = vst [vmem:[%s1] sm:$0xff] %v18
    %20 = vsyncpa [#allocation1], 1

// kernel: tile.1
$region0: #{tile.1}
  %s0 = inlined_call_operand.vmem [shape: f32[8,4], index: 0, kind: input, shape index: {}]
  %s1 = inlined_call_operand.vmem [shape: f32[32,1], index: 1, kind: output, shape index: {}]
  %v2 = vld [vmem:[%s0] sm:$0xff]
  %vm3 = vcmask 7168
  %4 = vst.msk [vmem:[%s1] ss:$4 sm:$0xff] %vm3, %v2
  %v5 = vld [vmem:[%s0] sm:$0xff]
  %6 = vrot.lane.b32.xlu0 %v5, 127
  %v7 = vpop.permute.xlu0 %6
  %vm8 = vcmask 7168
  %s9 = scalar_lea.vmem %s1, 1
  %10 = vst.msk [vmem:[%s9] ss:$4 sm:$0xff] %vm8, %v7
  %v11 = vld [vmem:[%s0] sm:$0xff]
  %12 = vrot.lane.b32.xlu0 %v11, 126
  %v13 = vpop.permute.xlu0 %12
  %vm14 = vcmask 7168
  %s15 = scalar_lea.vmem %s1, 2
  %16 = vst.msk [vmem:[%s15] ss:$4 sm:$0xff] %vm14, %v13
  %v17 = vld [vmem:[%s0] sm:$0xff]
  %18 = vrot.lane.b32.xlu0 %v17, 125
  %v19 = vpop.permute.xlu0 %18
  %vm20 = vcmask 7168
  %s21 = scalar_lea.vmem %s1, 3
  %22 = vst.msk [vmem:[%s21] ss:$4 sm:$0xff] %vm20, %v19

// kernel: tile.0
$region0: #{tile.0}
  %s0 = inlined_call_operand.vmem [shape: f32[8,8], index: 0, kind: input, shape index: {}]
  %s1 = inlined_call_operand.vmem [shape: f32[64,1], index: 1, kind: output, shape index: {}]
  %v2 = vld [vmem:[%s0] sm:$0xff]
  %vm3 = vcmask 7168
  %4 = vst.msk [vmem:[%s1] ss:$8 sm:$0xf] %vm3, %v2
  %5 = vst.msk [vmem:[%s1] ss:$8 sm:$0xf0] %vm3, %v2
  %v6 = vld [vmem:[%s0] sm:$0xff]
  %7 = vrot.lane.b32.xlu0 %v6, 127
  %v8 = vpop.permute.xlu0 %7
  %vm9 = vcmask 7168
  %s10 = scalar_lea.vmem %s1, 1
  %11 = vst.msk [vmem:[%s10] ss:$8 sm:$0xf] %vm9, %v8
  %s12 = scalar_lea.vmem %s1, 1
  %13 = vst.msk [vmem:[%s12] ss:$8 sm:$0xf0] %vm9, %v8
  %v14 = vld [vmem:[%s0] sm:$0xff]
  %15 = vrot.lane.b32.xlu0 %v14, 126
  %v16 = vpop.permute.xlu0 %15
  %vm17 = vcmask 7168
  %s18 = scalar_lea.vmem %s1, 2
  %19 = vst.msk [vmem:[%s18] ss:$8 sm:$0xf] %vm17, %v16
  %s20 = scalar_lea.vmem %s1, 2
  %21 = vst.msk [vmem:[%s20] ss:$8 sm:$0xf0] %vm17, %v16
  %v22 = vld [vmem:[%s0] sm:$0xff]
  %23 = vrot.lane.b32.xlu0 %v22, 125
  %v24 = vpop.permute.xlu0 %23
  %vm25 = vcmask 7168
  %s26 = scalar_lea.vmem %s1, 3
  %27 = vst.msk [vmem:[%s26] ss:$8 sm:$0xf] %vm25, %v24
  %s28 = scalar_lea.vmem %s1, 3
  %29 = vst.msk [vmem:[%s28] ss:$8 sm:$0xf0] %vm25, %v24
  %v30 = vld [vmem:[%s0] sm:$0xff]
  %31 = vrot.lane.b32.xlu0 %v30, 124
  %v32 = vpop.permute.xlu0 %31
  %vm33 = vcmask 7168
  %s34 = scalar_lea.vmem %s1, 4
  %35 = vst.msk [vmem:[%s34] ss:$8 sm:$0xf] %vm33, %v32
  %s36 = scalar_lea.vmem %s1, 4
  %37 = vst.msk [vmem:[%s36] ss:$8 sm:$0xf0] %vm33, %v32
  %v38 = vld [vmem:[%s0] sm:$0xff]
  %39 = vrot.lane.b32.xlu0 %v38, 123
  %v40 = vpop.permute.xlu0 %39
  %vm41 = vcmask 7168
  %s42 = scalar_lea.vmem %s1, 5
  %43 = vst.msk [vmem:[%s42] ss:$8 sm:$0xf] %vm41, %v40
  %s44 = scalar_lea.vmem %s1, 5
  %45 = vst.msk [vmem:[%s44] ss:$8 sm:$0xf0] %vm41, %v40
  %v46 = vld [vmem:[%s0] sm:$0xff]
  %47 = vrot.lane.b32.xlu0 %v46, 122
  %v48 = vpop.permute.xlu0 %47
  %vm49 = vcmask 7168
  %s50 = scalar_lea.vmem %s1, 6
  %51 = vst.msk [vmem:[%s50] ss:$8 sm:$0xf] %vm49, %v48
  %s52 = scalar_lea.vmem %s1, 6
  %53 = vst.msk [vmem:[%s52] ss:$8 sm:$0xf0] %vm49, %v48
  %v54 = vld [vmem:[%s0] sm:$0xff]
  %55 = vrot.lane.b32.xlu0 %v54, 121
  %v56 = vpop.permute.xlu0 %55
  %vm57 = vcmask 7168
  %s58 = scalar_lea.vmem %s1, 7
  %59 = vst.msk [vmem:[%s58] ss:$8 sm:$0xf] %vm57, %v56
  %s60 = scalar_lea.vmem %s1, 7
  %61 = vst.msk [vmem:[%s60] ss:$8 sm:$0xf0] %vm57, %v56

// kernel: forward.13
$region0: #{forward.13}
  #allocation0 [shape = 'u32[]', space=smem, size = 0x4, offset = 0x4, fixed_abs, tag = 'smem constant byte address 0x4 - core index']
  #allocation1 [shape = 'u32[72,128]{1,0:T(1,128)}', space=vmem, size = 0x9000, scoped, tag = 'internal scratch']
  %s0 = inlined_call_operand.vmem [shape: bf16[2,54,512], index: 0, kind: input, shape index: {}]
  %s1 = inlined_call_operand.vmem [shape: bf16[4,54], index: 1, kind: input, shape index: {}]
  %s2 = inlined_call_operand.vmem [shape: f32[4,1], index: 2, kind: input, shape index: {}]
  %s3 = inlined_call_operand.vmem [shape: bf16[2,4,512], index: 3, kind: output, shape index: {}]
  %s4 = sld [smem:[#allocation0]]
  $region45: #{forward.13} parent=0
    _
  %s6 = ssub.s32 1, %s4
  %s7 = scalar_select 0, %s6, %s4
  loop: start=0, step=1, limit=4
  $region2: #{forward.13} parent=0 // loop_pre_header
    _
  $region3: #{forward.13} parent=0 // loop_header
    %s9 = sphi 0, %s13
    %p10 = scmp.ge.s32.totalorder %s9, 4
    %s16 = sphi 0, %s28
    %s17 = sphi 0, %s24
    %s18 = sphi 0, %s16
    %s19 = sphi 0, %s17
    %s20 = sphi 0, %s18
    %s21 = sphi 0, %s19
    %s33 = sphi 0, %s35
    %s36 = sphi 0, %s33
    %s37 = sphi 0, %s36
    %s53 = sphi 0, %s37
    %s57 = sphi 0, %s57
    %s59 = sphi 0, %s57
    %s60 = sphi 0, %s59
    %s74 = sphi 0, %s60
    %s78 = sphi 0, %s78
    %s80 = sphi 0, %s78
    %s81 = sphi 0, %s80
    %s95 = sphi 0, %s81
    %s103 = sphi 0, %s105
    %s106 = sphi 0, %s103
    %s107 = sphi 0, %s106
    %s123 = sphi 0, %s107
  $region4: #{forward.13} parent=0 // loop_header_branch
    %12 = sbr.rel (%p10) target = $region8
  $region5: #{forward.13} parent=0 // loop_body
    %s14 = ssub.s32 %s9, 1
    %s15 = ssub.s32 %s9, 2
    %s22 = sadd.s32 1, %s17
    %p23 = scmp.ge.s32.totalorder %s22, 1
    %s24 = scalar_select %p23, 0, %s22
    %s25 = sadd.s32 1, %s16
    %s26 = scalar_select %p23, %s25, %s16
    %p27 = scmp.ge.s32.totalorder %s26, 2
    %s28 = scalar_select %p27, 0, %s26
    %s29 = ssub.s32 %s16, %s28
    %s30 = ssub.s32 %s17, %s24
    %s31 = sor.u32 %s29, %s30
    %p32 = scmp.eq.s32.totalorder %s31, 0
    %s34 = sadd.s32 %s33, 1
    %s35 = scalar_select %p32, %s33, %s34
    %p38 = pneg %p32
    %p39 = scmp.eq.s32.totalorder %s9, 1
    %p40 = por %p38, %p39
    %p41 = scmp.ne.s32.totalorder %s33, %s36
    %p42 = scmp.eq.s32.totalorder %s9, 0
    %p43 = por %p41, %p42
    %p44 = scmp.ne.s32.totalorder %s33, %s36
    %p45 = scmp.eq.s32.totalorder %s14, 1
    %p46 = por %p44, %p45
    %p47 = scmp.ne.s32.totalorder %s36, %s37
    %p48 = scmp.eq.s32.totalorder %s14, 0
    %p49 = por %p47, %p48
    %p50 = scmp.ne.s32.totalorder %s36, %s37
    %p51 = scmp.eq.s32.totalorder %s15, 1
    %p52 = por %p50, %p51
    %p54 = scmp.ne.s32.totalorder %s37, %s53
    %p55 = scmp.eq.s32.totalorder %s15, 0
    %p56 = por %p54, %p55
    %s58 = sadd.s32 %s57, 1
    %p61 = scmp.eq.s32.totalorder %s9, 1
    %p62 = scmp.ne.s32.totalorder %s57, %s59
    %p63 = scmp.eq.s32.totalorder %s9, 0
    %p64 = por %p62, %p63
    %p65 = scmp.ne.s32.totalorder %s57, %s59
    %p66 = scmp.eq.s32.totalorder %s14, 1
    %p67 = por %p65, %p66
    %p68 = scmp.ne.s32.totalorder %s59, %s60
    %p69 = scmp.eq.s32.totalorder %s14, 0
    %p70 = por %p68, %p69
    %p71 = scmp.ne.s32.totalorder %s59, %s60
    %p72 = scmp.eq.s32.totalorder %s15, 1
    %p73 = por %p71, %p72
    %p75 = scmp.ne.s32.totalorder %s60, %s74
    %p76 = scmp.eq.s32.totalorder %s15, 0
    %p77 = por %p75, %p76
    %s79 = sadd.s32 %s78, 1
    %p82 = scmp.eq.s32.totalorder %s9, 1
    %p83 = scmp.ne.s32.totalorder %s78, %s80
    %p84 = scmp.eq.s32.totalorder %s9, 0
    %p85 = por %p83, %p84
    %p86 = scmp.ne.s32.totalorder %s78, %s80
    %p87 = scmp.eq.s32.totalorder %s14, 1
    %p88 = por %p86, %p87
    %p89 = scmp.ne.s32.totalorder %s80, %s81
    %p90 = scmp.eq.s32.totalorder %s14, 0
    %p91 = por %p89, %p90
    %p92 = scmp.ne.s32.totalorder %s80, %s81
    %p93 = scmp.eq.s32.totalorder %s15, 1
    %p94 = por %p92, %p93
    %p96 = scmp.ne.s32.totalorder %s81, %s95
    %p97 = scmp.eq.s32.totalorder %s15, 0
    %p98 = por %p96, %p97
    %s99 = ssub.s32 %s16, %s28
    %s100 = ssub.s32 %s17, %s24
    %s101 = sor.u32 %s99, %s100
    %p102 = scmp.eq.s32.totalorder %s101, 0
    %s104 = sadd.s32 %s103, 1
    %s105 = scalar_select %p102, %s103, %s104
    %p108 = pneg %p102
    %p109 = scmp.eq.s32.totalorder %s9, 1
    %p110 = por %p108, %p109
    %p111 = scmp.ne.s32.totalorder %s103, %s106
    %p112 = scmp.eq.s32.totalorder %s9, 0
    %p113 = por %p111, %p112
    %p114 = scmp.ne.s32.totalorder %s103, %s106
    %p115 = scmp.eq.s32.totalorder %s14, 1
    %p116 = por %p114, %p115
    %p117 = scmp.ne.s32.totalorder %s106, %s107
    %p118 = scmp.eq.s32.totalorder %s14, 0
    %p119 = por %p117, %p118
    %p120 = scmp.ne.s32.totalorder %s106, %s107
    %p121 = scmp.eq.s32.totalorder %s15, 1
    %p122 = por %p120, %p121
    %p124 = scmp.ne.s32.totalorder %s107, %s123
    %p125 = scmp.eq.s32.totalorder %s15, 0
    %p126 = por %p124, %p125
    %p127 = scmp.le.s32.totalorder 1, %s9
    %p128 = scmp.lt.s32.totalorder %s9, 3
    %p129 = pnand %p127, %p128
    %p130 = pneg %p129
    // Predicated region
    $region9: #{forward.13} parent=5 // pred_check
      _
    $region10: #{forward.13} parent=5 // pred_check_branch
      %132 = sbr.rel (%p129) target = $region12
    $region11: #{forward.13} parent=5 // pred_region
      %s133 = ssub.s32 %s9, 1
      // Predicated region
      $region13: #{forward.13} parent=11 // pred_check
        %p134 = pneg %p70
      $region14: #{forward.13} parent=11 // pred_check_branch
        %136 = sbr.rel (%p134) target = $region16
      $region15: #{forward.13} parent=11 // pred_region
        _
      $region16: #{forward.13} parent=11 // pred_fallthru
        _
      // Predicated region
      $region17: #{forward.13} parent=11 // pred_check
        %p137 = pneg %p91
      $region18: #{forward.13} parent=11 // pred_check_branch
        %139 = sbr.rel (%p137) target = $region20
      $region19: #{forward.13} parent=11 // pred_region
        _
      $region20: #{forward.13} parent=11 // pred_fallthru
        _
    $region12: #{forward.13} parent=5 // pred_fallthru
      _
    %p140 = scmp.lt.s32.totalorder %s9, 2
    // Predicated region
    $region21: #{forward.13} parent=5 // pred_check
      %p141 = pneg %p140
    $region22: #{forward.13} parent=5 // pred_check_branch
      %143 = sbr.rel (%p141) target = $region24
    $region23: #{forward.13} parent=5 // pred_region
      // Predicated region
      $region25: #{forward.13} parent=23 // pred_check
        %p144 = pneg %p43
      $region26: #{forward.13} parent=23 // pred_check_branch
        %146 = sbr.rel (%p144) target = $region28
      $region27: #{forward.13} parent=23 // pred_region
        %s147 = smul.u32 4, %s17
        %p148 = scmp.lt.s32.totalorder %s16, 1
        %s149 = scalar_select %p148, %s16, 1
        %p150 = scmp.lt.s32.totalorder %s147, 3
        %s151 = scalar_select %p150, %s147, 3
        %s152 = smul.addr %s149, 28
        %s153 = sadd.s32 %s151, %s152
        %s154 = smul.addr %s153, 4
        %s155 = scalar_lea.vmem %s0, %s154
        %s156 = smul.u32 4, %s17
      $region28: #{forward.13} parent=23 // pred_fallthru
        _
    $region24: #{forward.13} parent=5 // pred_fallthru
      _
    %p157 = scmp.le.s32.totalorder 1, %s9
    %p158 = scmp.lt.s32.totalorder %s9, 3
    %p159 = pnand %p157, %p158
    %p160 = pneg %p159
    // Predicated region
    $region29: #{forward.13} parent=5 // pred_check
      _
    $region30: #{forward.13} parent=5 // pred_check_branch
      %162 = sbr.rel (%p159) target = $region32
    $region31: #{forward.13} parent=5 // pred_region
      %s163 = ssub.s32 %s9, 1
      %s164 = smul.u32 4, %s19
      %p165 = scmp.lt.s32.totalorder %s18, 1
      %s166 = scalar_select %p165, %s18, 1
      %p167 = scmp.lt.s32.totalorder %s164, 3
      %s168 = scalar_select %p167, %s164, 3
      %s169 = smul.addr %s166, 28
      %s170 = sadd.s32 %s168, %s169
      %s171 = smul.addr %s170, 4
      %s172 = scalar_lea.vmem %s0, %s171
      %p173 = pneg %p49
      %p174 = pneg %p46
      %p175 = pneg %p70
      %p176 = pneg %p67
      %p177 = pneg %p91
      %p178 = pneg %p88
      %p179 = pneg %p119
      %p180 = pneg %p116
      %s181 = smul.u32 4, %s19
      %p182 = scmp.lt.s32.totalorder %s18, 1
      %s183 = scalar_select %p182, %s18, 1
      %p184 = scmp.lt.s32.totalorder %s181, 3
      %s185 = scalar_select %p184, %s181, 3
      %s186 = smul.addr %s183, 4
      %s187 = sadd.s32 %s185, %s186
      %s188 = smul.addr %s187, 2
      %s189 = scalar_lea.vmem %s3, %s188
      %s190 = smul.u32 4, %s19
      %p191 = scmp.lt.s32.totalorder %s18, 1
      %s192 = scalar_select %p191, %s18, 1
      %p193 = scmp.lt.s32.totalorder %s190, 3
      %s194 = scalar_select %p193, %s190, 3
      %s195 = smul.addr %s192, 28
      %s196 = sadd.s32 %s194, %s195
      %s197 = smul.addr %s196, 4
      %s198 = scalar_lea.vmem %s0, %s197
      %s199 = smul.u32 4, %s19
      %s200 = smul.u32 4, %s19
      %p201 = scmp.lt.s32.totalorder %s18, 1
      %s202 = scalar_select %p201, %s18, 1
      %p203 = scmp.lt.s32.totalorder %s200, 3
      %s204 = scalar_select %p203, %s200, 3
      %s205 = smul.addr %s202, 4
      %s206 = sadd.s32 %s204, %s205
      %s207 = smul.addr %s206, 2
      %s208 = scalar_lea.vmem %s3, %s207
      %s209 = smul.u32 4, %s19
      %v211 = vld [vmem:[%s198] sm:$0xff]
      %v212 = vld [vmem:[%s198 + $0x8] sm:$0xff]
      %v213 = vld [vmem:[%s198 + $0x10] sm:$0xff]
      %v214 = vld [vmem:[%s198 + $0x18] sm:$0xff]
      %v215 = vld [vmem:[%s198 + $0x20] sm:$0xff]
      %v216 = vld [vmem:[%s198 + $0x28] sm:$0xff]
      %v217 = vld [vmem:[%s198 + $0x30] sm:$0xff]
      %v218 = vld [vmem:[%s198 + $0x38] sm:$0xff]
      %v219 = vld [vmem:[%s198 + $0x40] sm:$0xff]
      %v220 = vld [vmem:[%s198 + $0x48] sm:$0xff]
      %v221 = vld [vmem:[%s198 + $0x50] sm:$0xff]
      %v222 = vld [vmem:[%s198 + $0x58] sm:$0xff]
      %v223 = vld [vmem:[%s198 + $0x60] sm:$0x77]
      %v224 = vld [vmem:[%s198 + $0x68] sm:$0x77]
      %v225 = vld [vmem:[%s1] sm:$0x3]
      %v226 = vld [vmem:[%s2] sm:$0xf]
      %228 = vset.pattern.permute.xlu0 0
      %229 = vperm.xlu0 %228, %v226
      %v230 = vpop.permute.xlu0 %229
      %v246 = vunpack.c.l.b16 %v211
      %v247 = vunpack.c.h.b16 %v211
      %v248 = vunpack.c.l.b16 %v212
      %v249 = vunpack.c.h.b16 %v212
      %v250 = vunpack.c.l.b16 %v213
      %v251 = vunpack.c.h.b16 %v213
      %v252 = vunpack.c.l.b16 %v214
      %v253 = vunpack.c.h.b16 %v214
      %v254 = vunpack.c.l.b16 %v215
      %v255 = vunpack.c.h.b16 %v215
      %v256 = vunpack.c.l.b16 %v216
      %v257 = vunpack.c.h.b16 %v216
      %v258 = vunpack.c.l.b16 %v217
      %v259 = vunpack.c.h.b16 %v217
      %v260 = vunpack.c.l.b16 %v218
      %v261 = vunpack.c.h.b16 %v218
      %v262 = vunpack.c.l.b16 %v219
      %v263 = vunpack.c.h.b16 %v219
      %v264 = vunpack.c.l.b16 %v220
      %v265 = vunpack.c.h.b16 %v220
      %v266 = vunpack.c.l.b16 %v221
      %v267 = vunpack.c.h.b16 %v221
      %v268 = vunpack.c.l.b16 %v222
      %v269 = vunpack.c.h.b16 %v222
      %v270 = vunpack.c.l.b16 %v223
      %v271 = vunpack.c.h.b16 %v223
      %v272 = vunpack.c.l.b16 %v224
      %v273 = vunpack.c.h.b16 %v224
      %v274 = vpack.c.b16 %v250, %v246
      %v275 = vpack.c.b16 %v251, %v247
      %v276 = vpack.c.b16 %v252, %v248
      %v277 = vpack.c.b16 %v253, %v249
      %v278 = vpack.c.b16 %v258, %v254
      %v279 = vpack.c.b16 %v259, %v255
      %v280 = vpack.c.b16 %v260, %v256
      %v281 = vpack.c.b16 %v261, %v257
      %v282 = vpack.c.b16 %v266, %v262
      %v283 = vpack.c.b16 %v267, %v263
      %v284 = vpack.c.b16 %v268, %v264
      %v285 = vpack.c.b16 %v269, %v265
      %v286 = vpack.c.b16 %v270, %v270
      %v287 = vpack.c.b16 %v271, %v271
      %v288 = vpack.c.b16 %v272, %v272
      %v289 = vpack.c.b16 %v273, %v273
      %vm302 = vcmask 441344
      %v304 = vsel %vm302, %v225, 0
      %vm306 = vcmask 1042432
      %v308 = vsel %vm306, %v286, 0
      %v311 = vsel %vm306, %v287, 0
      %v314 = vsel %vm306, %v288, 0
      %v317 = vsel %vm306, %v289, 0
      %319 = vmatpush.bf16.msra.mxu0 0
      %320 = vmatpush.bf16.msra.mxu0 0
      %321 = vmatpush.bf16.msra.mxu0 0
      %322 = vmatpush.bf16.msra.mxu0 0
      %323 = vmatpush.bf16.msra.mxu0 %v308
      %324 = vmatpush.bf16.msra.mxu0 %v282
      %325 = vmatpush.bf16.msra.mxu0 %v278
      %326 = vmatpush.bf16.msra.mxu0 %v274
      %327 = vmatmul.bf16.gmra.mxu0 %v304
      %v328 = vpop.f32.mrf.mxu0
      %v329 = vadd.f32 %v230, %v328
      %v330 = vpop.f32.mrf.mxu0
      %331 = vdwg.mxu0
      %332 = vmatpush.bf16.msra.mxu0 0
      %333 = vmatpush.bf16.msra.mxu0 0
      %334 = vmatpush.bf16.msra.mxu0 0
      %335 = vmatpush.bf16.msra.mxu0 0
      %336 = vmatpush.bf16.msra.mxu0 %v311
      %337 = vmatpush.bf16.msra.mxu0 %v283
      %338 = vmatpush.bf16.msra.mxu0 %v279
      %339 = vmatpush.bf16.msra.mxu0 %v275
      %340 = vmatmul.bf16.gmra.mxu0 %v304
      %v341 = vpop.f32.mrf.mxu0
      %v342 = vadd.f32 %v230, %v341
      %v343 = vpop.f32.mrf.mxu0
      %344 = vdwg.mxu0
      %345 = vmatpush.bf16.msra.mxu0 0
      %346 = vmatpush.bf16.msra.mxu0 0
      %347 = vmatpush.bf16.msra.mxu0 0
      %348 = vmatpush.bf16.msra.mxu0 0
      %349 = vmatpush.bf16.msra.mxu0 %v314
      %350 = vmatpush.bf16.msra.mxu0 %v284
      %351 = vmatpush.bf16.msra.mxu0 %v280
      %352 = vmatpush.bf16.msra.mxu0 %v276
      %353 = vmatmul.bf16.gmra.mxu0 %v304
      %v354 = vpop.f32.mrf.mxu0
      %v355 = vadd.f32 %v230, %v354
      %v356 = vpop.f32.mrf.mxu0
      %357 = vdwg.mxu0
      %358 = vmatpush.bf16.msra.mxu0 0
      %359 = vmatpush.bf16.msra.mxu0 0
      %360 = vmatpush.bf16.msra.mxu0 0
      %361 = vmatpush.bf16.msra.mxu0 0
      %362 = vmatpush.bf16.msra.mxu0 %v317
      %363 = vmatpush.bf16.msra.mxu0 %v285
      %364 = vmatpush.bf16.msra.mxu0 %v281
      %365 = vmatpush.bf16.msra.mxu0 %v277
      %366 = vmatmul.bf16.gmra.mxu0 %v304
      %v367 = vpop.f32.mrf.mxu0
      %v368 = vadd.f32 %v230, %v367
      %v369 = vpop.f32.mrf.mxu0
      %370 = vdwg.mxu0
      %vm371 = vcmask 1043456
      %v372 = vsel %vm371, %v329, 0.0
      %v373 = vsel %vm371, %v342, 0.0
      %v374 = vadd.f32 %v372, %v373
      %v375 = vsel %vm371, %v355, 0.0
      %v376 = vadd.f32 %v374, %v375
      %v377 = vsel %vm371, %v368, 0.0
      %v378 = vadd.f32 %v376, %v377
      %379 = vadd.xlane.f32.xlu0 %v378
      %v380 = vpop.xlane.xlu0 %379
      %v381 = vrcp.pop 512.0
      %v382 = vmul.f32 512.0, %v381
      %v383 = vsub.f32 1.0, %v382
      %v384 = vmul.f32 %v381, %v383
      %v385 = vadd.f32 %v381, %v384
      %vm386 = vweird.f32 %v381
      %v387 = vsel %vm386, %v381, %v385
      %v388 = vmul.f32 %v380, %v387
      %v389 = vsub.f32 %v329, %v388
      %v390 = vsub.f32 %v342, %v388
      %v391 = vsub.f32 %v355, %v388
      %v392 = vsub.f32 %v368, %v388
      %v393 = vmul.f32 %v389, %v389
      %v394 = vmul.f32 %v390, %v390
      %v395 = vmul.f32 %v391, %v391
      %v396 = vmul.f32 %v392, %v392
      %v397 = vsel %vm371, %v393, 0.0
      %v398 = vsel %vm371, %v394, 0.0
      %v399 = vadd.f32 %v397, %v398
      %v400 = vsel %vm371, %v395, 0.0
      %v401 = vadd.f32 %v399, %v400
      %v402 = vsel %vm371, %v396, 0.0
      %v403 = vadd.f32 %v401, %v402
      %404 = vadd.xlane.f32.xlu0 %v403
      %v405 = vpop.xlane.xlu0 %404
      %v406 = vmul.f32 %v405, %v387
      %v407 = vadd.f32 %v406, 1e-05
      %v408 = vrsqrt.pop %v407
      %v409 = vmul.f32 %v408, %v407
      %v410 = vmul.f32 %v409, %v408
      %v411 = vmul.f32 0.5, %v410
      %v412 = vsub.f32 1.5, %v411
      %v413 = vmul.f32 %v408, %v412
      %vm414 = vweird.f32 %v407
      %vm415 = vweird.f32 %v408
      %vm416 = vmor %vm414, %vm415
      %v417 = vsel %vm416, %v408, %v413
      %v418 = vmul.f32 %v389, %v417
      %v419 = vmul.f32 %v390, %v417
      %v420 = vmul.f32 %v391, %v417
      %v421 = vmul.f32 %v392, %v417
      %vm422 = vcmp.ge.f32.partialorder %v418, 0.0
      %vm423 = vcmp.ge.f32.partialorder %v419, 0.0
      %vm424 = vcmp.ge.f32.partialorder %v420, 0.0
      %vm425 = vcmp.ge.f32.partialorder %v421, 0.0
      %v426 = vmul.f32 %v418, 0.01
      %v427 = vmul.f32 %v419, 0.01
      %v428 = vmul.f32 %v420, 0.01
      %v429 = vmul.f32 %v421, 0.01
      %v430 = vsel %vm422, %v418, %v426
      %v431 = vsel %vm423, %v419, %v427
      %v432 = vsel %vm424, %v420, %v428
      %v433 = vsel %vm425, %v421, %v429
      %v434 = vpack.c.bf16 %v431, %v430
      %v435 = vpack.c.bf16 %v433, %v432
      %v438 = vrot.slane %v434, 2
      %v439 = vrot.slane %v435, 4
      %v440 = vrot.slane %v435, 6
      %vm441 = vcmask 1041408
      %v444 = vsel %vm441, %v434, %v438
      %vm445 = vcmask 1045508
      %v448 = vsel %vm445, %v439, %v440
      %v449 = vsel %vm371, %v444, %v448
      %451 = vst [vmem:[%s208] sm:$0xff] %v449
      %s452 = smul.u32 4, %s19
      %p453 = scmp.lt.s32.totalorder %s18, 1
      %s454 = scalar_select %p453, %s18, 1
      %p455 = scmp.lt.s32.totalorder %s452, 3
      %s456 = scalar_select %p455, %s452, 3
      %s457 = smul.addr %s454, 4
      %s458 = sadd.s32 %s456, %s457
      %s459 = smul.addr %s458, 2
      %s460 = scalar_lea.vmem %s3, %s459
      // Predicated region
      $region33: #{forward.13} parent=31 // pred_check
        %p461 = pneg %p116
      $region34: #{forward.13} parent=31 // pred_check_branch
        %463 = sbr.rel (%p461) target = $region36
      $region35: #{forward.13} parent=31 // pred_region
        %s464 = smul.u32 4, %s19
      $region36: #{forward.13} parent=31 // pred_fallthru
        _
    $region32: #{forward.13} parent=5 // pred_fallthru
      _
    %p465 = scmp.le.s32.totalorder 2, %s9
    // Predicated region
    $region37: #{forward.13} parent=5 // pred_check
      %p466 = pneg %p465
    $region38: #{forward.13} parent=5 // pred_check_branch
      %468 = sbr.rel (%p466) target = $region40
    $region39: #{forward.13} parent=5 // pred_region
      %s469 = ssub.s32 %s9, 2
      // Predicated region
      $region41: #{forward.13} parent=39 // pred_check
        %p470 = pneg %p122
      $region42: #{forward.13} parent=39 // pred_check_branch
        %472 = sbr.rel (%p470) target = $region44
      $region43: #{forward.13} parent=39 // pred_region
        %s473 = smul.u32 4, %s21
        %p474 = scmp.lt.s32.totalorder %s20, 1
        %s475 = scalar_select %p474, %s20, 1
        %p476 = scmp.lt.s32.totalorder %s473, 3
        %s477 = scalar_select %p476, %s473, 3
        %s478 = smul.addr %s475, 4
        %s479 = sadd.s32 %s477, %s478
        %s480 = smul.addr %s479, 2
        %s481 = scalar_lea.vmem %s3, %s480
      $region44: #{forward.13} parent=39 // pred_fallthru
        _
    $region40: #{forward.13} parent=5 // pred_fallthru
      _
  $region6: #{forward.13} parent=0 // loop_footer
    %s13 = sadd.s32 1, %s9
  $region7: #{forward.13} parent=0 // loop_footer_branch
    %8 = sbr.rel target = $region3
  $region8: #{forward.13} parent=0 // loop_exit
    _

// kernel: forward.14
$region0: #{forward.14}
  #allocation0 [shape = 'u32[]', space=smem, size = 0x4, offset = 0x4, fixed_abs, tag = 'smem constant byte address 0x4 - core index']
  #allocation1 [shape = 'u32[72,128]{1,0:T(1,128)}', space=vmem, size = 0x9000, scoped, tag = 'internal scratch']
  %s0 = inlined_call_operand.vmem [shape: bf16[2,108,512], index: 0, kind: input, shape index: {}]
  %s1 = inlined_call_operand.vmem [shape: bf16[4,108], index: 1, kind: input, shape index: {}]
  %s2 = inlined_call_operand.vmem [shape: f32[4,1], index: 2, kind: input, shape index: {}]
  %s3 = inlined_call_operand.vmem [shape: bf16[2,4,512], index: 3, kind: output, shape index: {}]
  %s4 = sld [smem:[#allocation0]]
  $region45: #{forward.14} parent=0
    _
  %s6 = ssub.s32 1, %s4
  %s7 = scalar_select 0, %s6, %s4
  loop: start=0, step=1, limit=4
  $region2: #{forward.14} parent=0 // loop_pre_header
    _
  $region3: #{forward.14} parent=0 // loop_header
    %s9 = sphi 0, %s13
    %p10 = scmp.ge.s32.totalorder %s9, 4
    %s16 = sphi 0, %s28
    %s17 = sphi 0, %s24
    %s18 = sphi 0, %s16
    %s19 = sphi 0, %s17
    %s20 = sphi 0, %s18
    %s21 = sphi 0, %s19
    %s33 = sphi 0, %s35
    %s36 = sphi 0, %s33
    %s37 = sphi 0, %s36
    %s53 = sphi 0, %s37
    %s57 = sphi 0, %s57
    %s59 = sphi 0, %s57
    %s60 = sphi 0, %s59
    %s74 = sphi 0, %s60
    %s78 = sphi 0, %s78
    %s80 = sphi 0, %s78
    %s81 = sphi 0, %s80
    %s95 = sphi 0, %s81
    %s103 = sphi 0, %s105
    %s106 = sphi 0, %s103
    %s107 = sphi 0, %s106
    %s123 = sphi 0, %s107
  $region4: #{forward.14} parent=0 // loop_header_branch
    %12 = sbr.rel (%p10) target = $region8
  $region5: #{forward.14} parent=0 // loop_body
    %s14 = ssub.s32 %s9, 1
    %s15 = ssub.s32 %s9, 2
    %s22 = sadd.s32 1, %s17
    %p23 = scmp.ge.s32.totalorder %s22, 1
    %s24 = scalar_select %p23, 0, %s22
    %s25 = sadd.s32 1, %s16
    %s26 = scalar_select %p23, %s25, %s16
    %p27 = scmp.ge.s32.totalorder %s26, 2
    %s28 = scalar_select %p27, 0, %s26
    %s29 = ssub.s32 %s16, %s28
    %s30 = ssub.s32 %s17, %s24
    %s31 = sor.u32 %s29, %s30
    %p32 = scmp.eq.s32.totalorder %s31, 0
    %s34 = sadd.s32 %s33, 1
    %s35 = scalar_select %p32, %s33, %s34
    %p38 = pneg %p32
    %p39 = scmp.eq.s32.totalorder %s9, 1
    %p40 = por %p38, %p39
    %p41 = scmp.ne.s32.totalorder %s33, %s36
    %p42 = scmp.eq.s32.totalorder %s9, 0
    %p43 = por %p41, %p42
    %p44 = scmp.ne.s32.totalorder %s33, %s36
    %p45 = scmp.eq.s32.totalorder %s14, 1
    %p46 = por %p44, %p45
    %p47 = scmp.ne.s32.totalorder %s36, %s37
    %p48 = scmp.eq.s32.totalorder %s14, 0
    %p49 = por %p47, %p48
    %p50 = scmp.ne.s32.totalorder %s36, %s37
    %p51 = scmp.eq.s32.totalorder %s15, 1
    %p52 = por %p50, %p51
    %p54 = scmp.ne.s32.totalorder %s37, %s53
    %p55 = scmp.eq.s32.totalorder %s15, 0
    %p56 = por %p54, %p55
    %s58 = sadd.s32 %s57, 1
    %p61 = scmp.eq.s32.totalorder %s9, 1
    %p62 = scmp.ne.s32.totalorder %s57, %s59
    %p63 = scmp.eq.s32.totalorder %s9, 0
    %p64 = por %p62, %p63
    %p65 = scmp.ne.s32.totalorder %s57, %s59
    %p66 = scmp.eq.s32.totalorder %s14, 1
    %p67 = por %p65, %p66
    %p68 = scmp.ne.s32.totalorder %s59, %s60
    %p69 = scmp.eq.s32.totalorder %s14, 0
    %p70 = por %p68, %p69
    %p71 = scmp.ne.s32.totalorder %s59, %s60
    %p72 = scmp.eq.s32.totalorder %s15, 1
    %p73 = por %p71, %p72
    %p75 = scmp.ne.s32.totalorder %s60, %s74
    %p76 = scmp.eq.s32.totalorder %s15, 0
    %p77 = por %p75, %p76
    %s79 = sadd.s32 %s78, 1
    %p82 = scmp.eq.s32.totalorder %s9, 1
    %p83 = scmp.ne.s32.totalorder %s78, %s80
    %p84 = scmp.eq.s32.totalorder %s9, 0
    %p85 = por %p83, %p84
    %p86 = scmp.ne.s32.totalorder %s78, %s80
    %p87 = scmp.eq.s32.totalorder %s14, 1
    %p88 = por %p86, %p87
    %p89 = scmp.ne.s32.totalorder %s80, %s81
    %p90 = scmp.eq.s32.totalorder %s14, 0
    %p91 = por %p89, %p90
    %p92 = scmp.ne.s32.totalorder %s80, %s81
    %p93 = scmp.eq.s32.totalorder %s15, 1
    %p94 = por %p92, %p93
    %p96 = scmp.ne.s32.totalorder %s81, %s95
    %p97 = scmp.eq.s32.totalorder %s15, 0
    %p98 = por %p96, %p97
    %s99 = ssub.s32 %s16, %s28
    %s100 = ssub.s32 %s17, %s24
    %s101 = sor.u32 %s99, %s100
    %p102 = scmp.eq.s32.totalorder %s101, 0
    %s104 = sadd.s32 %s103, 1
    %s105 = scalar_select %p102, %s103, %s104
    %p108 = pneg %p102
    %p109 = scmp.eq.s32.totalorder %s9, 1
    %p110 = por %p108, %p109
    %p111 = scmp.ne.s32.totalorder %s103, %s106
    %p112 = scmp.eq.s32.totalorder %s9, 0
    %p113 = por %p111, %p112
    %p114 = scmp.ne.s32.totalorder %s103, %s106
    %p115 = scmp.eq.s32.totalorder %s14, 1
    %p116 = por %p114, %p115
    %p117 = scmp.ne.s32.totalorder %s106, %s107
    %p118 = scmp.eq.s32.totalorder %s14, 0
    %p119 = por %p117, %p118
    %p120 = scmp.ne.s32.totalorder %s106, %s107
    %p121 = scmp.eq.s32.totalorder %s15, 1
    %p122 = por %p120, %p121
    %p124 = scmp.ne.s32.totalorder %s107, %s123
    %p125 = scmp.eq.s32.totalorder %s15, 0
    %p126 = por %p124, %p125
    %p127 = scmp.le.s32.totalorder 1, %s9
    %p128 = scmp.lt.s32.totalorder %s9, 3
    %p129 = pnand %p127, %p128
    %p130 = pneg %p129
    // Predicated region
    $region9: #{forward.14} parent=5 // pred_check
      _
    $region10: #{forward.14} parent=5 // pred_check_branch
      %132 = sbr.rel (%p129) target = $region12
    $region11: #{forward.14} parent=5 // pred_region
      %s133 = ssub.s32 %s9, 1
      // Predicated region
      $region13: #{forward.14} parent=11 // pred_check
        %p134 = pneg %p70
      $region14: #{forward.14} parent=11 // pred_check_branch
        %136 = sbr.rel (%p134) target = $region16
      $region15: #{forward.14} parent=11 // pred_region
        _
      $region16: #{forward.14} parent=11 // pred_fallthru
        _
      // Predicated region
      $region17: #{forward.14} parent=11 // pred_check
        %p137 = pneg %p91
      $region18: #{forward.14} parent=11 // pred_check_branch
        %139 = sbr.rel (%p137) target = $region20
      $region19: #{forward.14} parent=11 // pred_region
        _
      $region20: #{forward.14} parent=11 // pred_fallthru
        _
    $region12: #{forward.14} parent=5 // pred_fallthru
      _
    %p140 = scmp.lt.s32.totalorder %s9, 2
    // Predicated region
    $region21: #{forward.14} parent=5 // pred_check
      %p141 = pneg %p140
    $region22: #{forward.14} parent=5 // pred_check_branch
      %143 = sbr.rel (%p141) target = $region24
    $region23: #{forward.14} parent=5 // pred_region
      // Predicated region
      $region25: #{forward.14} parent=23 // pred_check
        %p144 = pneg %p43
      $region26: #{forward.14} parent=23 // pred_check_branch
        %146 = sbr.rel (%p144) target = $region28
      $region27: #{forward.14} parent=23 // pred_region
        %s147 = smul.u32 4, %s17
        %p148 = scmp.lt.s32.totalorder %s16, 1
        %s149 = scalar_select %p148, %s16, 1
        %p150 = scmp.lt.s32.totalorder %s147, 3
        %s151 = scalar_select %p150, %s147, 3
        %s152 = smul.addr %s149, 56
        %s153 = sadd.s32 %s151, %s152
        %s154 = smul.addr %s153, 4
        %s155 = scalar_lea.vmem %s0, %s154
        %s156 = smul.u32 4, %s17
      $region28: #{forward.14} parent=23 // pred_fallthru
        _
    $region24: #{forward.14} parent=5 // pred_fallthru
      _
    %p157 = scmp.le.s32.totalorder 1, %s9
    %p158 = scmp.lt.s32.totalorder %s9, 3
    %p159 = pnand %p157, %p158
    %p160 = pneg %p159
    // Predicated region
    $region29: #{forward.14} parent=5 // pred_check
      _
    $region30: #{forward.14} parent=5 // pred_check_branch
      %162 = sbr.rel (%p159) target = $region32
    $region31: #{forward.14} parent=5 // pred_region
      %s163 = ssub.s32 %s9, 1
      %s164 = smul.u32 4, %s19
      %p165 = scmp.lt.s32.totalorder %s18, 1
      %s166 = scalar_select %p165, %s18, 1
      %p167 = scmp.lt.s32.totalorder %s164, 3
      %s168 = scalar_select %p167, %s164, 3
      %s169 = smul.addr %s166, 56
      %s170 = sadd.s32 %s168, %s169
      %s171 = smul.addr %s170, 4
      %s172 = scalar_lea.vmem %s0, %s171
      %p173 = pneg %p49
      %p174 = pneg %p46
      %p175 = pneg %p70
      %p176 = pneg %p67
      %p177 = pneg %p91
      %p178 = pneg %p88
      %p179 = pneg %p119
      %p180 = pneg %p116
      %s181 = smul.u32 4, %s19
      %p182 = scmp.lt.s32.totalorder %s18, 1
      %s183 = scalar_select %p182, %s18, 1
      %p184 = scmp.lt.s32.totalorder %s181, 3
      %s185 = scalar_select %p184, %s181, 3
      %s186 = smul.addr %s183, 4
      %s187 = sadd.s32 %s185, %s186
      %s188 = smul.addr %s187, 2
      %s189 = scalar_lea.vmem %s3, %s188
      %s190 = smul.u32 4, %s19
      %p191 = scmp.lt.s32.totalorder %s18, 1
      %s192 = scalar_select %p191, %s18, 1
      %p193 = scmp.lt.s32.totalorder %s190, 3
      %s194 = scalar_select %p193, %s190, 3
      %s195 = smul.addr %s192, 56
      %s196 = sadd.s32 %s194, %s195
      %s197 = smul.addr %s196, 4
      %s198 = scalar_lea.vmem %s0, %s197
      %s199 = smul.u32 4, %s19
      %s200 = smul.u32 4, %s19
      %p201 = scmp.lt.s32.totalorder %s18, 1
      %s202 = scalar_select %p201, %s18, 1
      %p203 = scmp.lt.s32.totalorder %s200, 3
      %s204 = scalar_select %p203, %s200, 3
      %s205 = smul.addr %s202, 4
      %s206 = sadd.s32 %s204, %s205
      %s207 = smul.addr %s206, 2
      %s208 = scalar_lea.vmem %s3, %s207
      %s209 = smul.u32 4, %s19
      %v211 = vld [vmem:[%s198] sm:$0xff]
      %v212 = vld [vmem:[%s198 + $0x8] sm:$0xff]
      %v213 = vld [vmem:[%s198 + $0x10] sm:$0xff]
      %v214 = vld [vmem:[%s198 + $0x18] sm:$0xff]
      %v215 = vld [vmem:[%s198 + $0x20] sm:$0xff]
      %v216 = vld [vmem:[%s198 + $0x28] sm:$0xff]
      %v217 = vld [vmem:[%s198 + $0x30] sm:$0xff]
      %v218 = vld [vmem:[%s198 + $0x38] sm:$0xff]
      %v219 = vld [vmem:[%s198 + $0x40] sm:$0xff]
      %v220 = vld [vmem:[%s198 + $0x48] sm:$0xff]
      %v221 = vld [vmem:[%s198 + $0x50] sm:$0xff]
      %v222 = vld [vmem:[%s198 + $0x58] sm:$0xff]
      %v223 = vld [vmem:[%s198 + $0x60] sm:$0xff]
      %v224 = vld [vmem:[%s198 + $0x68] sm:$0xff]
      %v225 = vld [vmem:[%s198 + $0x70] sm:$0xff]
      %v226 = vld [vmem:[%s198 + $0x78] sm:$0xff]
      %v227 = vld [vmem:[%s198 + $0x80] sm:$0xff]
      %v228 = vld [vmem:[%s198 + $0x88] sm:$0xff]
      %v229 = vld [vmem:[%s198 + $0x90] sm:$0xff]
      %v230 = vld [vmem:[%s198 + $0x98] sm:$0xff]
      %v231 = vld [vmem:[%s198 + $0xa0] sm:$0xff]
      %v232 = vld [vmem:[%s198 + $0xa8] sm:$0xff]
      %v233 = vld [vmem:[%s198 + $0xb0] sm:$0xff]
      %v234 = vld [vmem:[%s198 + $0xb8] sm:$0xff]
      %v235 = vld [vmem:[%s198 + $0xc0] sm:$0xff]
      %v236 = vld [vmem:[%s198 + $0xc8] sm:$0xff]
      %v237 = vld [vmem:[%s198 + $0xd0] sm:$0x33]
      %v238 = vld [vmem:[%s198 + $0xd8] sm:$0x33]
      %v239 = vld [vmem:[%s1] sm:$0x3]
      %v240 = vld [vmem:[%s2] sm:$0xf]
      %242 = vset.pattern.permute.xlu0 0
      %243 = vperm.xlu0 %242, %v240
      %v244 = vpop.permute.xlu0 %243
      %v274 = vunpack.c.l.b16 %v211
      %v275 = vunpack.c.h.b16 %v211
      %v276 = vunpack.c.l.b16 %v212
      %v277 = vunpack.c.h.b16 %v212
      %v278 = vunpack.c.l.b16 %v213
      %v279 = vunpack.c.h.b16 %v213
      %v280 = vunpack.c.l.b16 %v214
      %v281 = vunpack.c.h.b16 %v214
      %v282 = vunpack.c.l.b16 %v215
      %v283 = vunpack.c.h.b16 %v215
      %v284 = vunpack.c.l.b16 %v216
      %v285 = vunpack.c.h.b16 %v216
      %v286 = vunpack.c.l.b16 %v217
      %v287 = vunpack.c.h.b16 %v217
      %v288 = vunpack.c.l.b16 %v218
      %v289 = vunpack.c.h.b16 %v218
      %v290 = vunpack.c.l.b16 %v219
      %v291 = vunpack.c.h.b16 %v219
      %v292 = vunpack.c.l.b16 %v220
      %v293 = vunpack.c.h.b16 %v220
      %v294 = vunpack.c.l.b16 %v221
      %v295 = vunpack.c.h.b16 %v221
      %v296 = vunpack.c.l.b16 %v222
      %v297 = vunpack.c.h.b16 %v222
      %v298 = vunpack.c.l.b16 %v223
      %v299 = vunpack.c.h.b16 %v223
      %v300 = vunpack.c.l.b16 %v224
      %v301 = vunpack.c.h.b16 %v224
      %v302 = vunpack.c.l.b16 %v225
      %v303 = vunpack.c.h.b16 %v225
      %v304 = vunpack.c.l.b16 %v226
      %v305 = vunpack.c.h.b16 %v226
      %v306 = vunpack.c.l.b16 %v227
      %v307 = vunpack.c.h.b16 %v227
      %v308 = vunpack.c.l.b16 %v228
      %v309 = vunpack.c.h.b16 %v228
      %v310 = vunpack.c.l.b16 %v229
      %v311 = vunpack.c.h.b16 %v229
      %v312 = vunpack.c.l.b16 %v230
      %v313 = vunpack.c.h.b16 %v230
      %v314 = vunpack.c.l.b16 %v231
      %v315 = vunpack.c.h.b16 %v231
      %v316 = vunpack.c.l.b16 %v232
      %v317 = vunpack.c.h.b16 %v232
      %v318 = vunpack.c.l.b16 %v233
      %v319 = vunpack.c.h.b16 %v233
      %v320 = vunpack.c.l.b16 %v234
      %v321 = vunpack.c.h.b16 %v234
      %v322 = vunpack.c.l.b16 %v235
      %v323 = vunpack.c.h.b16 %v235
      %v324 = vunpack.c.l.b16 %v236
      %v325 = vunpack.c.h.b16 %v236
      %v326 = vunpack.c.l.b16 %v237
      %v327 = vunpack.c.h.b16 %v237
      %v328 = vunpack.c.l.b16 %v238
      %v329 = vunpack.c.h.b16 %v238
      %v330 = vpack.c.b16 %v278, %v274
      %v331 = vpack.c.b16 %v279, %v275
      %v332 = vpack.c.b16 %v280, %v276
      %v333 = vpack.c.b16 %v281, %v277
      %v334 = vpack.c.b16 %v286, %v282
      %v335 = vpack.c.b16 %v287, %v283
      %v336 = vpack.c.b16 %v288, %v284
      %v337 = vpack.c.b16 %v289, %v285
      %v338 = vpack.c.b16 %v294, %v290
      %v339 = vpack.c.b16 %v295, %v291
      %v340 = vpack.c.b16 %v296, %v292
      %v341 = vpack.c.b16 %v297, %v293
      %v342 = vpack.c.b16 %v302, %v298
      %v343 = vpack.c.b16 %v303, %v299
      %v344 = vpack.c.b16 %v304, %v300
      %v345 = vpack.c.b16 %v305, %v301
      %v346 = vpack.c.b16 %v310, %v306
      %v347 = vpack.c.b16 %v311, %v307
      %v348 = vpack.c.b16 %v312, %v308
      %v349 = vpack.c.b16 %v313, %v309
      %v350 = vpack.c.b16 %v318, %v314
      %v351 = vpack.c.b16 %v319, %v315
      %v352 = vpack.c.b16 %v320, %v316
      %v353 = vpack.c.b16 %v321, %v317
      %v354 = vpack.c.b16 %v326, %v322
      %v355 = vpack.c.b16 %v327, %v323
      %v356 = vpack.c.b16 %v328, %v324
      %v357 = vpack.c.b16 %v329, %v325
      %vm382 = vcmask 883712
      %v384 = vsel %vm382, %v239, 0
      %vm386 = vcmask 1045504
      %v388 = vsel %vm386, %v354, 0
      %v391 = vsel %vm386, %v355, 0
      %v394 = vsel %vm386, %v356, 0
      %v397 = vsel %vm386, %v357, 0
      %399 = vmatpush.bf16.msra.mxu0 0
      %400 = vmatpush.bf16.msra.mxu0 %v388
      %401 = vmatpush.bf16.msra.mxu0 %v350
      %402 = vmatpush.bf16.msra.mxu0 %v346
      %403 = vmatpush.bf16.msra.mxu0 %v342
      %404 = vmatpush.bf16.msra.mxu0 %v338
      %405 = vmatpush.bf16.msra.mxu0 %v334
      %406 = vmatpush.bf16.msra.mxu0 %v330
      %407 = vmatmul.bf16.gmra.mxu0 %v384
      %v408 = vpop.f32.mrf.mxu0
      %v409 = vadd.f32 %v244, %v408
      %v410 = vpop.f32.mrf.mxu0
      %411 = vdwg.mxu0
      %412 = vmatpush.bf16.msra.mxu0 0
      %413 = vmatpush.bf16.msra.mxu0 %v391
      %414 = vmatpush.bf16.msra.mxu0 %v351
      %415 = vmatpush.bf16.msra.mxu0 %v347
      %416 = vmatpush.bf16.msra.mxu0 %v343
      %417 = vmatpush.bf16.msra.mxu0 %v339
      %418 = vmatpush.bf16.msra.mxu0 %v335
      %419 = vmatpush.bf16.msra.mxu0 %v331
      %420 = vmatmul.bf16.gmra.mxu0 %v384
      %v421 = vpop.f32.mrf.mxu0
      %v422 = vadd.f32 %v244, %v421
      %v423 = vpop.f32.mrf.mxu0
      %424 = vdwg.mxu0
      %425 = vmatpush.bf16.msra.mxu0 0
      %426 = vmatpush.bf16.msra.mxu0 %v394
      %427 = vmatpush.bf16.msra.mxu0 %v352
      %428 = vmatpush.bf16.msra.mxu0 %v348
      %429 = vmatpush.bf16.msra.mxu0 %v344
      %430 = vmatpush.bf16.msra.mxu0 %v340
      %431 = vmatpush.bf16.msra.mxu0 %v336
      %432 = vmatpush.bf16.msra.mxu0 %v332
      %433 = vmatmul.bf16.gmra.mxu0 %v384
      %v434 = vpop.f32.mrf.mxu0
      %v435 = vadd.f32 %v244, %v434
      %v436 = vpop.f32.mrf.mxu0
      %437 = vdwg.mxu0
      %438 = vmatpush.bf16.msra.mxu0 0
      %439 = vmatpush.bf16.msra.mxu0 %v397
      %440 = vmatpush.bf16.msra.mxu0 %v353
      %441 = vmatpush.bf16.msra.mxu0 %v349
      %442 = vmatpush.bf16.msra.mxu0 %v345
      %443 = vmatpush.bf16.msra.mxu0 %v341
      %444 = vmatpush.bf16.msra.mxu0 %v337
      %445 = vmatpush.bf16.msra.mxu0 %v333
      %446 = vmatmul.bf16.gmra.mxu0 %v384
      %v447 = vpop.f32.mrf.mxu0
      %v448 = vadd.f32 %v244, %v447
      %v449 = vpop.f32.mrf.mxu0
      %450 = vdwg.mxu0
      %vm451 = vcmask 1043456
      %v452 = vsel %vm451, %v409, 0.0
      %v453 = vsel %vm451, %v422, 0.0
      %v454 = vadd.f32 %v452, %v453
      %v455 = vsel %vm451, %v435, 0.0
      %v456 = vadd.f32 %v454, %v455
      %v457 = vsel %vm451, %v448, 0.0
      %v458 = vadd.f32 %v456, %v457
      %459 = vadd.xlane.f32.xlu0 %v458
      %v460 = vpop.xlane.xlu0 %459
      %v461 = vrcp.pop 512.0
      %v462 = vmul.f32 512.0, %v461
      %v463 = vsub.f32 1.0, %v462
      %v464 = vmul.f32 %v461, %v463
      %v465 = vadd.f32 %v461, %v464
      %vm466 = vweird.f32 %v461
      %v467 = vsel %vm466, %v461, %v465
      %v468 = vmul.f32 %v460, %v467
      %v469 = vsub.f32 %v409, %v468
      %v470 = vsub.f32 %v422, %v468
      %v471 = vsub.f32 %v435, %v468
      %v472 = vsub.f32 %v448, %v468
      %v473 = vmul.f32 %v469, %v469
      %v474 = vmul.f32 %v470, %v470
      %v475 = vmul.f32 %v471, %v471
      %v476 = vmul.f32 %v472, %v472
      %v477 = vsel %vm451, %v473, 0.0
      %v478 = vsel %vm451, %v474, 0.0
      %v479 = vadd.f32 %v477, %v478
      %v480 = vsel %vm451, %v475, 0.0
      %v481 = vadd.f32 %v479, %v480
      %v482 = vsel %vm451, %v476, 0.0
      %v483 = vadd.f32 %v481, %v482
      %484 = vadd.xlane.f32.xlu0 %v483
      %v485 = vpop.xlane.xlu0 %484
      %v486 = vmul.f32 %v485, %v467
      %v487 = vadd.f32 %v486, 1e-05
      %v488 = vrsqrt.pop %v487
      %v489 = vmul.f32 %v488, %v487
      %v490 = vmul.f32 %v489, %v488
      %v491 = vmul.f32 0.5, %v490
      %v492 = vsub.f32 1.5, %v491
      %v493 = vmul.f32 %v488, %v492
      %vm494 = vweird.f32 %v487
      %vm495 = vweird.f32 %v488
      %vm496 = vmor %vm494, %vm495
      %v497 = vsel %vm496, %v488, %v493
      %v498 = vmul.f32 %v469, %v497
      %v499 = vmul.f32 %v470, %v497
      %v500 = vmul.f32 %v471, %v497
      %v501 = vmul.f32 %v472, %v497
      %vm502 = vcmp.ge.f32.partialorder %v498, 0.0
      %vm503 = vcmp.ge.f32.partialorder %v499, 0.0
      %vm504 = vcmp.ge.f32.partialorder %v500, 0.0
      %vm505 = vcmp.ge.f32.partialorder %v501, 0.0
      %v506 = vmul.f32 %v498, 0.01
      %v507 = vmul.f32 %v499, 0.01
      %v508 = vmul.f32 %v500, 0.01
      %v509 = vmul.f32 %v501, 0.01
      %v510 = vsel %vm502, %v498, %v506
      %v511 = vsel %vm503, %v499, %v507
      %v512 = vsel %vm504, %v500, %v508
      %v513 = vsel %vm505, %v501, %v509
      %v514 = vpack.c.bf16 %v511, %v510
      %v515 = vpack.c.bf16 %v513, %v512
      %v518 = vrot.slane %v514, 2
      %v519 = vrot.slane %v515, 4
      %v520 = vrot.slane %v515, 6
      %vm521 = vcmask 1041408
      %v524 = vsel %vm521, %v514, %v518
      %vm525 = vcmask 1045508
      %v528 = vsel %vm525, %v519, %v520
      %v529 = vsel %vm451, %v524, %v528
      %531 = vst [vmem:[%s208] sm:$0xff] %v529
      %s532 = smul.u32 4, %s19
      %p533 = scmp.lt.s32.totalorder %s18, 1
      %s534 = scalar_select %p533, %s18, 1
      %p535 = scmp.lt.s32.totalorder %s532, 3
      %s536 = scalar_select %p535, %s532, 3
      %s537 = smul.addr %s534, 4
      %s538 = sadd.s32 %s536, %s537
      %s539 = smul.addr %s538, 2
      %s540 = scalar_lea.vmem %s3, %s539
      // Predicated region
      $region33: #{forward.14} parent=31 // pred_check
        %p541 = pneg %p116
      $region34: #{forward.14} parent=31 // pred_check_branch
        %543 = sbr.rel (%p541) target = $region36
      $region35: #{forward.14} parent=31 // pred_region
        %s544 = smul.u32 4, %s19
      $region36: #{forward.14} parent=31 // pred_fallthru
        _
    $region32: #{forward.14} parent=5 // pred_fallthru
      _
    %p545 = scmp.le.s32.totalorder 2, %s9
    // Predicated region
    $region37: #{forward.14} parent=5 // pred_check
      %p546 = pneg %p545
    $region38: #{forward.14} parent=5 // pred_check_branch
      %548 = sbr.rel (%p546) target = $region40
    $region39: #{forward.14} parent=5 // pred_region
      %s549 = ssub.s32 %s9, 2
      // Predicated region
      $region41: #{forward.14} parent=39 // pred_check
        %p550 = pneg %p122
      $region42: #{forward.14} parent=39 // pred_check_branch
        %552 = sbr.rel (%p550) target = $region44
      $region43: #{forward.14} parent=39 // pred_region
        %s553 = smul.u32 4, %s21
        %p554 = scmp.lt.s32.totalorder %s20, 1
        %s555 = scalar_select %p554, %s20, 1
        %p556 = scmp.lt.s32.totalorder %s553, 3
        %s557 = scalar_select %p556, %s553, 3
        %s558 = smul.addr %s555, 4
        %s559 = sadd.s32 %s557, %s558
        %s560 = smul.addr %s559, 2
        %s561 = scalar_lea.vmem %s3, %s560
      $region44: #{forward.14} parent=39 // pred_fallthru
        _
    $region40: #{forward.14} parent=5 // pred_fallthru
      _
  $region6: #{forward.14} parent=0 // loop_footer
    %s13 = sadd.s32 1, %s9
  $region7: #{forward.14} parent=0 // loop_footer_branch
    %8 = sbr.rel target = $region3
  $region8: #{forward.14} parent=0 // loop_exit
    _

// kernel: forward.15
$region0: #{forward.15}
  #allocation0 [shape = 'u32[]', space=smem, size = 0x4, offset = 0x4, fixed_abs, tag = 'smem constant byte address 0x4 - core index']
  #allocation1 [shape = 'u32[72,128]{1,0:T(1,128)}', space=vmem, size = 0x9000, scoped, tag = 'internal scratch']
  %s0 = inlined_call_operand.vmem [shape: bf16[2,108,64], index: 0, kind: input, shape index: {}]
  %s1 = inlined_call_operand.vmem [shape: bf16[8,108], index: 1, kind: input, shape index: {}]
  %s2 = inlined_call_operand.vmem [shape: f32[8,1], index: 2, kind: input, shape index: {}]
  %s3 = inlined_call_operand.vmem [shape: bf16[2,8,64], index: 3, kind: output, shape index: {}]
  %s4 = sld [smem:[#allocation0]]
  $region45: #{forward.15} parent=0
    _
  %s6 = ssub.s32 1, %s4
  %s7 = scalar_select 0, %s6, %s4
  loop: start=0, step=1, limit=4
  $region2: #{forward.15} parent=0 // loop_pre_header
    _
  $region3: #{forward.15} parent=0 // loop_header
    %s9 = sphi 0, %s13
    %p10 = scmp.ge.s32.totalorder %s9, 4
    %s16 = sphi 0, %s28
    %s17 = sphi 0, %s24
    %s18 = sphi 0, %s16
    %s19 = sphi 0, %s17
    %s20 = sphi 0, %s18
    %s21 = sphi 0, %s19
    %s33 = sphi 0, %s35
    %s36 = sphi 0, %s33
    %s37 = sphi 0, %s36
    %s53 = sphi 0, %s37
    %s57 = sphi 0, %s57
    %s59 = sphi 0, %s57
    %s60 = sphi 0, %s59
    %s74 = sphi 0, %s60
    %s78 = sphi 0, %s78
    %s80 = sphi 0, %s78
    %s81 = sphi 0, %s80
    %s95 = sphi 0, %s81
    %s103 = sphi 0, %s105
    %s106 = sphi 0, %s103
    %s107 = sphi 0, %s106
    %s123 = sphi 0, %s107
  $region4: #{forward.15} parent=0 // loop_header_branch
    %12 = sbr.rel (%p10) target = $region8
  $region5: #{forward.15} parent=0 // loop_body
    %s14 = ssub.s32 %s9, 1
    %s15 = ssub.s32 %s9, 2
    %s22 = sadd.s32 1, %s17
    %p23 = scmp.ge.s32.totalorder %s22, 1
    %s24 = scalar_select %p23, 0, %s22
    %s25 = sadd.s32 1, %s16
    %s26 = scalar_select %p23, %s25, %s16
    %p27 = scmp.ge.s32.totalorder %s26, 2
    %s28 = scalar_select %p27, 0, %s26
    %s29 = ssub.s32 %s16, %s28
    %s30 = ssub.s32 %s17, %s24
    %s31 = sor.u32 %s29, %s30
    %p32 = scmp.eq.s32.totalorder %s31, 0
    %s34 = sadd.s32 %s33, 1
    %s35 = scalar_select %p32, %s33, %s34
    %p38 = pneg %p32
    %p39 = scmp.eq.s32.totalorder %s9, 1
    %p40 = por %p38, %p39
    %p41 = scmp.ne.s32.totalorder %s33, %s36
    %p42 = scmp.eq.s32.totalorder %s9, 0
    %p43 = por %p41, %p42
    %p44 = scmp.ne.s32.totalorder %s33, %s36
    %p45 = scmp.eq.s32.totalorder %s14, 1
    %p46 = por %p44, %p45
    %p47 = scmp.ne.s32.totalorder %s36, %s37
    %p48 = scmp.eq.s32.totalorder %s14, 0
    %p49 = por %p47, %p48
    %p50 = scmp.ne.s32.totalorder %s36, %s37
    %p51 = scmp.eq.s32.totalorder %s15, 1
    %p52 = por %p50, %p51
    %p54 = scmp.ne.s32.totalorder %s37, %s53
    %p55 = scmp.eq.s32.totalorder %s15, 0
    %p56 = por %p54, %p55
    %s58 = sadd.s32 %s57, 1
    %p61 = scmp.eq.s32.totalorder %s9, 1
    %p62 = scmp.ne.s32.totalorder %s57, %s59
    %p63 = scmp.eq.s32.totalorder %s9, 0
    %p64 = por %p62, %p63
    %p65 = scmp.ne.s32.totalorder %s57, %s59
    %p66 = scmp.eq.s32.totalorder %s14, 1
    %p67 = por %p65, %p66
    %p68 = scmp.ne.s32.totalorder %s59, %s60
    %p69 = scmp.eq.s32.totalorder %s14, 0
    %p70 = por %p68, %p69
    %p71 = scmp.ne.s32.totalorder %s59, %s60
    %p72 = scmp.eq.s32.totalorder %s15, 1
    %p73 = por %p71, %p72
    %p75 = scmp.ne.s32.totalorder %s60, %s74
    %p76 = scmp.eq.s32.totalorder %s15, 0
    %p77 = por %p75, %p76
    %s79 = sadd.s32 %s78, 1
    %p82 = scmp.eq.s32.totalorder %s9, 1
    %p83 = scmp.ne.s32.totalorder %s78, %s80
    %p84 = scmp.eq.s32.totalorder %s9, 0
    %p85 = por %p83, %p84
    %p86 = scmp.ne.s32.totalorder %s78, %s80
    %p87 = scmp.eq.s32.totalorder %s14, 1
    %p88 = por %p86, %p87
    %p89 = scmp.ne.s32.totalorder %s80, %s81
    %p90 = scmp.eq.s32.totalorder %s14, 0
    %p91 = por %p89, %p90
    %p92 = scmp.ne.s32.totalorder %s80, %s81
    %p93 = scmp.eq.s32.totalorder %s15, 1
    %p94 = por %p92, %p93
    %p96 = scmp.ne.s32.totalorder %s81, %s95
    %p97 = scmp.eq.s32.totalorder %s15, 0
    %p98 = por %p96, %p97
    %s99 = ssub.s32 %s16, %s28
    %s100 = ssub.s32 %s17, %s24
    %s101 = sor.u32 %s99, %s100
    %p102 = scmp.eq.s32.totalorder %s101, 0
    %s104 = sadd.s32 %s103, 1
    %s105 = scalar_select %p102, %s103, %s104
    %p108 = pneg %p102
    %p109 = scmp.eq.s32.totalorder %s9, 1
    %p110 = por %p108, %p109
    %p111 = scmp.ne.s32.totalorder %s103, %s106
    %p112 = scmp.eq.s32.totalorder %s9, 0
    %p113 = por %p111, %p112
    %p114 = scmp.ne.s32.totalorder %s103, %s106
    %p115 = scmp.eq.s32.totalorder %s14, 1
    %p116 = por %p114, %p115
    %p117 = scmp.ne.s32.totalorder %s106, %s107
    %p118 = scmp.eq.s32.totalorder %s14, 0
    %p119 = por %p117, %p118
    %p120 = scmp.ne.s32.totalorder %s106, %s107
    %p121 = scmp.eq.s32.totalorder %s15, 1
    %p122 = por %p120, %p121
    %p124 = scmp.ne.s32.totalorder %s107, %s123
    %p125 = scmp.eq.s32.totalorder %s15, 0
    %p126 = por %p124, %p125
    %p127 = scmp.le.s32.totalorder 1, %s9
    %p128 = scmp.lt.s32.totalorder %s9, 3
    %p129 = pnand %p127, %p128
    %p130 = pneg %p129
    // Predicated region
    $region9: #{forward.15} parent=5 // pred_check
      _
    $region10: #{forward.15} parent=5 // pred_check_branch
      %132 = sbr.rel (%p129) target = $region12
    $region11: #{forward.15} parent=5 // pred_region
      %s133 = ssub.s32 %s9, 1
      // Predicated region
      $region13: #{forward.15} parent=11 // pred_check
        %p134 = pneg %p70
      $region14: #{forward.15} parent=11 // pred_check_branch
        %136 = sbr.rel (%p134) target = $region16
      $region15: #{forward.15} parent=11 // pred_region
        _
      $region16: #{forward.15} parent=11 // pred_fallthru
        _
      // Predicated region
      $region17: #{forward.15} parent=11 // pred_check
        %p137 = pneg %p91
      $region18: #{forward.15} parent=11 // pred_check_branch
        %139 = sbr.rel (%p137) target = $region20
      $region19: #{forward.15} parent=11 // pred_region
        _
      $region20: #{forward.15} parent=11 // pred_fallthru
        _
    $region12: #{forward.15} parent=5 // pred_fallthru
      _
    %p140 = scmp.lt.s32.totalorder %s9, 2
    // Predicated region
    $region21: #{forward.15} parent=5 // pred_check
      %p141 = pneg %p140
    $region22: #{forward.15} parent=5 // pred_check_branch
      %143 = sbr.rel (%p141) target = $region24
    $region23: #{forward.15} parent=5 // pred_region
      // Predicated region
      $region25: #{forward.15} parent=23 // pred_check
        %p144 = pneg %p43
      $region26: #{forward.15} parent=23 // pred_check_branch
        %146 = sbr.rel (%p144) target = $region28
      $region27: #{forward.15} parent=23 // pred_region
        %p147 = scmp.lt.s32.totalorder %s16, 1
        %s148 = scalar_select %p147, %s16, 1
        %p149 = scmp.lt.s32.totalorder %s17, 0
        %s150 = scalar_select %p149, %s17, 0
        %s151 = smul.addr %s148, 14
        %s152 = sadd.s32 %s150, %s151
        %s153 = smul.addr %s152, 4
        %s154 = scalar_lea.vmem %s0, %s153
      $region28: #{forward.15} parent=23 // pred_fallthru
        _
    $region24: #{forward.15} parent=5 // pred_fallthru
      _
    %p155 = scmp.le.s32.totalorder 1, %s9
    %p156 = scmp.lt.s32.totalorder %s9, 3
    %p157 = pnand %p155, %p156
    %p158 = pneg %p157
    // Predicated region
    $region29: #{forward.15} parent=5 // pred_check
      _
    $region30: #{forward.15} parent=5 // pred_check_branch
      %160 = sbr.rel (%p157) target = $region32
    $region31: #{forward.15} parent=5 // pred_region
      %s161 = ssub.s32 %s9, 1
      %p162 = scmp.lt.s32.totalorder %s18, 1
      %s163 = scalar_select %p162, %s18, 1
      %p164 = scmp.lt.s32.totalorder %s19, 0
      %s165 = scalar_select %p164, %s19, 0
      %s166 = smul.addr %s163, 14
      %s167 = sadd.s32 %s165, %s166
      %s168 = smul.addr %s167, 4
      %s169 = scalar_lea.vmem %s0, %s168
      %p170 = pneg %p49
      %p171 = pneg %p46
      %p172 = pneg %p70
      %p173 = pneg %p67
      %p174 = pneg %p91
      %p175 = pneg %p88
      %p176 = pneg %p119
      %p177 = pneg %p116
      %p178 = scmp.lt.s32.totalorder %s18, 1
      %s179 = scalar_select %p178, %s18, 1
      %p180 = scmp.lt.s32.totalorder %s19, 0
      %s181 = scalar_select %p180, %s19, 0
      %s182 = sadd.s32 %s181, %s179
      %s183 = smul.addr %s182, 4
      %s184 = scalar_lea.vmem %s3, %s183
      %p185 = scmp.lt.s32.totalorder %s18, 1
      %s186 = scalar_select %p185, %s18, 1
      %p187 = scmp.lt.s32.totalorder %s19, 0
      %s188 = scalar_select %p187, %s19, 0
      %s189 = smul.addr %s186, 14
      %s190 = sadd.s32 %s188, %s189
      %s191 = smul.addr %s190, 4
      %s192 = scalar_lea.vmem %s0, %s191
      %p193 = scmp.lt.s32.totalorder %s18, 1
      %s194 = scalar_select %p193, %s18, 1
      %p195 = scmp.lt.s32.totalorder %s19, 0
      %s196 = scalar_select %p195, %s19, 0
      %s197 = sadd.s32 %s196, %s194
      %s198 = smul.addr %s197, 4
      %s199 = scalar_lea.vmem %s3, %s198
      %v201 = vld [vmem:[%s192] sm:$0xf]
      %v202 = vld [vmem:[%s192 + $0x4] sm:$0xf]
      %v203 = vld [vmem:[%s192 + $0x8] sm:$0xf]
      %v204 = vld [vmem:[%s192 + $0xc] sm:$0xf]
      %v205 = vld [vmem:[%s192 + $0x10] sm:$0xf]
      %v206 = vld [vmem:[%s192 + $0x14] sm:$0xf]
      %v207 = vld [vmem:[%s192 + $0x18] sm:$0xf]
      %v208 = vld [vmem:[%s192 + $0x1c] sm:$0xf]
      %v209 = vld [vmem:[%s192 + $0x20] sm:$0xf]
      %v210 = vld [vmem:[%s192 + $0x24] sm:$0xf]
      %v211 = vld [vmem:[%s192 + $0x28] sm:$0xf]
      %v212 = vld [vmem:[%s192 + $0x2c] sm:$0xf]
      %v213 = vld [vmem:[%s192 + $0x30] sm:$0xf]
      %v214 = vld [vmem:[%s192 + $0x34] sm:$0x3]
      %v215 = vld [vmem:[%s1] sm:$0xf]
      %v216 = vld [vmem:[%s2] sm:$0xff]
      %218 = vset.pattern.permute.xlu0 0
      %219 = vperm.xlu0 %218, %v216
      %v220 = vpop.permute.xlu0 %219
      %v236 = vunpack.c.l.b16 %v201
      %v237 = vunpack.c.l.b16 %v202
      %v238 = vunpack.c.l.b16 %v203
      %v239 = vunpack.c.l.b16 %v204
      %v240 = vunpack.c.l.b16 %v205
      %v241 = vunpack.c.l.b16 %v206
      %v242 = vunpack.c.l.b16 %v207
      %v243 = vunpack.c.l.b16 %v208
      %v244 = vunpack.c.l.b16 %v209
      %v245 = vunpack.c.l.b16 %v210
      %v246 = vunpack.c.l.b16 %v211
      %v247 = vunpack.c.l.b16 %v212
      %v248 = vunpack.c.l.b16 %v213
      %v249 = vunpack.c.l.b16 %v214
      %v250 = vpack.c.b16 %v237, %v236
      %v251 = vpack.c.b16 %v239, %v238
      %v252 = vpack.c.b16 %v241, %v240
      %v253 = vpack.c.b16 %v243, %v242
      %v254 = vpack.c.b16 %v245, %v244
      %v255 = vpack.c.b16 %v247, %v246
      %v256 = vpack.c.b16 %v249, %v248
      %vm263 = vcmask 883712
      %v265 = vsel %vm263, %v215, 0
      %vm267 = vcmask 1045504
      %v269 = vsel %vm267, %v256, 0
      %271 = vmatpush.bf16.msra.mxu0 0
      %272 = vmatpush.bf16.msra.mxu0 %v269
      %273 = vmatpush.bf16.msra.mxu0 %v255
      %274 = vmatpush.bf16.msra.mxu0 %v254
      %275 = vmatpush.bf16.msra.mxu0 %v253
      %276 = vmatpush.bf16.msra.mxu0 %v252
      %277 = vmatpush.bf16.msra.mxu0 %v251
      %278 = vmatpush.bf16.msra.mxu0 %v250
      %279 = vmatmul.bf16.gmra.mxu0 %v265
      %v280 = vpop.f32.mrf.mxu0
      %v281 = vadd.f32 %v220, %v280
      %v282 = vpop.f32.mrf.mxu0
      %283 = vdwg.mxu0
      %vm284 = vcmask 523264
      %v285 = vsel %vm284, %v281, 0.0
      %286 = vadd.xlane.f32.xlu0 %v285
      %v287 = vpop.xlane.xlu0 %286
      %v288 = vrcp.pop 64.0
      %v289 = vmul.f32 64.0, %v288
      %v290 = vsub.f32 1.0, %v289
      %v291 = vmul.f32 %v288, %v290
      %v292 = vadd.f32 %v288, %v291
      %vm293 = vweird.f32 %v288
      %v294 = vsel %vm293, %v288, %v292
      %v295 = vmul.f32 %v287, %v294
      %v296 = vsub.f32 %v281, %v295
      %v297 = vmul.f32 %v296, %v296
      %v298 = vsel %vm284, %v297, 0.0
      %299 = vadd.xlane.f32.xlu0 %v298
      %v300 = vpop.xlane.xlu0 %299
      %v301 = vmul.f32 %v300, %v294
      %v302 = vadd.f32 %v301, 1e-05
      %v303 = vrsqrt.pop %v302
      %v304 = vmul.f32 %v303, %v302
      %v305 = vmul.f32 %v304, %v303
      %v306 = vmul.f32 0.5, %v305
      %v307 = vsub.f32 1.5, %v306
      %v308 = vmul.f32 %v303, %v307
      %vm309 = vweird.f32 %v302
      %vm310 = vweird.f32 %v303
      %vm311 = vmor %vm309, %vm310
      %v312 = vsel %vm311, %v303, %v308
      %v313 = vmul.f32 %v296, %v312
      %vm314 = vcmp.ge.f32.partialorder %v313, 0.0
      %v315 = vmul.f32 %v313, 0.01
      %v316 = vsel %vm314, %v313, %v315
      %v317 = vpack.c.bf16 %v316, %v316
      %vm318 = vcmask 519168
      %319 = vst.msk [vmem:[%s199] sm:$0xf] %vm318, %v317
      %p320 = scmp.lt.s32.totalorder %s18, 1
      %s321 = scalar_select %p320, %s18, 1
      %p322 = scmp.lt.s32.totalorder %s19, 0
      %s323 = scalar_select %p322, %s19, 0
      %s324 = sadd.s32 %s323, %s321
      %s325 = smul.addr %s324, 4
      %s326 = scalar_lea.vmem %s3, %s325
      // Predicated region
      $region33: #{forward.15} parent=31 // pred_check
        %p327 = pneg %p116
      $region34: #{forward.15} parent=31 // pred_check_branch
        %329 = sbr.rel (%p327) target = $region36
      $region35: #{forward.15} parent=31 // pred_region
        _
      $region36: #{forward.15} parent=31 // pred_fallthru
        _
    $region32: #{forward.15} parent=5 // pred_fallthru
      _
    %p330 = scmp.le.s32.totalorder 2, %s9
    // Predicated region
    $region37: #{forward.15} parent=5 // pred_check
      %p331 = pneg %p330
    $region38: #{forward.15} parent=5 // pred_check_branch
      %333 = sbr.rel (%p331) target = $region40
    $region39: #{forward.15} parent=5 // pred_region
      %s334 = ssub.s32 %s9, 2
      // Predicated region
      $region41: #{forward.15} parent=39 // pred_check
        %p335 = pneg %p122
      $region42: #{forward.15} parent=39 // pred_check_branch
        %337 = sbr.rel (%p335) target = $region44
      $region43: #{forward.15} parent=39 // pred_region
        %p338 = scmp.lt.s32.totalorder %s20, 1
        %s339 = scalar_select %p338, %s20, 1
        %p340 = scmp.lt.s32.totalorder %s21, 0
        %s341 = scalar_select %p340, %s21, 0
        %s342 = sadd.s32 %s341, %s339
        %s343 = smul.addr %s342, 4
        %s344 = scalar_lea.vmem %s3, %s343
      $region44: #{forward.15} parent=39 // pred_fallthru
        _
    $region40: #{forward.15} parent=5 // pred_fallthru
      _
  $region6: #{forward.15} parent=0 // loop_footer
    %s13 = sadd.s32 1, %s9
  $region7: #{forward.15} parent=0 // loop_footer_branch
    %8 = sbr.rel target = $region3
  $region8: #{forward.15} parent=0 // loop_exit
    _

// kernel: forward.16
$region0: #{forward.16}
  #allocation0 [shape = 'u32[]', space=smem, size = 0x4, offset = 0x4, fixed_abs, tag = 'smem constant byte address 0x4 - core index']
  #allocation1 [shape = 'u32[72,128]{1,0:T(1,128)}', space=vmem, size = 0x9000, scoped, tag = 'internal scratch']
  %s0 = inlined_call_operand.vmem [shape: bf16[2,216,64], index: 0, kind: input, shape index: {}]
  %s1 = inlined_call_operand.vmem [shape: bf16[8,216], index: 1, kind: input, shape index: {}]
  %s2 = inlined_call_operand.vmem [shape: f32[8,1], index: 2, kind: input, shape index: {}]
  %s3 = inlined_call_operand.vmem [shape: bf16[2,8,64], index: 3, kind: output, shape index: {}]
  %s4 = sld [smem:[#allocation0]]
  $region45: #{forward.16} parent=0
    _
  %s6 = ssub.s32 1, %s4
  %s7 = scalar_select 0, %s6, %s4
  loop: start=0, step=1, limit=4
  $region2: #{forward.16} parent=0 // loop_pre_header
    _
  $region3: #{forward.16} parent=0 // loop_header
    %s9 = sphi 0, %s13
    %p10 = scmp.ge.s32.totalorder %s9, 4
    %s16 = sphi 0, %s28
    %s17 = sphi 0, %s24
    %s18 = sphi 0, %s16
    %s19 = sphi 0, %s17
    %s20 = sphi 0, %s18
    %s21 = sphi 0, %s19
    %s33 = sphi 0, %s35
    %s36 = sphi 0, %s33
    %s37 = sphi 0, %s36
    %s53 = sphi 0, %s37
    %s57 = sphi 0, %s57
    %s59 = sphi 0, %s57
    %s60 = sphi 0, %s59
    %s74 = sphi 0, %s60
    %s78 = sphi 0, %s78
    %s80 = sphi 0, %s78
    %s81 = sphi 0, %s80
    %s95 = sphi 0, %s81
    %s103 = sphi 0, %s105
    %s106 = sphi 0, %s103
    %s107 = sphi 0, %s106
    %s123 = sphi 0, %s107
  $region4: #{forward.16} parent=0 // loop_header_branch
    %12 = sbr.rel (%p10) target = $region8
  $region5: #{forward.16} parent=0 // loop_body
    %s14 = ssub.s32 %s9, 1
    %s15 = ssub.s32 %s9, 2
    %s22 = sadd.s32 1, %s17
    %p23 = scmp.ge.s32.totalorder %s22, 1
    %s24 = scalar_select %p23, 0, %s22
    %s25 = sadd.s32 1, %s16
    %s26 = scalar_select %p23, %s25, %s16
    %p27 = scmp.ge.s32.totalorder %s26, 2
    %s28 = scalar_select %p27, 0, %s26
    %s29 = ssub.s32 %s16, %s28
    %s30 = ssub.s32 %s17, %s24
    %s31 = sor.u32 %s29, %s30
    %p32 = scmp.eq.s32.totalorder %s31, 0
    %s34 = sadd.s32 %s33, 1
    %s35 = scalar_select %p32, %s33, %s34
    %p38 = pneg %p32
    %p39 = scmp.eq.s32.totalorder %s9, 1
    %p40 = por %p38, %p39
    %p41 = scmp.ne.s32.totalorder %s33, %s36
    %p42 = scmp.eq.s32.totalorder %s9, 0
    %p43 = por %p41, %p42
    %p44 = scmp.ne.s32.totalorder %s33, %s36
    %p45 = scmp.eq.s32.totalorder %s14, 1
    %p46 = por %p44, %p45
    %p47 = scmp.ne.s32.totalorder %s36, %s37
    %p48 = scmp.eq.s32.totalorder %s14, 0
    %p49 = por %p47, %p48
    %p50 = scmp.ne.s32.totalorder %s36, %s37
    %p51 = scmp.eq.s32.totalorder %s15, 1
    %p52 = por %p50, %p51
    %p54 = scmp.ne.s32.totalorder %s37, %s53
    %p55 = scmp.eq.s32.totalorder %s15, 0
    %p56 = por %p54, %p55
    %s58 = sadd.s32 %s57, 1
    %p61 = scmp.eq.s32.totalorder %s9, 1
    %p62 = scmp.ne.s32.totalorder %s57, %s59
    %p63 = scmp.eq.s32.totalorder %s9, 0
    %p64 = por %p62, %p63
    %p65 = scmp.ne.s32.totalorder %s57, %s59
    %p66 = scmp.eq.s32.totalorder %s14, 1
    %p67 = por %p65, %p66
    %p68 = scmp.ne.s32.totalorder %s59, %s60
    %p69 = scmp.eq.s32.totalorder %s14, 0
    %p70 = por %p68, %p69
    %p71 = scmp.ne.s32.totalorder %s59, %s60
    %p72 = scmp.eq.s32.totalorder %s15, 1
    %p73 = por %p71, %p72
    %p75 = scmp.ne.s32.totalorder %s60, %s74
    %p76 = scmp.eq.s32.totalorder %s15, 0
    %p77 = por %p75, %p76
    %s79 = sadd.s32 %s78, 1
    %p82 = scmp.eq.s32.totalorder %s9, 1
    %p83 = scmp.ne.s32.totalorder %s78, %s80
    %p84 = scmp.eq.s32.totalorder %s9, 0
    %p85 = por %p83, %p84
    %p86 = scmp.ne.s32.totalorder %s78, %s80
    %p87 = scmp.eq.s32.totalorder %s14, 1
    %p88 = por %p86, %p87
    %p89 = scmp.ne.s32.totalorder %s80, %s81
    %p90 = scmp.eq.s32.totalorder %s14, 0
    %p91 = por %p89, %p90
    %p92 = scmp.ne.s32.totalorder %s80, %s81
    %p93 = scmp.eq.s32.totalorder %s15, 1
    %p94 = por %p92, %p93
    %p96 = scmp.ne.s32.totalorder %s81, %s95
    %p97 = scmp.eq.s32.totalorder %s15, 0
    %p98 = por %p96, %p97
    %s99 = ssub.s32 %s16, %s28
    %s100 = ssub.s32 %s17, %s24
    %s101 = sor.u32 %s99, %s100
    %p102 = scmp.eq.s32.totalorder %s101, 0
    %s104 = sadd.s32 %s103, 1
    %s105 = scalar_select %p102, %s103, %s104
    %p108 = pneg %p102
    %p109 = scmp.eq.s32.totalorder %s9, 1
    %p110 = por %p108, %p109
    %p111 = scmp.ne.s32.totalorder %s103, %s106
    %p112 = scmp.eq.s32.totalorder %s9, 0
    %p113 = por %p111, %p112
    %p114 = scmp.ne.s32.totalorder %s103, %s106
    %p115 = scmp.eq.s32.totalorder %s14, 1
    %p116 = por %p114, %p115
    %p117 = scmp.ne.s32.totalorder %s106, %s107
    %p118 = scmp.eq.s32.totalorder %s14, 0
    %p119 = por %p117, %p118
    %p120 = scmp.ne.s32.totalorder %s106, %s107
    %p121 = scmp.eq.s32.totalorder %s15, 1
    %p122 = por %p120, %p121
    %p124 = scmp.ne.s32.totalorder %s107, %s123
    %p125 = scmp.eq.s32.totalorder %s15, 0
    %p126 = por %p124, %p125
    %p127 = scmp.le.s32.totalorder 1, %s9
    %p128 = scmp.lt.s32.totalorder %s9, 3
    %p129 = pnand %p127, %p128
    %p130 = pneg %p129
    // Predicated region
    $region9: #{forward.16} parent=5 // pred_check
      _
    $region10: #{forward.16} parent=5 // pred_check_branch
      %132 = sbr.rel (%p129) target = $region12
    $region11: #{forward.16} parent=5 // pred_region
      %s133 = ssub.s32 %s9, 1
      // Predicated region
      $region13: #{forward.16} parent=11 // pred_check
        %p134 = pneg %p70
      $region14: #{forward.16} parent=11 // pred_check_branch
        %136 = sbr.rel (%p134) target = $region16
      $region15: #{forward.16} parent=11 // pred_region
        _
      $region16: #{forward.16} parent=11 // pred_fallthru
        _
      // Predicated region
      $region17: #{forward.16} parent=11 // pred_check
        %p137 = pneg %p91
      $region18: #{forward.16} parent=11 // pred_check_branch
        %139 = sbr.rel (%p137) target = $region20
      $region19: #{forward.16} parent=11 // pred_region
        _
      $region20: #{forward.16} parent=11 // pred_fallthru
        _
    $region12: #{forward.16} parent=5 // pred_fallthru
      _
    %p140 = scmp.lt.s32.totalorder %s9, 2
    // Predicated region
    $region21: #{forward.16} parent=5 // pred_check
      %p141 = pneg %p140
    $region22: #{forward.16} parent=5 // pred_check_branch
      %143 = sbr.rel (%p141) target = $region24
    $region23: #{forward.16} parent=5 // pred_region
      // Predicated region
      $region25: #{forward.16} parent=23 // pred_check
        %p144 = pneg %p43
      $region26: #{forward.16} parent=23 // pred_check_branch
        %146 = sbr.rel (%p144) target = $region28
      $region27: #{forward.16} parent=23 // pred_region
        %p147 = scmp.lt.s32.totalorder %s16, 1
        %s148 = scalar_select %p147, %s16, 1
        %p149 = scmp.lt.s32.totalorder %s17, 0
        %s150 = scalar_select %p149, %s17, 0
        %s151 = smul.addr %s148, 27
        %s152 = sadd.s32 %s150, %s151
        %s153 = smul.addr %s152, 4
        %s154 = scalar_lea.vmem %s0, %s153
      $region28: #{forward.16} parent=23 // pred_fallthru
        _
    $region24: #{forward.16} parent=5 // pred_fallthru
      _
    %p155 = scmp.le.s32.totalorder 1, %s9
    %p156 = scmp.lt.s32.totalorder %s9, 3
    %p157 = pnand %p155, %p156
    %p158 = pneg %p157
    // Predicated region
    $region29: #{forward.16} parent=5 // pred_check
      _
    $region30: #{forward.16} parent=5 // pred_check_branch
      %160 = sbr.rel (%p157) target = $region32
    $region31: #{forward.16} parent=5 // pred_region
      %s161 = ssub.s32 %s9, 1
      %p162 = scmp.lt.s32.totalorder %s18, 1
      %s163 = scalar_select %p162, %s18, 1
      %p164 = scmp.lt.s32.totalorder %s19, 0
      %s165 = scalar_select %p164, %s19, 0
      %s166 = smul.addr %s163, 27
      %s167 = sadd.s32 %s165, %s166
      %s168 = smul.addr %s167, 4
      %s169 = scalar_lea.vmem %s0, %s168
      %p170 = pneg %p49
      %p171 = pneg %p46
      %p172 = pneg %p70
      %p173 = pneg %p67
      %p174 = pneg %p91
      %p175 = pneg %p88
      %p176 = pneg %p119
      %p177 = pneg %p116
      %p178 = scmp.lt.s32.totalorder %s18, 1
      %s179 = scalar_select %p178, %s18, 1
      %p180 = scmp.lt.s32.totalorder %s19, 0
      %s181 = scalar_select %p180, %s19, 0
      %s182 = sadd.s32 %s181, %s179
      %s183 = smul.addr %s182, 4
      %s184 = scalar_lea.vmem %s3, %s183
      %p185 = scmp.lt.s32.totalorder %s18, 1
      %s186 = scalar_select %p185, %s18, 1
      %p187 = scmp.lt.s32.totalorder %s19, 0
      %s188 = scalar_select %p187, %s19, 0
      %s189 = smul.addr %s186, 27
      %s190 = sadd.s32 %s188, %s189
      %s191 = smul.addr %s190, 4
      %s192 = scalar_lea.vmem %s0, %s191
      %p193 = scmp.lt.s32.totalorder %s18, 1
      %s194 = scalar_select %p193, %s18, 1
      %p195 = scmp.lt.s32.totalorder %s19, 0
      %s196 = scalar_select %p195, %s19, 0
      %s197 = sadd.s32 %s196, %s194
      %s198 = smul.addr %s197, 4
      %s199 = scalar_lea.vmem %s3, %s198
      %v201 = vld [vmem:[%s192] sm:$0xf]
      %v202 = vld [vmem:[%s192 + $0x4] sm:$0xf]
      %v203 = vld [vmem:[%s192 + $0x8] sm:$0xf]
      %v204 = vld [vmem:[%s192 + $0xc] sm:$0xf]
      %v205 = vld [vmem:[%s192 + $0x10] sm:$0xf]
      %v206 = vld [vmem:[%s192 + $0x14] sm:$0xf]
      %v207 = vld [vmem:[%s192 + $0x18] sm:$0xf]
      %v208 = vld [vmem:[%s192 + $0x1c] sm:$0xf]
      %v209 = vld [vmem:[%s192 + $0x20] sm:$0xf]
      %v210 = vld [vmem:[%s192 + $0x24] sm:$0xf]
      %v211 = vld [vmem:[%s192 + $0x28] sm:$0xf]
      %v212 = vld [vmem:[%s192 + $0x2c] sm:$0xf]
      %v213 = vld [vmem:[%s192 + $0x30] sm:$0xf]
      %v214 = vld [vmem:[%s192 + $0x34] sm:$0xf]
      %v215 = vld [vmem:[%s192 + $0x38] sm:$0xf]
      %v216 = vld [vmem:[%s192 + $0x3c] sm:$0xf]
      %v217 = vld [vmem:[%s192 + $0x40] sm:$0xf]
      %v218 = vld [vmem:[%s192 + $0x44] sm:$0xf]
      %v219 = vld [vmem:[%s192 + $0x48] sm:$0xf]
      %v220 = vld [vmem:[%s192 + $0x4c] sm:$0xf]
      %v221 = vld [vmem:[%s192 + $0x50] sm:$0xf]
      %v222 = vld [vmem:[%s192 + $0x54] sm:$0xf]
      %v223 = vld [vmem:[%s192 + $0x58] sm:$0xf]
      %v224 = vld [vmem:[%s192 + $0x5c] sm:$0xf]
      %v225 = vld [vmem:[%s192 + $0x60] sm:$0xf]
      %v226 = vld [vmem:[%s192 + $0x64] sm:$0xf]
      %v227 = vld [vmem:[%s192 + $0x68] sm:$0xf]
      %v228 = vld [vmem:[%s1] sm:$0xff]
      %v229 = vld [vmem:[%s2] sm:$0xff]
      %231 = vset.pattern.permute.xlu0 0
      %232 = vperm.xlu0 %231, %v229
      %v233 = vpop.permute.xlu0 %232
      %v236 = vunpack.c.l.b16 %v228
      %v237 = vunpack.c.h.b16 %v228
      %v238 = vpack.c.b16 %v236, %v236
      %v239 = vpack.c.b16 %v237, %v237
      %v268 = vunpack.c.l.b16 %v201
      %v269 = vunpack.c.l.b16 %v202
      %v270 = vunpack.c.l.b16 %v203
      %v271 = vunpack.c.l.b16 %v204
      %v272 = vunpack.c.l.b16 %v205
      %v273 = vunpack.c.l.b16 %v206
      %v274 = vunpack.c.l.b16 %v207
      %v275 = vunpack.c.l.b16 %v208
      %v276 = vunpack.c.l.b16 %v209
      %v277 = vunpack.c.l.b16 %v210
      %v278 = vunpack.c.l.b16 %v211
      %v279 = vunpack.c.l.b16 %v212
      %v280 = vunpack.c.l.b16 %v213
      %v281 = vunpack.c.l.b16 %v214
      %v282 = vunpack.c.l.b16 %v215
      %v283 = vunpack.c.l.b16 %v216
      %v284 = vunpack.c.l.b16 %v217
      %v285 = vunpack.c.l.b16 %v218
      %v286 = vunpack.c.l.b16 %v219
      %v287 = vunpack.c.l.b16 %v220
      %v288 = vunpack.c.l.b16 %v221
      %v289 = vunpack.c.l.b16 %v222
      %v290 = vunpack.c.l.b16 %v223
      %v291 = vunpack.c.l.b16 %v224
      %v292 = vunpack.c.l.b16 %v225
      %v293 = vunpack.c.l.b16 %v226
      %v294 = vunpack.c.l.b16 %v227
      %v295 = vpack.c.b16 %v269, %v268
      %v296 = vpack.c.b16 %v271, %v270
      %v297 = vpack.c.b16 %v273, %v272
      %v298 = vpack.c.b16 %v275, %v274
      %v299 = vpack.c.b16 %v277, %v276
      %v300 = vpack.c.b16 %v279, %v278
      %v301 = vpack.c.b16 %v281, %v280
      %v302 = vpack.c.b16 %v283, %v282
      %v303 = vpack.c.b16 %v285, %v284
      %v304 = vpack.c.b16 %v287, %v286
      %v305 = vpack.c.b16 %v289, %v288
      %v306 = vpack.c.b16 %v291, %v290
      %v307 = vpack.c.b16 %v293, %v292
      %v308 = vpack.c.b16 %v294, %v294
      %vm322 = vcmask 719872
      %v324 = vsel %vm322, %v239, 0
      %vm326 = vcmask 1043456
      %v328 = vsel %vm326, %v308, 0
      %330 = vmatpush.bf16.msra.mxu0 %v302
      %331 = vmatpush.bf16.msra.mxu0 %v301
      %332 = vmatpush.bf16.msra.mxu0 %v300
      %333 = vmatpush.bf16.msra.mxu0 %v299
      %334 = vmatpush.bf16.msra.mxu0 %v298
      %335 = vmatpush.bf16.msra.mxu0 %v297
      %336 = vmatpush.bf16.msra.mxu0 %v296
      %337 = vmatpush.bf16.msra.mxu0 %v295
      %338 = vmatmul.bf16.gmra.mxu0 %v238
      %v339 = vpop.f32.mrf.mxu0
      %v340 = vadd.f32 %v233, %v339
      %v341 = vpop.f32.mrf.mxu0
      %342 = vdwg.mxu0
      %343 = vmatpush.bf16.msra.mxu0 0
      %344 = vmatpush.bf16.msra.mxu0 0
      %345 = vmatpush.bf16.msra.mxu0 %v328
      %346 = vmatpush.bf16.msra.mxu0 %v307
      %347 = vmatpush.bf16.msra.mxu0 %v306
      %348 = vmatpush.bf16.msra.mxu0 %v305
      %349 = vmatpush.bf16.msra.mxu0 %v304
      %350 = vmatpush.bf16.msra.mxu0 %v303
      %351 = vmatmul.bf16.gmra.mxu0 %v324
      %v352 = vpop.f32.mrf.mxu0
      %v353 = vadd.f32 %v340, %v352
      %v354 = vpop.f32.mrf.mxu0
      %355 = vdwg.mxu0
      %vm356 = vcmask 523264
      %v357 = vsel %vm356, %v353, 0.0
      %358 = vadd.xlane.f32.xlu0 %v357
      %v359 = vpop.xlane.xlu0 %358
      %v360 = vrcp.pop 64.0
      %v361 = vmul.f32 64.0, %v360
      %v362 = vsub.f32 1.0, %v361
      %v363 = vmul.f32 %v360, %v362
      %v364 = vadd.f32 %v360, %v363
      %vm365 = vweird.f32 %v360
      %v366 = vsel %vm365, %v360, %v364
      %v367 = vmul.f32 %v359, %v366
      %v368 = vsub.f32 %v353, %v367
      %v369 = vmul.f32 %v368, %v368
      %v370 = vsel %vm356, %v369, 0.0
      %371 = vadd.xlane.f32.xlu0 %v370
      %v372 = vpop.xlane.xlu0 %371
      %v373 = vmul.f32 %v372, %v366
      %v374 = vadd.f32 %v373, 1e-05
      %v375 = vrsqrt.pop %v374
      %v376 = vmul.f32 %v375, %v374
      %v377 = vmul.f32 %v376, %v375
      %v378 = vmul.f32 0.5, %v377
      %v379 = vsub.f32 1.5, %v378
      %v380 = vmul.f32 %v375, %v379
      %vm381 = vweird.f32 %v374
      %vm382 = vweird.f32 %v375
      %vm383 = vmor %vm381, %vm382
      %v384 = vsel %vm383, %v375, %v380
      %v385 = vmul.f32 %v368, %v384
      %vm386 = vcmp.ge.f32.partialorder %v385, 0.0
      %v387 = vmul.f32 %v385, 0.01
      %v388 = vsel %vm386, %v385, %v387
      %v389 = vpack.c.bf16 %v388, %v388
      %vm390 = vcmask 519168
      %391 = vst.msk [vmem:[%s199] sm:$0xf] %vm390, %v389
      %p392 = scmp.lt.s32.totalorder %s18, 1
      %s393 = scalar_select %p392, %s18, 1
      %p394 = scmp.lt.s32.totalorder %s19, 0
      %s395 = scalar_select %p394, %s19, 0
      %s396 = sadd.s32 %s395, %s393
      %s397 = smul.addr %s396, 4
      %s398 = scalar_lea.vmem %s3, %s397
      // Predicated region
      $region33: #{forward.16} parent=31 // pred_check
        %p399 = pneg %p116
      $region34: #{forward.16} parent=31 // pred_check_branch
        %401 = sbr.rel (%p399) target = $region36
      $region35: #{forward.16} parent=31 // pred_region
        _
      $region36: #{forward.16} parent=31 // pred_fallthru
        _
    $region32: #{forward.16} parent=5 // pred_fallthru
      _
    %p402 = scmp.le.s32.totalorder 2, %s9
    // Predicated region
    $region37: #{forward.16} parent=5 // pred_check
      %p403 = pneg %p402
    $region38: #{forward.16} parent=5 // pred_check_branch
      %405 = sbr.rel (%p403) target = $region40
    $region39: #{forward.16} parent=5 // pred_region
      %s406 = ssub.s32 %s9, 2
      // Predicated region
      $region41: #{forward.16} parent=39 // pred_check
        %p407 = pneg %p122
      $region42: #{forward.16} parent=39 // pred_check_branch
        %409 = sbr.rel (%p407) target = $region44
      $region43: #{forward.16} parent=39 // pred_region
        %p410 = scmp.lt.s32.totalorder %s20, 1
        %s411 = scalar_select %p410, %s20, 1
        %p412 = scmp.lt.s32.totalorder %s21, 0
        %s413 = scalar_select %p412, %s21, 0
        %s414 = sadd.s32 %s413, %s411
        %s415 = smul.addr %s414, 4
        %s416 = scalar_lea.vmem %s3, %s415
      $region44: #{forward.16} parent=39 // pred_fallthru
        _
    $region40: #{forward.16} parent=5 // pred_fallthru
      _
  $region6: #{forward.16} parent=0 // loop_footer
    %s13 = sadd.s32 1, %s9
  $region7: #{forward.16} parent=0 // loop_footer_branch
    %8 = sbr.rel target = $region3
  $region8: #{forward.16} parent=0 // loop_exit
    _

// kernel: forward.17
$region0: #{forward.17}
  #allocation0 [shape = 'u32[]', space=smem, size = 0x4, offset = 0x4, fixed_abs, tag = 'smem constant byte address 0x4 - core index']
  #allocation1 [shape = 'u32[72,128]{1,0:T(1,128)}', space=vmem, size = 0x9000, scoped, tag = 'internal scratch']
  %s0 = inlined_call_operand.vmem [shape: bf16[2,216,8], index: 0, kind: input, shape index: {}]
  %s1 = inlined_call_operand.vmem [shape: bf16[16,216], index: 1, kind: input, shape index: {}]
  %s2 = inlined_call_operand.vmem [shape: f32[16,1], index: 2, kind: input, shape index: {}]
  %s3 = inlined_call_operand.vmem [shape: bf16[2,16,8], index: 3, kind: output, shape index: {}]
  %s4 = sld [smem:[#allocation0]]
  $region45: #{forward.17} parent=0
    _
  %s6 = ssub.s32 1, %s4
  %s7 = scalar_select 0, %s6, %s4
  loop: start=0, step=1, limit=4
  $region2: #{forward.17} parent=0 // loop_pre_header
    _
  $region3: #{forward.17} parent=0 // loop_header
    %s9 = sphi 0, %s13
    %p10 = scmp.ge.s32.totalorder %s9, 4
    %s16 = sphi 0, %s28
    %s17 = sphi 0, %s24
    %s18 = sphi 0, %s16
    %s19 = sphi 0, %s17
    %s20 = sphi 0, %s18
    %s21 = sphi 0, %s19
    %s33 = sphi 0, %s35
    %s36 = sphi 0, %s33
    %s37 = sphi 0, %s36
    %s53 = sphi 0, %s37
    %s57 = sphi 0, %s57
    %s59 = sphi 0, %s57
    %s60 = sphi 0, %s59
    %s74 = sphi 0, %s60
    %s78 = sphi 0, %s78
    %s80 = sphi 0, %s78
    %s81 = sphi 0, %s80
    %s95 = sphi 0, %s81
    %s103 = sphi 0, %s105
    %s106 = sphi 0, %s103
    %s107 = sphi 0, %s106
    %s123 = sphi 0, %s107
  $region4: #{forward.17} parent=0 // loop_header_branch
    %12 = sbr.rel (%p10) target = $region8
  $region5: #{forward.17} parent=0 // loop_body
    %s14 = ssub.s32 %s9, 1
    %s15 = ssub.s32 %s9, 2
    %s22 = sadd.s32 1, %s17
    %p23 = scmp.ge.s32.totalorder %s22, 1
    %s24 = scalar_select %p23, 0, %s22
    %s25 = sadd.s32 1, %s16
    %s26 = scalar_select %p23, %s25, %s16
    %p27 = scmp.ge.s32.totalorder %s26, 2
    %s28 = scalar_select %p27, 0, %s26
    %s29 = ssub.s32 %s16, %s28
    %s30 = ssub.s32 %s17, %s24
    %s31 = sor.u32 %s29, %s30
    %p32 = scmp.eq.s32.totalorder %s31, 0
    %s34 = sadd.s32 %s33, 1
    %s35 = scalar_select %p32, %s33, %s34
    %p38 = pneg %p32
    %p39 = scmp.eq.s32.totalorder %s9, 1
    %p40 = por %p38, %p39
    %p41 = scmp.ne.s32.totalorder %s33, %s36
    %p42 = scmp.eq.s32.totalorder %s9, 0
    %p43 = por %p41, %p42
    %p44 = scmp.ne.s32.totalorder %s33, %s36
    %p45 = scmp.eq.s32.totalorder %s14, 1
    %p46 = por %p44, %p45
    %p47 = scmp.ne.s32.totalorder %s36, %s37
    %p48 = scmp.eq.s32.totalorder %s14, 0
    %p49 = por %p47, %p48
    %p50 = scmp.ne.s32.totalorder %s36, %s37
    %p51 = scmp.eq.s32.totalorder %s15, 1
    %p52 = por %p50, %p51
    %p54 = scmp.ne.s32.totalorder %s37, %s53
    %p55 = scmp.eq.s32.totalorder %s15, 0
    %p56 = por %p54, %p55
    %s58 = sadd.s32 %s57, 1
    %p61 = scmp.eq.s32.totalorder %s9, 1
    %p62 = scmp.ne.s32.totalorder %s57, %s59
    %p63 = scmp.eq.s32.totalorder %s9, 0
    %p64 = por %p62, %p63
    %p65 = scmp.ne.s32.totalorder %s57, %s59
    %p66 = scmp.eq.s32.totalorder %s14, 1
    %p67 = por %p65, %p66
    %p68 = scmp.ne.s32.totalorder %s59, %s60
    %p69 = scmp.eq.s32.totalorder %s14, 0
    %p70 = por %p68, %p69
    %p71 = scmp.ne.s32.totalorder %s59, %s60
    %p72 = scmp.eq.s32.totalorder %s15, 1
    %p73 = por %p71, %p72
    %p75 = scmp.ne.s32.totalorder %s60, %s74
    %p76 = scmp.eq.s32.totalorder %s15, 0
    %p77 = por %p75, %p76
    %s79 = sadd.s32 %s78, 1
    %p82 = scmp.eq.s32.totalorder %s9, 1
    %p83 = scmp.ne.s32.totalorder %s78, %s80
    %p84 = scmp.eq.s32.totalorder %s9, 0
    %p85 = por %p83, %p84
    %p86 = scmp.ne.s32.totalorder %s78, %s80
    %p87 = scmp.eq.s32.totalorder %s14, 1
    %p88 = por %p86, %p87
    %p89 = scmp.ne.s32.totalorder %s80, %s81
    %p90 = scmp.eq.s32.totalorder %s14, 0
    %p91 = por %p89, %p90
    %p92 = scmp.ne.s32.totalorder %s80, %s81
    %p93 = scmp.eq.s32.totalorder %s15, 1
    %p94 = por %p92, %p93
    %p96 = scmp.ne.s32.totalorder %s81, %s95
    %p97 = scmp.eq.s32.totalorder %s15, 0
    %p98 = por %p96, %p97
    %s99 = ssub.s32 %s16, %s28
    %s100 = ssub.s32 %s17, %s24
    %s101 = sor.u32 %s99, %s100
    %p102 = scmp.eq.s32.totalorder %s101, 0
    %s104 = sadd.s32 %s103, 1
    %s105 = scalar_select %p102, %s103, %s104
    %p108 = pneg %p102
    %p109 = scmp.eq.s32.totalorder %s9, 1
    %p110 = por %p108, %p109
    %p111 = scmp.ne.s32.totalorder %s103, %s106
    %p112 = scmp.eq.s32.totalorder %s9, 0
    %p113 = por %p111, %p112
    %p114 = scmp.ne.s32.totalorder %s103, %s106
    %p115 = scmp.eq.s32.totalorder %s14, 1
    %p116 = por %p114, %p115
    %p117 = scmp.ne.s32.totalorder %s106, %s107
    %p118 = scmp.eq.s32.totalorder %s14, 0
    %p119 = por %p117, %p118
    %p120 = scmp.ne.s32.totalorder %s106, %s107
    %p121 = scmp.eq.s32.totalorder %s15, 1
    %p122 = por %p120, %p121
    %p124 = scmp.ne.s32.totalorder %s107, %s123
    %p125 = scmp.eq.s32.totalorder %s15, 0
    %p126 = por %p124, %p125
    %p127 = scmp.le.s32.totalorder 1, %s9
    %p128 = scmp.lt.s32.totalorder %s9, 3
    %p129 = pnand %p127, %p128
    %p130 = pneg %p129
    // Predicated region
    $region9: #{forward.17} parent=5 // pred_check
      _
    $region10: #{forward.17} parent=5 // pred_check_branch
      %132 = sbr.rel (%p129) target = $region12
    $region11: #{forward.17} parent=5 // pred_region
      %s133 = ssub.s32 %s9, 1
      // Predicated region
      $region13: #{forward.17} parent=11 // pred_check
        %p134 = pneg %p70
      $region14: #{forward.17} parent=11 // pred_check_branch
        %136 = sbr.rel (%p134) target = $region16
      $region15: #{forward.17} parent=11 // pred_region
        _
      $region16: #{forward.17} parent=11 // pred_fallthru
        _
      // Predicated region
      $region17: #{forward.17} parent=11 // pred_check
        %p137 = pneg %p91
      $region18: #{forward.17} parent=11 // pred_check_branch
        %139 = sbr.rel (%p137) target = $region20
      $region19: #{forward.17} parent=11 // pred_region
        _
      $region20: #{forward.17} parent=11 // pred_fallthru
        _
    $region12: #{forward.17} parent=5 // pred_fallthru
      _
    %p140 = scmp.lt.s32.totalorder %s9, 2
    // Predicated region
    $region21: #{forward.17} parent=5 // pred_check
      %p141 = pneg %p140
    $region22: #{forward.17} parent=5 // pred_check_branch
      %143 = sbr.rel (%p141) target = $region24
    $region23: #{forward.17} parent=5 // pred_region
      // Predicated region
      $region25: #{forward.17} parent=23 // pred_check
        %p144 = pneg %p43
      $region26: #{forward.17} parent=23 // pred_check_branch
        %146 = sbr.rel (%p144) target = $region28
      $region27: #{forward.17} parent=23 // pred_region
        %p147 = scmp.lt.s32.totalorder %s16, 1
        %s148 = scalar_select %p147, %s16, 1
        %p149 = scmp.lt.s32.totalorder %s17, 0
        %s150 = scalar_select %p149, %s17, 0
        %s151 = smul.addr %s148, 27
        %s152 = sadd.s32 %s150, %s151
        %s153 = smul.addr %s152, 4
        %s154 = scalar_lea.vmem %s0, %s153
      $region28: #{forward.17} parent=23 // pred_fallthru
        _
    $region24: #{forward.17} parent=5 // pred_fallthru
      _
    %p155 = scmp.le.s32.totalorder 1, %s9
    %p156 = scmp.lt.s32.totalorder %s9, 3
    %p157 = pnand %p155, %p156
    %p158 = pneg %p157
    // Predicated region
    $region29: #{forward.17} parent=5 // pred_check
      _
    $region30: #{forward.17} parent=5 // pred_check_branch
      %160 = sbr.rel (%p157) target = $region32
    $region31: #{forward.17} parent=5 // pred_region
      %s161 = ssub.s32 %s9, 1
      %p162 = scmp.lt.s32.totalorder %s18, 1
      %s163 = scalar_select %p162, %s18, 1
      %p164 = scmp.lt.s32.totalorder %s19, 0
      %s165 = scalar_select %p164, %s19, 0
      %s166 = smul.addr %s163, 27
      %s167 = sadd.s32 %s165, %s166
      %s168 = smul.addr %s167, 4
      %s169 = scalar_lea.vmem %s0, %s168
      %p170 = pneg %p49
      %p171 = pneg %p46
      %p172 = pneg %p70
      %p173 = pneg %p67
      %p174 = pneg %p91
      %p175 = pneg %p88
      %p176 = pneg %p119
      %p177 = pneg %p116
      %p178 = scmp.lt.s32.totalorder %s18, 1
      %s179 = scalar_select %p178, %s18, 1
      %p180 = scmp.lt.s32.totalorder %s19, 0
      %s181 = scalar_select %p180, %s19, 0
      %s182 = smul.addr %s179, 2
      %s183 = sadd.s32 %s181, %s182
      %s184 = smul.addr %s183, 4
      %s185 = scalar_lea.vmem %s3, %s184
      %p186 = scmp.lt.s32.totalorder %s18, 1
      %s187 = scalar_select %p186, %s18, 1
      %p188 = scmp.lt.s32.totalorder %s19, 0
      %s189 = scalar_select %p188, %s19, 0
      %s190 = smul.addr %s187, 27
      %s191 = sadd.s32 %s189, %s190
      %s192 = smul.addr %s191, 4
      %s193 = scalar_lea.vmem %s0, %s192
      %p194 = scmp.lt.s32.totalorder %s18, 1
      %s195 = scalar_select %p194, %s18, 1
      %p196 = scmp.lt.s32.totalorder %s19, 0
      %s197 = scalar_select %p196, %s19, 0
      %s198 = smul.addr %s195, 2
      %s199 = sadd.s32 %s197, %s198
      %s200 = smul.addr %s199, 4
      %s201 = scalar_lea.vmem %s3, %s200
      %v203 = vld [vmem:[%s193] sm:$0xf]
      %v204 = vld [vmem:[%s193 + $0x4] sm:$0xf]
      %v205 = vld [vmem:[%s193 + $0x8] sm:$0xf]
      %v206 = vld [vmem:[%s193 + $0xc] sm:$0xf]
      %v207 = vld [vmem:[%s193 + $0x10] sm:$0xf]
      %v208 = vld [vmem:[%s193 + $0x14] sm:$0xf]
      %v209 = vld [vmem:[%s193 + $0x18] sm:$0xf]
      %v210 = vld [vmem:[%s193 + $0x1c] sm:$0xf]
      %v211 = vld [vmem:[%s193 + $0x20] sm:$0xf]
      %v212 = vld [vmem:[%s193 + $0x24] sm:$0xf]
      %v213 = vld [vmem:[%s193 + $0x28] sm:$0xf]
      %v214 = vld [vmem:[%s193 + $0x2c] sm:$0xf]
      %v215 = vld [vmem:[%s193 + $0x30] sm:$0xf]
      %v216 = vld [vmem:[%s193 + $0x34] sm:$0xf]
      %v217 = vld [vmem:[%s193 + $0x38] sm:$0xf]
      %v218 = vld [vmem:[%s193 + $0x3c] sm:$0xf]
      %v219 = vld [vmem:[%s193 + $0x40] sm:$0xf]
      %v220 = vld [vmem:[%s193 + $0x44] sm:$0xf]
      %v221 = vld [vmem:[%s193 + $0x48] sm:$0xf]
      %v222 = vld [vmem:[%s193 + $0x4c] sm:$0xf]
      %v223 = vld [vmem:[%s193 + $0x50] sm:$0xf]
      %v224 = vld [vmem:[%s193 + $0x54] sm:$0xf]
      %v225 = vld [vmem:[%s193 + $0x58] sm:$0xf]
      %v226 = vld [vmem:[%s193 + $0x5c] sm:$0xf]
      %v227 = vld [vmem:[%s193 + $0x60] sm:$0xf]
      %v228 = vld [vmem:[%s193 + $0x64] sm:$0xf]
      %v229 = vld [vmem:[%s193 + $0x68] sm:$0xf]
      %v230 = vld [vmem:[%s1] sm:$0xff]
      %v231 = vld [vmem:[%s1 + $0x8] sm:$0xff]
      %v232 = vld [vmem:[%s2] sm:$0xff]
      %v233 = vld [vmem:[%s2 + $0x8] sm:$0xff]
      %235 = vset.pattern.permute.xlu0 0
      %236 = vperm.xlu0 %235, %v232
      %v237 = vpop.permute.xlu0 %236
      %240 = vset.pattern.permute.xlu0 0
      %241 = vperm.xlu0 %240, %v233
      %v242 = vpop.permute.xlu0 %241
      %v246 = vunpack.c.l.b16 %v230
      %v247 = vunpack.c.h.b16 %v230
      %v248 = vunpack.c.l.b16 %v231
      %v249 = vunpack.c.h.b16 %v231
      %v250 = vpack.c.b16 %v248, %v246
      %v251 = vpack.c.b16 %v249, %v247
      %v280 = vunpack.c.l.b16 %v203
      %v281 = vunpack.c.l.b16 %v204
      %v282 = vunpack.c.l.b16 %v205
      %v283 = vunpack.c.l.b16 %v206
      %v284 = vunpack.c.l.b16 %v207
      %v285 = vunpack.c.l.b16 %v208
      %v286 = vunpack.c.l.b16 %v209
      %v287 = vunpack.c.l.b16 %v210
      %v288 = vunpack.c.l.b16 %v211
      %v289 = vunpack.c.l.b16 %v212
      %v290 = vunpack.c.l.b16 %v213
      %v291 = vunpack.c.l.b16 %v214
      %v292 = vunpack.c.l.b16 %v215
      %v293 = vunpack.c.l.b16 %v216
      %v294 = vunpack.c.l.b16 %v217
      %v295 = vunpack.c.l.b16 %v218
      %v296 = vunpack.c.l.b16 %v219
      %v297 = vunpack.c.l.b16 %v220
      %v298 = vunpack.c.l.b16 %v221
      %v299 = vunpack.c.l.b16 %v222
      %v300 = vunpack.c.l.b16 %v223
      %v301 = vunpack.c.l.b16 %v224
      %v302 = vunpack.c.l.b16 %v225
      %v303 = vunpack.c.l.b16 %v226
      %v304 = vunpack.c.l.b16 %v227
      %v305 = vunpack.c.l.b16 %v228
      %v306 = vunpack.c.l.b16 %v229
      %v307 = vpack.c.b16 %v281, %v280
      %v308 = vpack.c.b16 %v283, %v282
      %v309 = vpack.c.b16 %v285, %v284
      %v310 = vpack.c.b16 %v287, %v286
      %v311 = vpack.c.b16 %v289, %v288
      %v312 = vpack.c.b16 %v291, %v290
      %v313 = vpack.c.b16 %v293, %v292
      %v314 = vpack.c.b16 %v295, %v294
      %v315 = vpack.c.b16 %v297, %v296
      %v316 = vpack.c.b16 %v299, %v298
      %v317 = vpack.c.b16 %v301, %v300
      %v318 = vpack.c.b16 %v303, %v302
      %v319 = vpack.c.b16 %v305, %v304
      %v320 = vpack.c.b16 %v306, %v306
      %vm334 = vcmask 719872
      %v336 = vsel %vm334, %v251, 0
      %vm338 = vcmask 1043456
      %v340 = vsel %vm338, %v320, 0
      %342 = vmatpush.bf16.msra.mxu0 %v314
      %343 = vmatpush.bf16.msra.mxu0 %v313
      %344 = vmatpush.bf16.msra.mxu0 %v312
      %345 = vmatpush.bf16.msra.mxu0 %v311
      %346 = vmatpush.bf16.msra.mxu0 %v310
      %347 = vmatpush.bf16.msra.mxu0 %v309
      %348 = vmatpush.bf16.msra.mxu0 %v308
      %349 = vmatpush.bf16.msra.mxu0 %v307
      %350 = vmatmul.bf16.gmra.mxu0 %v250
      %v351 = vpop.f32.mrf.mxu0
      %v352 = vadd.f32 %v237, %v351
      %v353 = vpop.f32.mrf.mxu0
      %v354 = vadd.f32 %v242, %v353
      %355 = vdwg.mxu0
      %356 = vmatpush.bf16.msra.mxu0 0
      %357 = vmatpush.bf16.msra.mxu0 0
      %358 = vmatpush.bf16.msra.mxu0 %v340
      %359 = vmatpush.bf16.msra.mxu0 %v319
      %360 = vmatpush.bf16.msra.mxu0 %v318
      %361 = vmatpush.bf16.msra.mxu0 %v317
      %362 = vmatpush.bf16.msra.mxu0 %v316
      %363 = vmatpush.bf16.msra.mxu0 %v315
      %364 = vmatmul.bf16.gmra.mxu0 %v336
      %v365 = vpop.f32.mrf.mxu0
      %v366 = vadd.f32 %v352, %v365
      %v367 = vpop.f32.mrf.mxu0
      %v368 = vadd.f32 %v354, %v367
      %369 = vdwg.mxu0
      %vm370 = vcmask 64512
      %v371 = vsel %vm370, %v366, 0.0
      %372 = vadd.xlane.f32.xlu0 %v371
      %v373 = vpop.xlane.xlu0 %372
      %v374 = vsel %vm370, %v368, 0.0
      %375 = vadd.xlane.f32.xlu0 %v374
      %v376 = vpop.xlane.xlu0 %375
      %v377 = vrcp.pop 8.0
      %v378 = vmul.f32 8.0, %v377
      %v379 = vsub.f32 1.0, %v378
      %v380 = vmul.f32 %v377, %v379
      %v381 = vadd.f32 %v377, %v380
      %vm382 = vweird.f32 %v377
      %v383 = vsel %vm382, %v377, %v381
      %v384 = vmul.f32 %v373, %v383
      %v385 = vmul.f32 %v376, %v383
      %v386 = vsub.f32 %v366, %v384
      %v387 = vsub.f32 %v368, %v385
      %v388 = vmul.f32 %v386, %v386
      %v389 = vmul.f32 %v387, %v387
      %v390 = vsel %vm370, %v388, 0.0
      %391 = vadd.xlane.f32.xlu0 %v390
      %v392 = vpop.xlane.xlu0 %391
      %v393 = vsel %vm370, %v389, 0.0
      %394 = vadd.xlane.f32.xlu0 %v393
      %v395 = vpop.xlane.xlu0 %394
      %v396 = vmul.f32 %v392, %v383
      %v397 = vmul.f32 %v395, %v383
      %v398 = vadd.f32 %v396, 1e-05
      %v399 = vadd.f32 %v397, 1e-05
      %v400 = vrsqrt.pop %v398
      %v401 = vmul.f32 %v400, %v398
      %v402 = vmul.f32 %v401, %v400
      %v403 = vmul.f32 0.5, %v402
      %v404 = vsub.f32 1.5, %v403
      %v405 = vmul.f32 %v400, %v404
      %vm406 = vweird.f32 %v398
      %vm407 = vweird.f32 %v400
      %vm408 = vmor %vm406, %vm407
      %v409 = vsel %vm408, %v400, %v405
      %v410 = vrsqrt.pop %v399
      %v411 = vmul.f32 %v410, %v399
      %v412 = vmul.f32 %v411, %v410
      %v413 = vmul.f32 0.5, %v412
      %v414 = vsub.f32 1.5, %v413
      %v415 = vmul.f32 %v410, %v414
      %vm416 = vweird.f32 %v399
      %vm417 = vweird.f32 %v410
      %vm418 = vmor %vm416, %vm417
      %v419 = vsel %vm418, %v410, %v415
      %v420 = vmul.f32 %v386, %v409
      %v421 = vmul.f32 %v387, %v419
      %vm422 = vcmp.ge.f32.partialorder %v420, 0.0
      %vm423 = vcmp.ge.f32.partialorder %v421, 0.0
      %v424 = vmul.f32 %v420, 0.01
      %v425 = vmul.f32 %v421, 0.01
      %v426 = vsel %vm422, %v420, %v424
      %v427 = vsel %vm423, %v421, %v425
      %v428 = vpack.c.bf16 %v426, %v426
      %v429 = vpack.c.bf16 %v427, %v427
      %vm430 = vcmask 60416
      %431 = vst.msk [vmem:[%s201] sm:$0xf] %vm430, %v428
      %432 = vst.msk [vmem:[%s201 + $0x4] sm:$0xf] %vm430, %v429
      %p433 = scmp.lt.s32.totalorder %s18, 1
      %s434 = scalar_select %p433, %s18, 1
      %p435 = scmp.lt.s32.totalorder %s19, 0
      %s436 = scalar_select %p435, %s19, 0
      %s437 = smul.addr %s434, 2
      %s438 = sadd.s32 %s436, %s437
      %s439 = smul.addr %s438, 4
      %s440 = scalar_lea.vmem %s3, %s439
      // Predicated region
      $region33: #{forward.17} parent=31 // pred_check
        %p441 = pneg %p116
      $region34: #{forward.17} parent=31 // pred_check_branch
        %443 = sbr.rel (%p441) target = $region36
      $region35: #{forward.17} parent=31 // pred_region
        _
      $region36: #{forward.17} parent=31 // pred_fallthru
        _
    $region32: #{forward.17} parent=5 // pred_fallthru
      _
    %p444 = scmp.le.s32.totalorder 2, %s9
    // Predicated region
    $region37: #{forward.17} parent=5 // pred_check
      %p445 = pneg %p444
    $region38: #{forward.17} parent=5 // pred_check_branch
      %447 = sbr.rel (%p445) target = $region40
    $region39: #{forward.17} parent=5 // pred_region
      %s448 = ssub.s32 %s9, 2
      // Predicated region
      $region41: #{forward.17} parent=39 // pred_check
        %p449 = pneg %p122
      $region42: #{forward.17} parent=39 // pred_check_branch
        %451 = sbr.rel (%p449) target = $region44
      $region43: #{forward.17} parent=39 // pred_region
        %p452 = scmp.lt.s32.totalorder %s20, 1
        %s453 = scalar_select %p452, %s20, 1
        %p454 = scmp.lt.s32.totalorder %s21, 0
        %s455 = scalar_select %p454, %s21, 0
        %s456 = smul.addr %s453, 2
        %s457 = sadd.s32 %s455, %s456
        %s458 = smul.addr %s457, 4
        %s459 = scalar_lea.vmem %s3, %s458
      $region44: #{forward.17} parent=39 // pred_fallthru
        _
    $region40: #{forward.17} parent=5 // pred_fallthru
      _
  $region6: #{forward.17} parent=0 // loop_footer
    %s13 = sadd.s32 1, %s9
  $region7: #{forward.17} parent=0 // loop_footer_branch
    %8 = sbr.rel target = $region3
  $region8: #{forward.17} parent=0 // loop_exit
    _

// kernel: forward.18
$region0: #{forward.18}
  #allocation0 [shape = 'u32[]', space=smem, size = 0x4, offset = 0x4, fixed_abs, tag = 'smem constant byte address 0x4 - core index']
  #allocation1 [shape = 'u32[72,128]{1,0:T(1,128)}', space=vmem, size = 0x9000, scoped, tag = 'internal scratch']
  %s0 = inlined_call_operand.vmem [shape: bf16[2,432,8], index: 0, kind: input, shape index: {}]
  %s1 = inlined_call_operand.vmem [shape: bf16[16,432], index: 1, kind: input, shape index: {}]
  %s2 = inlined_call_operand.vmem [shape: f32[16,1], index: 2, kind: input, shape index: {}]
  %s3 = inlined_call_operand.vmem [shape: bf16[2,16,8], index: 3, kind: output, shape index: {}]
  %s4 = sld [smem:[#allocation0]]
  $region45: #{forward.18} parent=0
    _
  %s6 = ssub.s32 1, %s4
  %s7 = scalar_select 0, %s6, %s4
  loop: start=0, step=1, limit=4
  $region2: #{forward.18} parent=0 // loop_pre_header
    _
  $region3: #{forward.18} parent=0 // loop_header
    %s9 = sphi 0, %s13
    %p10 = scmp.ge.s32.totalorder %s9, 4
    %s16 = sphi 0, %s28
    %s17 = sphi 0, %s24
    %s18 = sphi 0, %s16
    %s19 = sphi 0, %s17
    %s20 = sphi 0, %s18
    %s21 = sphi 0, %s19
    %s33 = sphi 0, %s35
    %s36 = sphi 0, %s33
    %s37 = sphi 0, %s36
    %s53 = sphi 0, %s37
    %s57 = sphi 0, %s57
    %s59 = sphi 0, %s57
    %s60 = sphi 0, %s59
    %s74 = sphi 0, %s60
    %s78 = sphi 0, %s78
    %s80 = sphi 0, %s78
    %s81 = sphi 0, %s80
    %s95 = sphi 0, %s81
    %s103 = sphi 0, %s105
    %s106 = sphi 0, %s103
    %s107 = sphi 0, %s106
    %s123 = sphi 0, %s107
  $region4: #{forward.18} parent=0 // loop_header_branch
    %12 = sbr.rel (%p10) target = $region8
  $region5: #{forward.18} parent=0 // loop_body
    %s14 = ssub.s32 %s9, 1
    %s15 = ssub.s32 %s9, 2
    %s22 = sadd.s32 1, %s17
    %p23 = scmp.ge.s32.totalorder %s22, 1
    %s24 = scalar_select %p23, 0, %s22
    %s25 = sadd.s32 1, %s16
    %s26 = scalar_select %p23, %s25, %s16
    %p27 = scmp.ge.s32.totalorder %s26, 2
    %s28 = scalar_select %p27, 0, %s26
    %s29 = ssub.s32 %s16, %s28
    %s30 = ssub.s32 %s17, %s24
    %s31 = sor.u32 %s29, %s30
    %p32 = scmp.eq.s32.totalorder %s31, 0
    %s34 = sadd.s32 %s33, 1
    %s35 = scalar_select %p32, %s33, %s34
    %p38 = pneg %p32
    %p39 = scmp.eq.s32.totalorder %s9, 1
    %p40 = por %p38, %p39
    %p41 = scmp.ne.s32.totalorder %s33, %s36
    %p42 = scmp.eq.s32.totalorder %s9, 0
    %p43 = por %p41, %p42
    %p44 = scmp.ne.s32.totalorder %s33, %s36
    %p45 = scmp.eq.s32.totalorder %s14, 1
    %p46 = por %p44, %p45
    %p47 = scmp.ne.s32.totalorder %s36, %s37
    %p48 = scmp.eq.s32.totalorder %s14, 0
    %p49 = por %p47, %p48
    %p50 = scmp.ne.s32.totalorder %s36, %s37
    %p51 = scmp.eq.s32.totalorder %s15, 1
    %p52 = por %p50, %p51
    %p54 = scmp.ne.s32.totalorder %s37, %s53
    %p55 = scmp.eq.s32.totalorder %s15, 0
    %p56 = por %p54, %p55
    %s58 = sadd.s32 %s57, 1
    %p61 = scmp.eq.s32.totalorder %s9, 1
    %p62 = scmp.ne.s32.totalorder %s57, %s59
    %p63 = scmp.eq.s32.totalorder %s9, 0
    %p64 = por %p62, %p63
    %p65 = scmp.ne.s32.totalorder %s57, %s59
    %p66 = scmp.eq.s32.totalorder %s14, 1
    %p67 = por %p65, %p66
    %p68 = scmp.ne.s32.totalorder %s59, %s60
    %p69 = scmp.eq.s32.totalorder %s14, 0
    %p70 = por %p68, %p69
    %p71 = scmp.ne.s32.totalorder %s59, %s60
    %p72 = scmp.eq.s32.totalorder %s15, 1
    %p73 = por %p71, %p72
    %p75 = scmp.ne.s32.totalorder %s60, %s74
    %p76 = scmp.eq.s32.totalorder %s15, 0
    %p77 = por %p75, %p76
    %s79 = sadd.s32 %s78, 1
    %p82 = scmp.eq.s32.totalorder %s9, 1
    %p83 = scmp.ne.s32.totalorder %s78, %s80
    %p84 = scmp.eq.s32.totalorder %s9, 0
    %p85 = por %p83, %p84
    %p86 = scmp.ne.s32.totalorder %s78, %s80
    %p87 = scmp.eq.s32.totalorder %s14, 1
    %p88 = por %p86, %p87
    %p89 = scmp.ne.s32.totalorder %s80, %s81
    %p90 = scmp.eq.s32.totalorder %s14, 0
    %p91 = por %p89, %p90
    %p92 = scmp.ne.s32.totalorder %s80, %s81
    %p93 = scmp.eq.s32.totalorder %s15, 1
    %p94 = por %p92, %p93
    %p96 = scmp.ne.s32.totalorder %s81, %s95
    %p97 = scmp.eq.s32.totalorder %s15, 0
    %p98 = por %p96, %p97
    %s99 = ssub.s32 %s16, %s28
    %s100 = ssub.s32 %s17, %s24
    %s101 = sor.u32 %s99, %s100
    %p102 = scmp.eq.s32.totalorder %s101, 0
    %s104 = sadd.s32 %s103, 1
    %s105 = scalar_select %p102, %s103, %s104
    %p108 = pneg %p102
    %p109 = scmp.eq.s32.totalorder %s9, 1
    %p110 = por %p108, %p109
    %p111 = scmp.ne.s32.totalorder %s103, %s106
    %p112 = scmp.eq.s32.totalorder %s9, 0
    %p113 = por %p111, %p112
    %p114 = scmp.ne.s32.totalorder %s103, %s106
    %p115 = scmp.eq.s32.totalorder %s14, 1
    %p116 = por %p114, %p115
    %p117 = scmp.ne.s32.totalorder %s106, %s107
    %p118 = scmp.eq.s32.totalorder %s14, 0
    %p119 = por %p117, %p118
    %p120 = scmp.ne.s32.totalorder %s106, %s107
    %p121 = scmp.eq.s32.totalorder %s15, 1
    %p122 = por %p120, %p121
    %p124 = scmp.ne.s32.totalorder %s107, %s123
    %p125 = scmp.eq.s32.totalorder %s15, 0
    %p126 = por %p124, %p125
    %p127 = scmp.le.s32.totalorder 1, %s9
    %p128 = scmp.lt.s32.totalorder %s9, 3
    %p129 = pnand %p127, %p128
    %p130 = pneg %p129
    // Predicated region
    $region9: #{forward.18} parent=5 // pred_check
      _
    $region10: #{forward.18} parent=5 // pred_check_branch
      %132 = sbr.rel (%p129) target = $region12
    $region11: #{forward.18} parent=5 // pred_region
      %s133 = ssub.s32 %s9, 1
      // Predicated region
      $region13: #{forward.18} parent=11 // pred_check
        %p134 = pneg %p70
      $region14: #{forward.18} parent=11 // pred_check_branch
        %136 = sbr.rel (%p134) target = $region16
      $region15: #{forward.18} parent=11 // pred_region
        _
      $region16: #{forward.18} parent=11 // pred_fallthru
        _
      // Predicated region
      $region17: #{forward.18} parent=11 // pred_check
        %p137 = pneg %p91
      $region18: #{forward.18} parent=11 // pred_check_branch
        %139 = sbr.rel (%p137) target = $region20
      $region19: #{forward.18} parent=11 // pred_region
        _
      $region20: #{forward.18} parent=11 // pred_fallthru
        _
    $region12: #{forward.18} parent=5 // pred_fallthru
      _
    %p140 = scmp.lt.s32.totalorder %s9, 2
    // Predicated region
    $region21: #{forward.18} parent=5 // pred_check
      %p141 = pneg %p140
    $region22: #{forward.18} parent=5 // pred_check_branch
      %143 = sbr.rel (%p141) target = $region24
    $region23: #{forward.18} parent=5 // pred_region
      // Predicated region
      $region25: #{forward.18} parent=23 // pred_check
        %p144 = pneg %p43
      $region26: #{forward.18} parent=23 // pred_check_branch
        %146 = sbr.rel (%p144) target = $region28
      $region27: #{forward.18} parent=23 // pred_region
        %p147 = scmp.lt.s32.totalorder %s16, 1
        %s148 = scalar_select %p147, %s16, 1
        %p149 = scmp.lt.s32.totalorder %s17, 0
        %s150 = scalar_select %p149, %s17, 0
        %s151 = smul.addr %s148, 54
        %s152 = sadd.s32 %s150, %s151
        %s153 = smul.addr %s152, 4
        %s154 = scalar_lea.vmem %s0, %s153
      $region28: #{forward.18} parent=23 // pred_fallthru
        _
    $region24: #{forward.18} parent=5 // pred_fallthru
      _
    %p155 = scmp.le.s32.totalorder 1, %s9
    %p156 = scmp.lt.s32.totalorder %s9, 3
    %p157 = pnand %p155, %p156
    %p158 = pneg %p157
    // Predicated region
    $region29: #{forward.18} parent=5 // pred_check
      _
    $region30: #{forward.18} parent=5 // pred_check_branch
      %160 = sbr.rel (%p157) target = $region32
    $region31: #{forward.18} parent=5 // pred_region
      %s161 = ssub.s32 %s9, 1
      %p162 = scmp.lt.s32.totalorder %s18, 1
      %s163 = scalar_select %p162, %s18, 1
      %p164 = scmp.lt.s32.totalorder %s19, 0
      %s165 = scalar_select %p164, %s19, 0
      %s166 = smul.addr %s163, 54
      %s167 = sadd.s32 %s165, %s166
      %s168 = smul.addr %s167, 4
      %s169 = scalar_lea.vmem %s0, %s168
      %p170 = pneg %p49
      %p171 = pneg %p46
      %p172 = pneg %p70
      %p173 = pneg %p67
      %p174 = pneg %p91
      %p175 = pneg %p88
      %p176 = pneg %p119
      %p177 = pneg %p116
      %p178 = scmp.lt.s32.totalorder %s18, 1
      %s179 = scalar_select %p178, %s18, 1
      %p180 = scmp.lt.s32.totalorder %s19, 0
      %s181 = scalar_select %p180, %s19, 0
      %s182 = smul.addr %s179, 2
      %s183 = sadd.s32 %s181, %s182
      %s184 = smul.addr %s183, 4
      %s185 = scalar_lea.vmem %s3, %s184
      %p186 = scmp.lt.s32.totalorder %s18, 1
      %s187 = scalar_select %p186, %s18, 1
      %p188 = scmp.lt.s32.totalorder %s19, 0
      %s189 = scalar_select %p188, %s19, 0
      %s190 = smul.addr %s187, 54
      %s191 = sadd.s32 %s189, %s190
      %s192 = smul.addr %s191, 4
      %s193 = scalar_lea.vmem %s0, %s192
      %p194 = scmp.lt.s32.totalorder %s18, 1
      %s195 = scalar_select %p194, %s18, 1
      %p196 = scmp.lt.s32.totalorder %s19, 0
      %s197 = scalar_select %p196, %s19, 0
      %s198 = smul.addr %s195, 2
      %s199 = sadd.s32 %s197, %s198
      %s200 = smul.addr %s199, 4
      %s201 = scalar_lea.vmem %s3, %s200
      %v203 = vld [vmem:[%s193] sm:$0xf]
      %v204 = vld [vmem:[%s193 + $0x4] sm:$0xf]
      %v205 = vld [vmem:[%s193 + $0x8] sm:$0xf]
      %v206 = vld [vmem:[%s193 + $0xc] sm:$0xf]
      %v207 = vld [vmem:[%s193 + $0x10] sm:$0xf]
      %v208 = vld [vmem:[%s193 + $0x14] sm:$0xf]
      %v209 = vld [vmem:[%s193 + $0x18] sm:$0xf]
      %v210 = vld [vmem:[%s193 + $0x1c] sm:$0xf]
      %v211 = vld [vmem:[%s193 + $0x20] sm:$0xf]
      %v212 = vld [vmem:[%s193 + $0x24] sm:$0xf]
      %v213 = vld [vmem:[%s193 + $0x28] sm:$0xf]
      %v214 = vld [vmem:[%s193 + $0x2c] sm:$0xf]
      %v215 = vld [vmem:[%s193 + $0x30] sm:$0xf]
      %v216 = vld [vmem:[%s193 + $0x34] sm:$0xf]
      %v217 = vld [vmem:[%s193 + $0x38] sm:$0xf]
      %v218 = vld [vmem:[%s193 + $0x3c] sm:$0xf]
      %v219 = vld [vmem:[%s193 + $0x40] sm:$0xf]
      %v220 = vld [vmem:[%s193 + $0x44] sm:$0xf]
      %v221 = vld [vmem:[%s193 + $0x48] sm:$0xf]
      %v222 = vld [vmem:[%s193 + $0x4c] sm:$0xf]
      %v223 = vld [vmem:[%s193 + $0x50] sm:$0xf]
      %v224 = vld [vmem:[%s193 + $0x54] sm:$0xf]
      %v225 = vld [vmem:[%s193 + $0x58] sm:$0xf]
      %v226 = vld [vmem:[%s193 + $0x5c] sm:$0xf]
      %v227 = vld [vmem:[%s193 + $0x60] sm:$0xf]
      %v228 = vld [vmem:[%s193 + $0x64] sm:$0xf]
      %v229 = vld [vmem:[%s193 + $0x68] sm:$0xf]
      %v230 = vld [vmem:[%s193 + $0x6c] sm:$0xf]
      %v231 = vld [vmem:[%s193 + $0x70] sm:$0xf]
      %v232 = vld [vmem:[%s193 + $0x74] sm:$0xf]
      %v233 = vld [vmem:[%s193 + $0x78] sm:$0xf]
      %v234 = vld [vmem:[%s193 + $0x7c] sm:$0xf]
      %v235 = vld [vmem:[%s193 + $0x80] sm:$0xf]
      %v236 = vld [vmem:[%s193 + $0x84] sm:$0xf]
      %v237 = vld [vmem:[%s193 + $0x88] sm:$0xf]
      %v238 = vld [vmem:[%s193 + $0x8c] sm:$0xf]
      %v239 = vld [vmem:[%s193 + $0x90] sm:$0xf]
      %v240 = vld [vmem:[%s193 + $0x94] sm:$0xf]
      %v241 = vld [vmem:[%s193 + $0x98] sm:$0xf]
      %v242 = vld [vmem:[%s193 + $0x9c] sm:$0xf]
      %v243 = vld [vmem:[%s193 + $0xa0] sm:$0xf]
      %v244 = vld [vmem:[%s193 + $0xa4] sm:$0xf]
      %v245 = vld [vmem:[%s193 + $0xa8] sm:$0xf]
      %v246 = vld [vmem:[%s193 + $0xac] sm:$0xf]
      %v247 = vld [vmem:[%s193 + $0xb0] sm:$0xf]
      %v248 = vld [vmem:[%s193 + $0xb4] sm:$0xf]
      %v249 = vld [vmem:[%s193 + $0xb8] sm:$0xf]
      %v250 = vld [vmem:[%s193 + $0xbc] sm:$0xf]
      %v251 = vld [vmem:[%s193 + $0xc0] sm:$0xf]
      %v252 = vld [vmem:[%s193 + $0xc4] sm:$0xf]
      %v253 = vld [vmem:[%s193 + $0xc8] sm:$0xf]
      %v254 = vld [vmem:[%s193 + $0xcc] sm:$0xf]
      %v255 = vld [vmem:[%s193 + $0xd0] sm:$0xf]
      %v256 = vld [vmem:[%s193 + $0xd4] sm:$0xf]
      %v257 = vld [vmem:[%s1] sm:$0xff]
      %v258 = vld [vmem:[%s1 + $0x8] sm:$0xff]
      %v259 = vld [vmem:[%s1 + $0x10] sm:$0xff]
      %v260 = vld [vmem:[%s1 + $0x18] sm:$0xff]
      %v261 = vld [vmem:[%s2] sm:$0xff]
      %v262 = vld [vmem:[%s2 + $0x8] sm:$0xff]
      %264 = vset.pattern.permute.xlu0 0
      %265 = vperm.xlu0 %264, %v261
      %v266 = vpop.permute.xlu0 %265
      %269 = vset.pattern.permute.xlu0 0
      %270 = vperm.xlu0 %269, %v262
      %v271 = vpop.permute.xlu0 %270
      %v277 = vunpack.c.l.b16 %v257
      %v278 = vunpack.c.h.b16 %v257
      %v279 = vunpack.c.l.b16 %v258
      %v280 = vunpack.c.h.b16 %v258
      %v281 = vunpack.c.l.b16 %v259
      %v282 = vunpack.c.h.b16 %v259
      %v283 = vunpack.c.l.b16 %v260
      %v284 = vunpack.c.h.b16 %v260
      %v285 = vpack.c.b16 %v281, %v277
      %v286 = vpack.c.b16 %v282, %v278
      %v287 = vpack.c.b16 %v283, %v279
      %v288 = vpack.c.b16 %v284, %v280
      %v346 = vunpack.c.l.b16 %v203
      %v347 = vunpack.c.l.b16 %v204
      %v348 = vunpack.c.l.b16 %v205
      %v349 = vunpack.c.l.b16 %v206
      %v350 = vunpack.c.l.b16 %v207
      %v351 = vunpack.c.l.b16 %v208
      %v352 = vunpack.c.l.b16 %v209
      %v353 = vunpack.c.l.b16 %v210
      %v354 = vunpack.c.l.b16 %v211
      %v355 = vunpack.c.l.b16 %v212
      %v356 = vunpack.c.l.b16 %v213
      %v357 = vunpack.c.l.b16 %v214
      %v358 = vunpack.c.l.b16 %v215
      %v359 = vunpack.c.l.b16 %v216
      %v360 = vunpack.c.l.b16 %v217
      %v361 = vunpack.c.l.b16 %v218
      %v362 = vunpack.c.l.b16 %v219
      %v363 = vunpack.c.l.b16 %v220
      %v364 = vunpack.c.l.b16 %v221
      %v365 = vunpack.c.l.b16 %v222
      %v366 = vunpack.c.l.b16 %v223
      %v367 = vunpack.c.l.b16 %v224
      %v368 = vunpack.c.l.b16 %v225
      %v369 = vunpack.c.l.b16 %v226
      %v370 = vunpack.c.l.b16 %v227
      %v371 = vunpack.c.l.b16 %v228
      %v372 = vunpack.c.l.b16 %v229
      %v373 = vunpack.c.l.b16 %v230
      %v374 = vunpack.c.l.b16 %v231
      %v375 = vunpack.c.l.b16 %v232
      %v376 = vunpack.c.l.b16 %v233
      %v377 = vunpack.c.l.b16 %v234
      %v378 = vunpack.c.l.b16 %v235
      %v379 = vunpack.c.l.b16 %v236
      %v380 = vunpack.c.l.b16 %v237
      %v381 = vunpack.c.l.b16 %v238
      %v382 = vunpack.c.l.b16 %v239
      %v383 = vunpack.c.l.b16 %v240
      %v384 = vunpack.c.l.b16 %v241
      %v385 = vunpack.c.l.b16 %v242
      %v386 = vunpack.c.l.b16 %v243
      %v387 = vunpack.c.l.b16 %v244
      %v388 = vunpack.c.l.b16 %v245
      %v389 = vunpack.c.l.b16 %v246
      %v390 = vunpack.c.l.b16 %v247
      %v391 = vunpack.c.l.b16 %v248
      %v392 = vunpack.c.l.b16 %v249
      %v393 = vunpack.c.l.b16 %v250
      %v394 = vunpack.c.l.b16 %v251
      %v395 = vunpack.c.l.b16 %v252
      %v396 = vunpack.c.l.b16 %v253
      %v397 = vunpack.c.l.b16 %v254
      %v398 = vunpack.c.l.b16 %v255
      %v399 = vunpack.c.l.b16 %v256
      %v400 = vpack.c.b16 %v347, %v346
      %v401 = vpack.c.b16 %v349, %v348
      %v402 = vpack.c.b16 %v351, %v350
      %v403 = vpack.c.b16 %v353, %v352
      %v404 = vpack.c.b16 %v355, %v354
      %v405 = vpack.c.b16 %v357, %v356
      %v406 = vpack.c.b16 %v359, %v358
      %v407 = vpack.c.b16 %v361, %v360
      %v408 = vpack.c.b16 %v363, %v362
      %v409 = vpack.c.b16 %v365, %v364
      %v410 = vpack.c.b16 %v367, %v366
      %v411 = vpack.c.b16 %v369, %v368
      %v412 = vpack.c.b16 %v371, %v370
      %v413 = vpack.c.b16 %v373, %v372
      %v414 = vpack.c.b16 %v375, %v374
      %v415 = vpack.c.b16 %v377, %v376
      %v416 = vpack.c.b16 %v379, %v378
      %v417 = vpack.c.b16 %v381, %v380
      %v418 = vpack.c.b16 %v383, %v382
      %v419 = vpack.c.b16 %v385, %v384
      %v420 = vpack.c.b16 %v387, %v386
      %v421 = vpack.c.b16 %v389, %v388
      %v422 = vpack.c.b16 %v391, %v390
      %v423 = vpack.c.b16 %v393, %v392
      %v424 = vpack.c.b16 %v395, %v394
      %v425 = vpack.c.b16 %v397, %v396
      %v426 = vpack.c.b16 %v399, %v398
      %vm454 = vcmask 392192
      %v456 = vsel %vm454, %v288, 0
      %458 = vmatpush.bf16.msra.mxu0 %v407
      %459 = vmatpush.bf16.msra.mxu0 %v406
      %460 = vmatpush.bf16.msra.mxu0 %v405
      %461 = vmatpush.bf16.msra.mxu0 %v404
      %462 = vmatpush.bf16.msra.mxu0 %v403
      %463 = vmatpush.bf16.msra.mxu0 %v402
      %464 = vmatpush.bf16.msra.mxu0 %v401
      %465 = vmatpush.bf16.msra.mxu0 %v400
      %466 = vmatmul.bf16.gmra.mxu0 %v285
      %v467 = vpop.f32.mrf.mxu0
      %v468 = vadd.f32 %v266, %v467
      %v469 = vpop.f32.mrf.mxu0
      %v470 = vadd.f32 %v271, %v469
      %471 = vdwg.mxu0
      %472 = vmatpush.bf16.msra.mxu0 %v415
      %473 = vmatpush.bf16.msra.mxu0 %v414
      %474 = vmatpush.bf16.msra.mxu0 %v413
      %475 = vmatpush.bf16.msra.mxu0 %v412
      %476 = vmatpush.bf16.msra.mxu0 %v411
      %477 = vmatpush.bf16.msra.mxu0 %v410
      %478 = vmatpush.bf16.msra.mxu0 %v409
      %479 = vmatpush.bf16.msra.mxu0 %v408
      %480 = vmatmul.bf16.gmra.mxu0 %v286
      %v481 = vpop.f32.mrf.mxu0
      %v482 = vadd.f32 %v468, %v481
      %v483 = vpop.f32.mrf.mxu0
      %v484 = vadd.f32 %v470, %v483
      %485 = vdwg.mxu0
      %486 = vmatpush.bf16.msra.mxu0 %v423
      %487 = vmatpush.bf16.msra.mxu0 %v422
      %488 = vmatpush.bf16.msra.mxu0 %v421
      %489 = vmatpush.bf16.msra.mxu0 %v420
      %490 = vmatpush.bf16.msra.mxu0 %v419
      %491 = vmatpush.bf16.msra.mxu0 %v418
      %492 = vmatpush.bf16.msra.mxu0 %v417
      %493 = vmatpush.bf16.msra.mxu0 %v416
      %494 = vmatmul.bf16.gmra.mxu0 %v287
      %v495 = vpop.f32.mrf.mxu0
      %v496 = vadd.f32 %v482, %v495
      %v497 = vpop.f32.mrf.mxu0
      %v498 = vadd.f32 %v484, %v497
      %499 = vdwg.mxu0
      %500 = vmatpush.bf16.msra.mxu0 0
      %501 = vmatpush.bf16.msra.mxu0 0
      %502 = vmatpush.bf16.msra.mxu0 0
      %503 = vmatpush.bf16.msra.mxu0 0
      %504 = vmatpush.bf16.msra.mxu0 0
      %505 = vmatpush.bf16.msra.mxu0 %v426
      %506 = vmatpush.bf16.msra.mxu0 %v425
      %507 = vmatpush.bf16.msra.mxu0 %v424
      %508 = vmatmul.bf16.gmra.mxu0 %v456
      %v509 = vpop.f32.mrf.mxu0
      %v510 = vadd.f32 %v496, %v509
      %v511 = vpop.f32.mrf.mxu0
      %v512 = vadd.f32 %v498, %v511
      %513 = vdwg.mxu0
      %vm514 = vcmask 64512
      %v515 = vsel %vm514, %v510, 0.0
      %516 = vadd.xlane.f32.xlu0 %v515
      %v517 = vpop.xlane.xlu0 %516
      %v518 = vsel %vm514, %v512, 0.0
      %519 = vadd.xlane.f32.xlu0 %v518
      %v520 = vpop.xlane.xlu0 %519
      %v521 = vrcp.pop 8.0
      %v522 = vmul.f32 8.0, %v521
      %v523 = vsub.f32 1.0, %v522
      %v524 = vmul.f32 %v521, %v523
      %v525 = vadd.f32 %v521, %v524
      %vm526 = vweird.f32 %v521
      %v527 = vsel %vm526, %v521, %v525
      %v528 = vmul.f32 %v517, %v527
      %v529 = vmul.f32 %v520, %v527
      %v530 = vsub.f32 %v510, %v528
      %v531 = vsub.f32 %v512, %v529
      %v532 = vmul.f32 %v530, %v530
      %v533 = vmul.f32 %v531, %v531
      %v534 = vsel %vm514, %v532, 0.0
      %535 = vadd.xlane.f32.xlu0 %v534
      %v536 = vpop.xlane.xlu0 %535
      %v537 = vsel %vm514, %v533, 0.0
      %538 = vadd.xlane.f32.xlu0 %v537
      %v539 = vpop.xlane.xlu0 %538
      %v540 = vmul.f32 %v536, %v527
      %v541 = vmul.f32 %v539, %v527
      %v542 = vadd.f32 %v540, 1e-05
      %v543 = vadd.f32 %v541, 1e-05
      %v544 = vrsqrt.pop %v542
      %v545 = vmul.f32 %v544, %v542
      %v546 = vmul.f32 %v545, %v544
      %v547 = vmul.f32 0.5, %v546
      %v548 = vsub.f32 1.5, %v547
      %v549 = vmul.f32 %v544, %v548
      %vm550 = vweird.f32 %v542
      %vm551 = vweird.f32 %v544
      %vm552 = vmor %vm550, %vm551
      %v553 = vsel %vm552, %v544, %v549
      %v554 = vrsqrt.pop %v543
      %v555 = vmul.f32 %v554, %v543
      %v556 = vmul.f32 %v555, %v554
      %v557 = vmul.f32 0.5, %v556
      %v558 = vsub.f32 1.5, %v557
      %v559 = vmul.f32 %v554, %v558
      %vm560 = vweird.f32 %v543
      %vm561 = vweird.f32 %v554
      %vm562 = vmor %vm560, %vm561
      %v563 = vsel %vm562, %v554, %v559
      %v564 = vmul.f32 %v530, %v553
      %v565 = vmul.f32 %v531, %v563
      %vm566 = vcmp.ge.f32.partialorder %v564, 0.0
      %vm567 = vcmp.ge.f32.partialorder %v565, 0.0
      %v568 = vmul.f32 %v564, 0.01
      %v569 = vmul.f32 %v565, 0.01
      %v570 = vsel %vm566, %v564, %v568
      %v571 = vsel %vm567, %v565, %v569
      %v572 = vpack.c.bf16 %v570, %v570
      %v573 = vpack.c.bf16 %v571, %v571
      %vm574 = vcmask 60416
      %575 = vst.msk [vmem:[%s201] sm:$0xf] %vm574, %v572
      %576 = vst.msk [vmem:[%s201 + $0x4] sm:$0xf] %vm574, %v573
      %p577 = scmp.lt.s32.totalorder %s18, 1
      %s578 = scalar_select %p577, %s18, 1
      %p579 = scmp.lt.s32.totalorder %s19, 0
      %s580 = scalar_select %p579, %s19, 0
      %s581 = smul.addr %s578, 2
      %s582 = sadd.s32 %s580, %s581
      %s583 = smul.addr %s582, 4
      %s584 = scalar_lea.vmem %s3, %s583
      // Predicated region
      $region33: #{forward.18} parent=31 // pred_check
        %p585 = pneg %p116
      $region34: #{forward.18} parent=31 // pred_check_branch
        %587 = sbr.rel (%p585) target = $region36
      $region35: #{forward.18} parent=31 // pred_region
        _
      $region36: #{forward.18} parent=31 // pred_fallthru
        _
    $region32: #{forward.18} parent=5 // pred_fallthru
      _
    %p588 = scmp.le.s32.totalorder 2, %s9
    // Predicated region
    $region37: #{forward.18} parent=5 // pred_check
      %p589 = pneg %p588
    $region38: #{forward.18} parent=5 // pred_check_branch
      %591 = sbr.rel (%p589) target = $region40
    $region39: #{forward.18} parent=5 // pred_region
      %s592 = ssub.s32 %s9, 2
      // Predicated region
      $region41: #{forward.18} parent=39 // pred_check
        %p593 = pneg %p122
      $region42: #{forward.18} parent=39 // pred_check_branch
        %595 = sbr.rel (%p593) target = $region44
      $region43: #{forward.18} parent=39 // pred_region
        %p596 = scmp.lt.s32.totalorder %s20, 1
        %s597 = scalar_select %p596, %s20, 1
        %p598 = scmp.lt.s32.totalorder %s21, 0
        %s599 = scalar_select %p598, %s21, 0
        %s600 = smul.addr %s597, 2
        %s601 = sadd.s32 %s599, %s600
        %s602 = smul.addr %s601, 4
        %s603 = scalar_lea.vmem %s3, %s602
      $region44: #{forward.18} parent=39 // pred_fallthru
        _
    $region40: #{forward.18} parent=5 // pred_fallthru
      _
  $region6: #{forward.18} parent=0 // loop_footer
    %s13 = sadd.s32 1, %s9
  $region7: #{forward.18} parent=0 // loop_footer_branch
    %8 = sbr.rel target = $region3
  $region8: #{forward.18} parent=0 // loop_exit
    _

// kernel: forward.19
$region0: #{forward.19}
  #allocation0 [shape = 'u32[]', space=smem, size = 0x4, offset = 0x4, fixed_abs, tag = 'smem constant byte address 0x4 - core index']
  #allocation1 [shape = 'u32[72,128]{1,0:T(1,128)}', space=vmem, size = 0x9000, scoped, tag = 'internal scratch']
  %s0 = inlined_call_operand.vmem [shape: bf16[2,128,8], index: 0, kind: input, shape index: {}]
  %s1 = inlined_call_operand.vmem [shape: bf16[64,128], index: 1, kind: input, shape index: {}]
  %s2 = inlined_call_operand.vmem [shape: f32[64,1], index: 2, kind: input, shape index: {}]
  %s3 = inlined_call_operand.vmem [shape: bf16[2,64,8], index: 3, kind: output, shape index: {}]
  %s4 = sld [smem:[#allocation0]]
  $region45: #{forward.19} parent=0
    _
  %s6 = ssub.s32 1, %s4
  %s7 = scalar_select 0, %s6, %s4
  loop: start=0, step=1, limit=4
  $region2: #{forward.19} parent=0 // loop_pre_header
    _
  $region3: #{forward.19} parent=0 // loop_header
    %s9 = sphi 0, %s13
    %p10 = scmp.ge.s32.totalorder %s9, 4
    %s16 = sphi 0, %s28
    %s17 = sphi 0, %s24
    %s18 = sphi 0, %s16
    %s19 = sphi 0, %s17
    %s20 = sphi 0, %s18
    %s21 = sphi 0, %s19
    %s33 = sphi 0, %s35
    %s36 = sphi 0, %s33
    %s37 = sphi 0, %s36
    %s53 = sphi 0, %s37
    %s57 = sphi 0, %s57
    %s59 = sphi 0, %s57
    %s60 = sphi 0, %s59
    %s74 = sphi 0, %s60
    %s78 = sphi 0, %s78
    %s80 = sphi 0, %s78
    %s81 = sphi 0, %s80
    %s95 = sphi 0, %s81
    %s103 = sphi 0, %s105
    %s106 = sphi 0, %s103
    %s107 = sphi 0, %s106
    %s123 = sphi 0, %s107
  $region4: #{forward.19} parent=0 // loop_header_branch
    %12 = sbr.rel (%p10) target = $region8
  $region5: #{forward.19} parent=0 // loop_body
    %s14 = ssub.s32 %s9, 1
    %s15 = ssub.s32 %s9, 2
    %s22 = sadd.s32 1, %s17
    %p23 = scmp.ge.s32.totalorder %s22, 1
    %s24 = scalar_select %p23, 0, %s22
    %s25 = sadd.s32 1, %s16
    %s26 = scalar_select %p23, %s25, %s16
    %p27 = scmp.ge.s32.totalorder %s26, 2
    %s28 = scalar_select %p27, 0, %s26
    %s29 = ssub.s32 %s16, %s28
    %s30 = ssub.s32 %s17, %s24
    %s31 = sor.u32 %s29, %s30
    %p32 = scmp.eq.s32.totalorder %s31, 0
    %s34 = sadd.s32 %s33, 1
    %s35 = scalar_select %p32, %s33, %s34
    %p38 = pneg %p32
    %p39 = scmp.eq.s32.totalorder %s9, 1
    %p40 = por %p38, %p39
    %p41 = scmp.ne.s32.totalorder %s33, %s36
    %p42 = scmp.eq.s32.totalorder %s9, 0
    %p43 = por %p41, %p42
    %p44 = scmp.ne.s32.totalorder %s33, %s36
    %p45 = scmp.eq.s32.totalorder %s14, 1
    %p46 = por %p44, %p45
    %p47 = scmp.ne.s32.totalorder %s36, %s37
    %p48 = scmp.eq.s32.totalorder %s14, 0
    %p49 = por %p47, %p48
    %p50 = scmp.ne.s32.totalorder %s36, %s37
    %p51 = scmp.eq.s32.totalorder %s15, 1
    %p52 = por %p50, %p51
    %p54 = scmp.ne.s32.totalorder %s37, %s53
    %p55 = scmp.eq.s32.totalorder %s15, 0
    %p56 = por %p54, %p55
    %s58 = sadd.s32 %s57, 1
    %p61 = scmp.eq.s32.totalorder %s9, 1
    %p62 = scmp.ne.s32.totalorder %s57, %s59
    %p63 = scmp.eq.s32.totalorder %s9, 0
    %p64 = por %p62, %p63
    %p65 = scmp.ne.s32.totalorder %s57, %s59
    %p66 = scmp.eq.s32.totalorder %s14, 1
    %p67 = por %p65, %p66
    %p68 = scmp.ne.s32.totalorder %s59, %s60
    %p69 = scmp.eq.s32.totalorder %s14, 0
    %p70 = por %p68, %p69
    %p71 = scmp.ne.s32.totalorder %s59, %s60
    %p72 = scmp.eq.s32.totalorder %s15, 1
    %p73 = por %p71, %p72
    %p75 = scmp.ne.s32.totalorder %s60, %s74
    %p76 = scmp.eq.s32.totalorder %s15, 0
    %p77 = por %p75, %p76
    %s79 = sadd.s32 %s78, 1
    %p82 = scmp.eq.s32.totalorder %s9, 1
    %p83 = scmp.ne.s32.totalorder %s78, %s80
    %p84 = scmp.eq.s32.totalorder %s9, 0
    %p85 = por %p83, %p84
    %p86 = scmp.ne.s32.totalorder %s78, %s80
    %p87 = scmp.eq.s32.totalorder %s14, 1
    %p88 = por %p86, %p87
    %p89 = scmp.ne.s32.totalorder %s80, %s81
    %p90 = scmp.eq.s32.totalorder %s14, 0
    %p91 = por %p89, %p90
    %p92 = scmp.ne.s32.totalorder %s80, %s81
    %p93 = scmp.eq.s32.totalorder %s15, 1
    %p94 = por %p92, %p93
    %p96 = scmp.ne.s32.totalorder %s81, %s95
    %p97 = scmp.eq.s32.totalorder %s15, 0
    %p98 = por %p96, %p97
    %s99 = ssub.s32 %s16, %s28
    %s100 = ssub.s32 %s17, %s24
    %s101 = sor.u32 %s99, %s100
    %p102 = scmp.eq.s32.totalorder %s101, 0
    %s104 = sadd.s32 %s103, 1
    %s105 = scalar_select %p102, %s103, %s104
    %p108 = pneg %p102
    %p109 = scmp.eq.s32.totalorder %s9, 1
    %p110 = por %p108, %p109
    %p111 = scmp.ne.s32.totalorder %s103, %s106
    %p112 = scmp.eq.s32.totalorder %s9, 0
    %p113 = por %p111, %p112
    %p114 = scmp.ne.s32.totalorder %s103, %s106
    %p115 = scmp.eq.s32.totalorder %s14, 1
    %p116 = por %p114, %p115
    %p117 = scmp.ne.s32.totalorder %s106, %s107
    %p118 = scmp.eq.s32.totalorder %s14, 0
    %p119 = por %p117, %p118
    %p120 = scmp.ne.s32.totalorder %s106, %s107
    %p121 = scmp.eq.s32.totalorder %s15, 1
    %p122 = por %p120, %p121
    %p124 = scmp.ne.s32.totalorder %s107, %s123
    %p125 = scmp.eq.s32.totalorder %s15, 0
    %p126 = por %p124, %p125
    %p127 = scmp.le.s32.totalorder 1, %s9
    %p128 = scmp.lt.s32.totalorder %s9, 3
    %p129 = pnand %p127, %p128
    %p130 = pneg %p129
    // Predicated region
    $region9: #{forward.19} parent=5 // pred_check
      _
    $region10: #{forward.19} parent=5 // pred_check_branch
      %132 = sbr.rel (%p129) target = $region12
    $region11: #{forward.19} parent=5 // pred_region
      %s133 = ssub.s32 %s9, 1
      // Predicated region
      $region13: #{forward.19} parent=11 // pred_check
        %p134 = pneg %p70
      $region14: #{forward.19} parent=11 // pred_check_branch
        %136 = sbr.rel (%p134) target = $region16
      $region15: #{forward.19} parent=11 // pred_region
        _
      $region16: #{forward.19} parent=11 // pred_fallthru
        _
      // Predicated region
      $region17: #{forward.19} parent=11 // pred_check
        %p137 = pneg %p91
      $region18: #{forward.19} parent=11 // pred_check_branch
        %139 = sbr.rel (%p137) target = $region20
      $region19: #{forward.19} parent=11 // pred_region
        _
      $region20: #{forward.19} parent=11 // pred_fallthru
        _
    $region12: #{forward.19} parent=5 // pred_fallthru
      _
    %p140 = scmp.lt.s32.totalorder %s9, 2
    // Predicated region
    $region21: #{forward.19} parent=5 // pred_check
      %p141 = pneg %p140
    $region22: #{forward.19} parent=5 // pred_check_branch
      %143 = sbr.rel (%p141) target = $region24
    $region23: #{forward.19} parent=5 // pred_region
      // Predicated region
      $region25: #{forward.19} parent=23 // pred_check
        %p144 = pneg %p43
      $region26: #{forward.19} parent=23 // pred_check_branch
        %146 = sbr.rel (%p144) target = $region28
      $region27: #{forward.19} parent=23 // pred_region
        %p147 = scmp.lt.s32.totalorder %s16, 1
        %s148 = scalar_select %p147, %s16, 1
        %p149 = scmp.lt.s32.totalorder %s17, 0
        %s150 = scalar_select %p149, %s17, 0
        %s151 = smul.addr %s148, 16
        %s152 = sadd.s32 %s150, %s151
        %s153 = smul.addr %s152, 4
        %s154 = scalar_lea.vmem %s0, %s153
      $region28: #{forward.19} parent=23 // pred_fallthru
        _
    $region24: #{forward.19} parent=5 // pred_fallthru
      _
    %p155 = scmp.le.s32.totalorder 1, %s9
    %p156 = scmp.lt.s32.totalorder %s9, 3
    %p157 = pnand %p155, %p156
    %p158 = pneg %p157
    // Predicated region
    $region29: #{forward.19} parent=5 // pred_check
      _
    $region30: #{forward.19} parent=5 // pred_check_branch
      %160 = sbr.rel (%p157) target = $region32
    $region31: #{forward.19} parent=5 // pred_region
      %s161 = ssub.s32 %s9, 1
      %p162 = scmp.lt.s32.totalorder %s18, 1
      %s163 = scalar_select %p162, %s18, 1
      %p164 = scmp.lt.s32.totalorder %s19, 0
      %s165 = scalar_select %p164, %s19, 0
      %s166 = smul.addr %s163, 16
      %s167 = sadd.s32 %s165, %s166
      %s168 = smul.addr %s167, 4
      %s169 = scalar_lea.vmem %s0, %s168
      %p170 = pneg %p49
      %p171 = pneg %p46
      %p172 = pneg %p70
      %p173 = pneg %p67
      %p174 = pneg %p91
      %p175 = pneg %p88
      %p176 = pneg %p119
      %p177 = pneg %p116
      %p178 = scmp.lt.s32.totalorder %s18, 1
      %s179 = scalar_select %p178, %s18, 1
      %p180 = scmp.lt.s32.totalorder %s19, 0
      %s181 = scalar_select %p180, %s19, 0
      %s182 = smul.addr %s179, 8
      %s183 = sadd.s32 %s181, %s182
      %s184 = smul.addr %s183, 4
      %s185 = scalar_lea.vmem %s3, %s184
      %p186 = scmp.lt.s32.totalorder %s18, 1
      %s187 = scalar_select %p186, %s18, 1
      %p188 = scmp.lt.s32.totalorder %s19, 0
      %s189 = scalar_select %p188, %s19, 0
      %s190 = smul.addr %s187, 16
      %s191 = sadd.s32 %s189, %s190
      %s192 = smul.addr %s191, 4
      %s193 = scalar_lea.vmem %s0, %s192
      %p194 = scmp.lt.s32.totalorder %s18, 1
      %s195 = scalar_select %p194, %s18, 1
      %p196 = scmp.lt.s32.totalorder %s19, 0
      %s197 = scalar_select %p196, %s19, 0
      %s198 = smul.addr %s195, 8
      %s199 = sadd.s32 %s197, %s198
      %s200 = smul.addr %s199, 4
      %s201 = scalar_lea.vmem %s3, %s200
      %v202 = vld [vmem:[%s193] sm:$0xf]
      %v203 = vld [vmem:[%s193 + $0x4] sm:$0xf]
      %v204 = vld [vmem:[%s193 + $0x8] sm:$0xf]
      %v205 = vld [vmem:[%s193 + $0xc] sm:$0xf]
      %v206 = vld [vmem:[%s193 + $0x10] sm:$0xf]
      %v207 = vld [vmem:[%s193 + $0x14] sm:$0xf]
      %v208 = vld [vmem:[%s193 + $0x18] sm:$0xf]
      %v209 = vld [vmem:[%s193 + $0x1c] sm:$0xf]
      %v210 = vld [vmem:[%s193 + $0x20] sm:$0xf]
      %v211 = vld [vmem:[%s193 + $0x24] sm:$0xf]
      %v212 = vld [vmem:[%s193 + $0x28] sm:$0xf]
      %v213 = vld [vmem:[%s193 + $0x2c] sm:$0xf]
      %v214 = vld [vmem:[%s193 + $0x30] sm:$0xf]
      %v215 = vld [vmem:[%s193 + $0x34] sm:$0xf]
      %v216 = vld [vmem:[%s193 + $0x38] sm:$0xf]
      %v217 = vld [vmem:[%s193 + $0x3c] sm:$0xf]
      %v218 = vld [vmem:[%s1] sm:$0xf]
      %v219 = vld [vmem:[%s1 + $0x4] sm:$0xf]
      %v220 = vld [vmem:[%s1 + $0x8] sm:$0xf]
      %v221 = vld [vmem:[%s1 + $0xc] sm:$0xf]
      %v222 = vld [vmem:[%s1 + $0x10] sm:$0xf]
      %v223 = vld [vmem:[%s1 + $0x14] sm:$0xf]
      %v224 = vld [vmem:[%s1 + $0x18] sm:$0xf]
      %v225 = vld [vmem:[%s1 + $0x1c] sm:$0xf]
      %v226 = vld [vmem:[%s2] sm:$0xff]
      %v227 = vld [vmem:[%s2 + $0x8] sm:$0xff]
      %v228 = vld [vmem:[%s2 + $0x10] sm:$0xff]
      %v229 = vld [vmem:[%s2 + $0x18] sm:$0xff]
      %v230 = vld [vmem:[%s2 + $0x20] sm:$0xff]
      %v231 = vld [vmem:[%s2 + $0x28] sm:$0xff]
      %v232 = vld [vmem:[%s2 + $0x30] sm:$0xff]
      %v233 = vld [vmem:[%s2 + $0x38] sm:$0xff]
      %235 = vset.pattern.permute.xlu0 0
      %236 = vperm.xlu0 %235, %v226
      %v237 = vpop.permute.xlu0 %236
      %240 = vset.pattern.permute.xlu0 0
      %241 = vperm.xlu0 %240, %v227
      %v242 = vpop.permute.xlu0 %241
      %245 = vset.pattern.permute.xlu0 0
      %246 = vperm.xlu0 %245, %v228
      %v247 = vpop.permute.xlu0 %246
      %250 = vset.pattern.permute.xlu0 0
      %251 = vperm.xlu0 %250, %v229
      %v252 = vpop.permute.xlu0 %251
      %255 = vset.pattern.permute.xlu0 0
      %256 = vperm.xlu0 %255, %v230
      %v257 = vpop.permute.xlu0 %256
      %260 = vset.pattern.permute.xlu0 0
      %261 = vperm.xlu0 %260, %v231
      %v262 = vpop.permute.xlu0 %261
      %265 = vset.pattern.permute.xlu0 0
      %266 = vperm.xlu0 %265, %v232
      %v267 = vpop.permute.xlu0 %266
      %270 = vset.pattern.permute.xlu0 0
      %271 = vperm.xlu0 %270, %v233
      %v272 = vpop.permute.xlu0 %271
      %v282 = vunpack.c.l.b16 %v218
      %v283 = vunpack.c.l.b16 %v219
      %v284 = vunpack.c.l.b16 %v220
      %v285 = vunpack.c.l.b16 %v221
      %v286 = vunpack.c.l.b16 %v222
      %v287 = vunpack.c.l.b16 %v223
      %v288 = vunpack.c.l.b16 %v224
      %v289 = vunpack.c.l.b16 %v225
      %v290 = vpack.c.b16 %v283, %v282
      %v291 = vpack.c.b16 %v285, %v284
      %v292 = vpack.c.b16 %v287, %v286
      %v293 = vpack.c.b16 %v289, %v288
      %v314 = vunpack.c.l.b16 %v202
      %v315 = vunpack.c.l.b16 %v203
      %v316 = vunpack.c.l.b16 %v204
      %v317 = vunpack.c.l.b16 %v205
      %v318 = vunpack.c.l.b16 %v206
      %v319 = vunpack.c.l.b16 %v207
      %v320 = vunpack.c.l.b16 %v208
      %v321 = vunpack.c.l.b16 %v209
      %v322 = vunpack.c.l.b16 %v210
      %v323 = vunpack.c.l.b16 %v211
      %v324 = vunpack.c.l.b16 %v212
      %v325 = vunpack.c.l.b16 %v213
      %v326 = vunpack.c.l.b16 %v214
      %v327 = vunpack.c.l.b16 %v215
      %v328 = vunpack.c.l.b16 %v216
      %v329 = vunpack.c.l.b16 %v217
      %v330 = vpack.c.b16 %v315, %v314
      %v331 = vpack.c.b16 %v317, %v316
      %v332 = vpack.c.b16 %v319, %v318
      %v333 = vpack.c.b16 %v321, %v320
      %v334 = vpack.c.b16 %v323, %v322
      %v335 = vpack.c.b16 %v325, %v324
      %v336 = vpack.c.b16 %v327, %v326
      %v337 = vpack.c.b16 %v329, %v328
      %346 = vmatpush.bf16.msra.mxu0 %v337
      %347 = vmatpush.bf16.msra.mxu0 %v336
      %348 = vmatpush.bf16.msra.mxu0 %v335
      %349 = vmatpush.bf16.msra.mxu0 %v334
      %350 = vmatpush.bf16.msra.mxu0 %v333
      %351 = vmatpush.bf16.msra.mxu0 %v332
      %352 = vmatpush.bf16.msra.mxu0 %v331
      %353 = vmatpush.bf16.msra.mxu0 %v330
      %354 = vmatmul.bf16.gmra.mxu0 %v290
      %v355 = vpop.f32.mrf.mxu0
      %v356 = vadd.f32 %v237, %v355
      %v357 = vpop.f32.mrf.mxu0
      %v358 = vadd.f32 %v242, %v357
      %359 = vmatmul.bf16.gmra.mxu0 %v291
      %v360 = vpop.f32.mrf.mxu0
      %v361 = vadd.f32 %v247, %v360
      %v362 = vpop.f32.mrf.mxu0
      %v363 = vadd.f32 %v252, %v362
      %364 = vmatmul.bf16.gmra.mxu0 %v292
      %v365 = vpop.f32.mrf.mxu0
      %v366 = vadd.f32 %v257, %v365
      %v367 = vpop.f32.mrf.mxu0
      %v368 = vadd.f32 %v262, %v367
      %369 = vmatmul.bf16.gmra.mxu0 %v293
      %v370 = vpop.f32.mrf.mxu0
      %v371 = vadd.f32 %v267, %v370
      %v372 = vpop.f32.mrf.mxu0
      %v373 = vadd.f32 %v272, %v372
      %374 = vdwg.mxu0
      %v375 = vpack.c.bf16 %v356, %v356
      %v376 = vpack.c.bf16 %v358, %v358
      %v377 = vpack.c.bf16 %v361, %v361
      %v378 = vpack.c.bf16 %v363, %v363
      %v379 = vpack.c.bf16 %v366, %v366
      %v380 = vpack.c.bf16 %v368, %v368
      %v381 = vpack.c.bf16 %v371, %v371
      %v382 = vpack.c.bf16 %v373, %v373
      %vm383 = vcmask 60416
      %384 = vst.msk [vmem:[%s201] sm:$0xf] %vm383, %v375
      %385 = vst.msk [vmem:[%s201 + $0x4] sm:$0xf] %vm383, %v376
      %386 = vst.msk [vmem:[%s201 + $0x8] sm:$0xf] %vm383, %v377
      %387 = vst.msk [vmem:[%s201 + $0xc] sm:$0xf] %vm383, %v378
      %388 = vst.msk [vmem:[%s201 + $0x10] sm:$0xf] %vm383, %v379
      %389 = vst.msk [vmem:[%s201 + $0x14] sm:$0xf] %vm383, %v380
      %390 = vst.msk [vmem:[%s201 + $0x18] sm:$0xf] %vm383, %v381
      %391 = vst.msk [vmem:[%s201 + $0x1c] sm:$0xf] %vm383, %v382
      %p392 = scmp.lt.s32.totalorder %s18, 1
      %s393 = scalar_select %p392, %s18, 1
      %p394 = scmp.lt.s32.totalorder %s19, 0
      %s395 = scalar_select %p394, %s19, 0
      %s396 = smul.addr %s393, 8
      %s397 = sadd.s32 %s395, %s396
      %s398 = smul.addr %s397, 4
      %s399 = scalar_lea.vmem %s3, %s398
      // Predicated region
      $region33: #{forward.19} parent=31 // pred_check
        %p400 = pneg %p116
      $region34: #{forward.19} parent=31 // pred_check_branch
        %402 = sbr.rel (%p400) target = $region36
      $region35: #{forward.19} parent=31 // pred_region
        _
      $region36: #{forward.19} parent=31 // pred_fallthru
        _
    $region32: #{forward.19} parent=5 // pred_fallthru
      _
    %p403 = scmp.le.s32.totalorder 2, %s9
    // Predicated region
    $region37: #{forward.19} parent=5 // pred_check
      %p404 = pneg %p403
    $region38: #{forward.19} parent=5 // pred_check_branch
      %406 = sbr.rel (%p404) target = $region40
    $region39: #{forward.19} parent=5 // pred_region
      %s407 = ssub.s32 %s9, 2
      // Predicated region
      $region41: #{forward.19} parent=39 // pred_check
        %p408 = pneg %p122
      $region42: #{forward.19} parent=39 // pred_check_branch
        %410 = sbr.rel (%p408) target = $region44
      $region43: #{forward.19} parent=39 // pred_region
        %p411 = scmp.lt.s32.totalorder %s20, 1
        %s412 = scalar_select %p411, %s20, 1
        %p413 = scmp.lt.s32.totalorder %s21, 0
        %s414 = scalar_select %p413, %s21, 0
        %s415 = smul.addr %s412, 8
        %s416 = sadd.s32 %s414, %s415
        %s417 = smul.addr %s416, 4
        %s418 = scalar_lea.vmem %s3, %s417
      $region44: #{forward.19} parent=39 // pred_fallthru
        _
    $region40: #{forward.19} parent=5 // pred_fallthru
      _
  $region6: #{forward.19} parent=0 // loop_footer
    %s13 = sadd.s32 1, %s9
  $region7: #{forward.19} parent=0 // loop_footer_branch
    %8 = sbr.rel target = $region3
  $region8: #{forward.19} parent=0 // loop_exit
    _

// kernel: forward.20
$region0: #{forward.20}
  #allocation0 [shape = 'u32[]', space=smem, size = 0x4, offset = 0x4, fixed_abs, tag = 'smem constant byte address 0x4 - core index']
  #allocation1 [shape = 'u32[72,128]{1,0:T(1,128)}', space=vmem, size = 0x9000, scoped, tag = 'internal scratch']
  %s0 = inlined_call_operand.vmem [shape: bf16[2,432,64], index: 0, kind: input, shape index: {}]
  %s1 = inlined_call_operand.vmem [shape: bf16[8,432], index: 1, kind: input, shape index: {}]
  %s2 = inlined_call_operand.vmem [shape: f32[8,1], index: 2, kind: input, shape index: {}]
  %s3 = inlined_call_operand.vmem [shape: bf16[2,8,64], index: 3, kind: output, shape index: {}]
  %s4 = sld [smem:[#allocation0]]
  $region45: #{forward.20} parent=0
    _
  %s6 = ssub.s32 1, %s4
  %s7 = scalar_select 0, %s6, %s4
  loop: start=0, step=1, limit=4
  $region2: #{forward.20} parent=0 // loop_pre_header
    _
  $region3: #{forward.20} parent=0 // loop_header
    %s9 = sphi 0, %s13
    %p10 = scmp.ge.s32.totalorder %s9, 4
    %s16 = sphi 0, %s28
    %s17 = sphi 0, %s24
    %s18 = sphi 0, %s16
    %s19 = sphi 0, %s17
    %s20 = sphi 0, %s18
    %s21 = sphi 0, %s19
    %s33 = sphi 0, %s35
    %s36 = sphi 0, %s33
    %s37 = sphi 0, %s36
    %s53 = sphi 0, %s37
    %s57 = sphi 0, %s57
    %s59 = sphi 0, %s57
    %s60 = sphi 0, %s59
    %s74 = sphi 0, %s60
    %s78 = sphi 0, %s78
    %s80 = sphi 0, %s78
    %s81 = sphi 0, %s80
    %s95 = sphi 0, %s81
    %s103 = sphi 0, %s105
    %s106 = sphi 0, %s103
    %s107 = sphi 0, %s106
    %s123 = sphi 0, %s107
  $region4: #{forward.20} parent=0 // loop_header_branch
    %12 = sbr.rel (%p10) target = $region8
  $region5: #{forward.20} parent=0 // loop_body
    %s14 = ssub.s32 %s9, 1
    %s15 = ssub.s32 %s9, 2
    %s22 = sadd.s32 1, %s17
    %p23 = scmp.ge.s32.totalorder %s22, 1
    %s24 = scalar_select %p23, 0, %s22
    %s25 = sadd.s32 1, %s16
    %s26 = scalar_select %p23, %s25, %s16
    %p27 = scmp.ge.s32.totalorder %s26, 2
    %s28 = scalar_select %p27, 0, %s26
    %s29 = ssub.s32 %s16, %s28
    %s30 = ssub.s32 %s17, %s24
    %s31 = sor.u32 %s29, %s30
    %p32 = scmp.eq.s32.totalorder %s31, 0
    %s34 = sadd.s32 %s33, 1
    %s35 = scalar_select %p32, %s33, %s34
    %p38 = pneg %p32
    %p39 = scmp.eq.s32.totalorder %s9, 1
    %p40 = por %p38, %p39
    %p41 = scmp.ne.s32.totalorder %s33, %s36
    %p42 = scmp.eq.s32.totalorder %s9, 0
    %p43 = por %p41, %p42
    %p44 = scmp.ne.s32.totalorder %s33, %s36
    %p45 = scmp.eq.s32.totalorder %s14, 1
    %p46 = por %p44, %p45
    %p47 = scmp.ne.s32.totalorder %s36, %s37
    %p48 = scmp.eq.s32.totalorder %s14, 0
    %p49 = por %p47, %p48
    %p50 = scmp.ne.s32.totalorder %s36, %s37
    %p51 = scmp.eq.s32.totalorder %s15, 1
    %p52 = por %p50, %p51
    %p54 = scmp.ne.s32.totalorder %s37, %s53
    %p55 = scmp.eq.s32.totalorder %s15, 0
    %p56 = por %p54, %p55
    %s58 = sadd.s32 %s57, 1
    %p61 = scmp.eq.s32.totalorder %s9, 1
    %p62 = scmp.ne.s32.totalorder %s57, %s59
    %p63 = scmp.eq.s32.totalorder %s9, 0
    %p64 = por %p62, %p63
    %p65 = scmp.ne.s32.totalorder %s57, %s59
    %p66 = scmp.eq.s32.totalorder %s14, 1
    %p67 = por %p65, %p66
    %p68 = scmp.ne.s32.totalorder %s59, %s60
    %p69 = scmp.eq.s32.totalorder %s14, 0
    %p70 = por %p68, %p69
    %p71 = scmp.ne.s32.totalorder %s59, %s60
    %p72 = scmp.eq.s32.totalorder %s15, 1
    %p73 = por %p71, %p72
    %p75 = scmp.ne.s32.totalorder %s60, %s74
    %p76 = scmp.eq.s32.totalorder %s15, 0
    %p77 = por %p75, %p76
    %s79 = sadd.s32 %s78, 1
    %p82 = scmp.eq.s32.totalorder %s9, 1
    %p83 = scmp.ne.s32.totalorder %s78, %s80
    %p84 = scmp.eq.s32.totalorder %s9, 0
    %p85 = por %p83, %p84
    %p86 = scmp.ne.s32.totalorder %s78, %s80
    %p87 = scmp.eq.s32.totalorder %s14, 1
    %p88 = por %p86, %p87
    %p89 = scmp.ne.s32.totalorder %s80, %s81
    %p90 = scmp.eq.s32.totalorder %s14, 0
    %p91 = por %p89, %p90
    %p92 = scmp.ne.s32.totalorder %s80, %s81
    %p93 = scmp.eq.s32.totalorder %s15, 1
    %p94 = por %p92, %p93
    %p96 = scmp.ne.s32.totalorder %s81, %s95
    %p97 = scmp.eq.s32.totalorder %s15, 0
    %p98 = por %p96, %p97
    %s99 = ssub.s32 %s16, %s28
    %s100 = ssub.s32 %s17, %s24
    %s101 = sor.u32 %s99, %s100
    %p102 = scmp.eq.s32.totalorder %s101, 0
    %s104 = sadd.s32 %s103, 1
    %s105 = scalar_select %p102, %s103, %s104
    %p108 = pneg %p102
    %p109 = scmp.eq.s32.totalorder %s9, 1
    %p110 = por %p108, %p109
    %p111 = scmp.ne.s32.totalorder %s103, %s106
    %p112 = scmp.eq.s32.totalorder %s9, 0
    %p113 = por %p111, %p112
    %p114 = scmp.ne.s32.totalorder %s103, %s106
    %p115 = scmp.eq.s32.totalorder %s14, 1
    %p116 = por %p114, %p115
    %p117 = scmp.ne.s32.totalorder %s106, %s107
    %p118 = scmp.eq.s32.totalorder %s14, 0
    %p119 = por %p117, %p118
    %p120 = scmp.ne.s32.totalorder %s106, %s107
    %p121 = scmp.eq.s32.totalorder %s15, 1
    %p122 = por %p120, %p121
    %p124 = scmp.ne.s32.totalorder %s107, %s123
    %p125 = scmp.eq.s32.totalorder %s15, 0
    %p126 = por %p124, %p125
    %p127 = scmp.le.s32.totalorder 1, %s9
    %p128 = scmp.lt.s32.totalorder %s9, 3
    %p129 = pnand %p127, %p128
    %p130 = pneg %p129
    // Predicated region
    $region9: #{forward.20} parent=5 // pred_check
      _
    $region10: #{forward.20} parent=5 // pred_check_branch
      %132 = sbr.rel (%p129) target = $region12
    $region11: #{forward.20} parent=5 // pred_region
      %s133 = ssub.s32 %s9, 1
      // Predicated region
      $region13: #{forward.20} parent=11 // pred_check
        %p134 = pneg %p70
      $region14: #{forward.20} parent=11 // pred_check_branch
        %136 = sbr.rel (%p134) target = $region16
      $region15: #{forward.20} parent=11 // pred_region
        _
      $region16: #{forward.20} parent=11 // pred_fallthru
        _
      // Predicated region
      $region17: #{forward.20} parent=11 // pred_check
        %p137 = pneg %p91
      $region18: #{forward.20} parent=11 // pred_check_branch
        %139 = sbr.rel (%p137) target = $region20
      $region19: #{forward.20} parent=11 // pred_region
        _
      $region20: #{forward.20} parent=11 // pred_fallthru
        _
    $region12: #{forward.20} parent=5 // pred_fallthru
      _
    %p140 = scmp.lt.s32.totalorder %s9, 2
    // Predicated region
    $region21: #{forward.20} parent=5 // pred_check
      %p141 = pneg %p140
    $region22: #{forward.20} parent=5 // pred_check_branch
      %143 = sbr.rel (%p141) target = $region24
    $region23: #{forward.20} parent=5 // pred_region
      // Predicated region
      $region25: #{forward.20} parent=23 // pred_check
        %p144 = pneg %p43
      $region26: #{forward.20} parent=23 // pred_check_branch
        %146 = sbr.rel (%p144) target = $region28
      $region27: #{forward.20} parent=23 // pred_region
        %p147 = scmp.lt.s32.totalorder %s16, 1
        %s148 = scalar_select %p147, %s16, 1
        %p149 = scmp.lt.s32.totalorder %s17, 0
        %s150 = scalar_select %p149, %s17, 0
        %s151 = smul.addr %s148, 54
        %s152 = sadd.s32 %s150, %s151
        %s153 = smul.addr %s152, 4
        %s154 = scalar_lea.vmem %s0, %s153
      $region28: #{forward.20} parent=23 // pred_fallthru
        _
    $region24: #{forward.20} parent=5 // pred_fallthru
      _
    %p155 = scmp.le.s32.totalorder 1, %s9
    %p156 = scmp.lt.s32.totalorder %s9, 3
    %p157 = pnand %p155, %p156
    %p158 = pneg %p157
    // Predicated region
    $region29: #{forward.20} parent=5 // pred_check
      _
    $region30: #{forward.20} parent=5 // pred_check_branch
      %160 = sbr.rel (%p157) target = $region32
    $region31: #{forward.20} parent=5 // pred_region
      %s161 = ssub.s32 %s9, 1
      %p162 = scmp.lt.s32.totalorder %s18, 1
      %s163 = scalar_select %p162, %s18, 1
      %p164 = scmp.lt.s32.totalorder %s19, 0
      %s165 = scalar_select %p164, %s19, 0
      %s166 = smul.addr %s163, 54
      %s167 = sadd.s32 %s165, %s166
      %s168 = smul.addr %s167, 4
      %s169 = scalar_lea.vmem %s0, %s168
      %p170 = pneg %p49
      %p171 = pneg %p46
      %p172 = pneg %p70
      %p173 = pneg %p67
      %p174 = pneg %p91
      %p175 = pneg %p88
      %p176 = pneg %p119
      %p177 = pneg %p116
      %p178 = scmp.lt.s32.totalorder %s18, 1
      %s179 = scalar_select %p178, %s18, 1
      %p180 = scmp.lt.s32.totalorder %s19, 0
      %s181 = scalar_select %p180, %s19, 0
      %s182 = sadd.s32 %s181, %s179
      %s183 = smul.addr %s182, 4
      %s184 = scalar_lea.vmem %s3, %s183
      %p185 = scmp.lt.s32.totalorder %s18, 1
      %s186 = scalar_select %p185, %s18, 1
      %p187 = scmp.lt.s32.totalorder %s19, 0
      %s188 = scalar_select %p187, %s19, 0
      %s189 = smul.addr %s186, 54
      %s190 = sadd.s32 %s188, %s189
      %s191 = smul.addr %s190, 4
      %s192 = scalar_lea.vmem %s0, %s191
      %p193 = scmp.lt.s32.totalorder %s18, 1
      %s194 = scalar_select %p193, %s18, 1
      %p195 = scmp.lt.s32.totalorder %s19, 0
      %s196 = scalar_select %p195, %s19, 0
      %s197 = sadd.s32 %s196, %s194
      %s198 = smul.addr %s197, 4
      %s199 = scalar_lea.vmem %s3, %s198
      %v201 = vld [vmem:[%s192] sm:$0xf]
      %v202 = vld [vmem:[%s192 + $0x4] sm:$0xf]
      %v203 = vld [vmem:[%s192 + $0x8] sm:$0xf]
      %v204 = vld [vmem:[%s192 + $0xc] sm:$0xf]
      %v205 = vld [vmem:[%s192 + $0x10] sm:$0xf]
      %v206 = vld [vmem:[%s192 + $0x14] sm:$0xf]
      %v207 = vld [vmem:[%s192 + $0x18] sm:$0xf]
      %v208 = vld [vmem:[%s192 + $0x1c] sm:$0xf]
      %v209 = vld [vmem:[%s192 + $0x20] sm:$0xf]
      %v210 = vld [vmem:[%s192 + $0x24] sm:$0xf]
      %v211 = vld [vmem:[%s192 + $0x28] sm:$0xf]
      %v212 = vld [vmem:[%s192 + $0x2c] sm:$0xf]
      %v213 = vld [vmem:[%s192 + $0x30] sm:$0xf]
      %v214 = vld [vmem:[%s192 + $0x34] sm:$0xf]
      %v215 = vld [vmem:[%s192 + $0x38] sm:$0xf]
      %v216 = vld [vmem:[%s192 + $0x3c] sm:$0xf]
      %v217 = vld [vmem:[%s192 + $0x40] sm:$0xf]
      %v218 = vld [vmem:[%s192 + $0x44] sm:$0xf]
      %v219 = vld [vmem:[%s192 + $0x48] sm:$0xf]
      %v220 = vld [vmem:[%s192 + $0x4c] sm:$0xf]
      %v221 = vld [vmem:[%s192 + $0x50] sm:$0xf]
      %v222 = vld [vmem:[%s192 + $0x54] sm:$0xf]
      %v223 = vld [vmem:[%s192 + $0x58] sm:$0xf]
      %v224 = vld [vmem:[%s192 + $0x5c] sm:$0xf]
      %v225 = vld [vmem:[%s192 + $0x60] sm:$0xf]
      %v226 = vld [vmem:[%s192 + $0x64] sm:$0xf]
      %v227 = vld [vmem:[%s192 + $0x68] sm:$0xf]
      %v228 = vld [vmem:[%s192 + $0x6c] sm:$0xf]
      %v229 = vld [vmem:[%s192 + $0x70] sm:$0xf]
      %v230 = vld [vmem:[%s192 + $0x74] sm:$0xf]
      %v231 = vld [vmem:[%s192 + $0x78] sm:$0xf]
      %v232 = vld [vmem:[%s192 + $0x7c] sm:$0xf]
      %v233 = vld [vmem:[%s192 + $0x80] sm:$0xf]
      %v234 = vld [vmem:[%s192 + $0x84] sm:$0xf]
      %v235 = vld [vmem:[%s192 + $0x88] sm:$0xf]
      %v236 = vld [vmem:[%s192 + $0x8c] sm:$0xf]
      %v237 = vld [vmem:[%s192 + $0x90] sm:$0xf]
      %v238 = vld [vmem:[%s192 + $0x94] sm:$0xf]
      %v239 = vld [vmem:[%s192 + $0x98] sm:$0xf]
      %v240 = vld [vmem:[%s192 + $0x9c] sm:$0xf]
      %v241 = vld [vmem:[%s192 + $0xa0] sm:$0xf]
      %v242 = vld [vmem:[%s192 + $0xa4] sm:$0xf]
      %v243 = vld [vmem:[%s192 + $0xa8] sm:$0xf]
      %v244 = vld [vmem:[%s192 + $0xac] sm:$0xf]
      %v245 = vld [vmem:[%s192 + $0xb0] sm:$0xf]
      %v246 = vld [vmem:[%s192 + $0xb4] sm:$0xf]
      %v247 = vld [vmem:[%s192 + $0xb8] sm:$0xf]
      %v248 = vld [vmem:[%s192 + $0xbc] sm:$0xf]
      %v249 = vld [vmem:[%s192 + $0xc0] sm:$0xf]
      %v250 = vld [vmem:[%s192 + $0xc4] sm:$0xf]
      %v251 = vld [vmem:[%s192 + $0xc8] sm:$0xf]
      %v252 = vld [vmem:[%s192 + $0xcc] sm:$0xf]
      %v253 = vld [vmem:[%s192 + $0xd0] sm:$0xf]
      %v254 = vld [vmem:[%s192 + $0xd4] sm:$0xf]
      %v255 = vld [vmem:[%s1] sm:$0xff]
      %v256 = vld [vmem:[%s1 + $0x8] sm:$0xff]
      %v257 = vld [vmem:[%s2] sm:$0xff]
      %259 = vset.pattern.permute.xlu0 0
      %260 = vperm.xlu0 %259, %v257
      %v261 = vpop.permute.xlu0 %260
      %v265 = vunpack.c.l.b16 %v255
      %v266 = vunpack.c.h.b16 %v255
      %v267 = vunpack.c.l.b16 %v256
      %v268 = vunpack.c.h.b16 %v256
      %v269 = vpack.c.b16 %v265, %v265
      %v270 = vpack.c.b16 %v266, %v266
      %v271 = vpack.c.b16 %v267, %v267
      %v272 = vpack.c.b16 %v268, %v268
      %v330 = vunpack.c.l.b16 %v201
      %v331 = vunpack.c.l.b16 %v202
      %v332 = vunpack.c.l.b16 %v203
      %v333 = vunpack.c.l.b16 %v204
      %v334 = vunpack.c.l.b16 %v205
      %v335 = vunpack.c.l.b16 %v206
      %v336 = vunpack.c.l.b16 %v207
      %v337 = vunpack.c.l.b16 %v208
      %v338 = vunpack.c.l.b16 %v209
      %v339 = vunpack.c.l.b16 %v210
      %v340 = vunpack.c.l.b16 %v211
      %v341 = vunpack.c.l.b16 %v212
      %v342 = vunpack.c.l.b16 %v213
      %v343 = vunpack.c.l.b16 %v214
      %v344 = vunpack.c.l.b16 %v215
      %v345 = vunpack.c.l.b16 %v216
      %v346 = vunpack.c.l.b16 %v217
      %v347 = vunpack.c.l.b16 %v218
      %v348 = vunpack.c.l.b16 %v219
      %v349 = vunpack.c.l.b16 %v220
      %v350 = vunpack.c.l.b16 %v221
      %v351 = vunpack.c.l.b16 %v222
      %v352 = vunpack.c.l.b16 %v223
      %v353 = vunpack.c.l.b16 %v224
      %v354 = vunpack.c.l.b16 %v225
      %v355 = vunpack.c.l.b16 %v226
      %v356 = vunpack.c.l.b16 %v227
      %v357 = vunpack.c.l.b16 %v228
      %v358 = vunpack.c.l.b16 %v229
      %v359 = vunpack.c.l.b16 %v230
      %v360 = vunpack.c.l.b16 %v231
      %v361 = vunpack.c.l.b16 %v232
      %v362 = vunpack.c.l.b16 %v233
      %v363 = vunpack.c.l.b16 %v234
      %v364 = vunpack.c.l.b16 %v235
      %v365 = vunpack.c.l.b16 %v236
      %v366 = vunpack.c.l.b16 %v237
      %v367 = vunpack.c.l.b16 %v238
      %v368 = vunpack.c.l.b16 %v239
      %v369 = vunpack.c.l.b16 %v240
      %v370 = vunpack.c.l.b16 %v241
      %v371 = vunpack.c.l.b16 %v242
      %v372 = vunpack.c.l.b16 %v243
      %v373 = vunpack.c.l.b16 %v244
      %v374 = vunpack.c.l.b16 %v245
      %v375 = vunpack.c.l.b16 %v246
      %v376 = vunpack.c.l.b16 %v247
      %v377 = vunpack.c.l.b16 %v248
      %v378 = vunpack.c.l.b16 %v249
      %v379 = vunpack.c.l.b16 %v250
      %v380 = vunpack.c.l.b16 %v251
      %v381 = vunpack.c.l.b16 %v252
      %v382 = vunpack.c.l.b16 %v253
      %v383 = vunpack.c.l.b16 %v254
      %v384 = vpack.c.b16 %v331, %v330
      %v385 = vpack.c.b16 %v333, %v332
      %v386 = vpack.c.b16 %v335, %v334
      %v387 = vpack.c.b16 %v337, %v336
      %v388 = vpack.c.b16 %v339, %v338
      %v389 = vpack.c.b16 %v341, %v340
      %v390 = vpack.c.b16 %v343, %v342
      %v391 = vpack.c.b16 %v345, %v344
      %v392 = vpack.c.b16 %v347, %v346
      %v393 = vpack.c.b16 %v349, %v348
      %v394 = vpack.c.b16 %v351, %v350
      %v395 = vpack.c.b16 %v353, %v352
      %v396 = vpack.c.b16 %v355, %v354
      %v397 = vpack.c.b16 %v357, %v356
      %v398 = vpack.c.b16 %v359, %v358
      %v399 = vpack.c.b16 %v361, %v360
      %v400 = vpack.c.b16 %v363, %v362
      %v401 = vpack.c.b16 %v365, %v364
      %v402 = vpack.c.b16 %v367, %v366
      %v403 = vpack.c.b16 %v369, %v368
      %v404 = vpack.c.b16 %v371, %v370
      %v405 = vpack.c.b16 %v373, %v372
      %v406 = vpack.c.b16 %v375, %v374
      %v407 = vpack.c.b16 %v377, %v376
      %v408 = vpack.c.b16 %v379, %v378
      %v409 = vpack.c.b16 %v381, %v380
      %v410 = vpack.c.b16 %v383, %v382
      %vm438 = vcmask 392192
      %v440 = vsel %vm438, %v272, 0
      %442 = vmatpush.bf16.msra.mxu0 %v391
      %443 = vmatpush.bf16.msra.mxu0 %v390
      %444 = vmatpush.bf16.msra.mxu0 %v389
      %445 = vmatpush.bf16.msra.mxu0 %v388
      %446 = vmatpush.bf16.msra.mxu0 %v387
      %447 = vmatpush.bf16.msra.mxu0 %v386
      %448 = vmatpush.bf16.msra.mxu0 %v385
      %449 = vmatpush.bf16.msra.mxu0 %v384
      %450 = vmatmul.bf16.gmra.mxu0 %v269
      %v451 = vpop.f32.mrf.mxu0
      %v452 = vadd.f32 %v261, %v451
      %v453 = vpop.f32.mrf.mxu0
      %454 = vdwg.mxu0
      %455 = vmatpush.bf16.msra.mxu0 %v399
      %456 = vmatpush.bf16.msra.mxu0 %v398
      %457 = vmatpush.bf16.msra.mxu0 %v397
      %458 = vmatpush.bf16.msra.mxu0 %v396
      %459 = vmatpush.bf16.msra.mxu0 %v395
      %460 = vmatpush.bf16.msra.mxu0 %v394
      %461 = vmatpush.bf16.msra.mxu0 %v393
      %462 = vmatpush.bf16.msra.mxu0 %v392
      %463 = vmatmul.bf16.gmra.mxu0 %v270
      %v464 = vpop.f32.mrf.mxu0
      %v465 = vadd.f32 %v452, %v464
      %v466 = vpop.f32.mrf.mxu0
      %467 = vdwg.mxu0
      %468 = vmatpush.bf16.msra.mxu0 %v407
      %469 = vmatpush.bf16.msra.mxu0 %v406
      %470 = vmatpush.bf16.msra.mxu0 %v405
      %471 = vmatpush.bf16.msra.mxu0 %v404
      %472 = vmatpush.bf16.msra.mxu0 %v403
      %473 = vmatpush.bf16.msra.mxu0 %v402
      %474 = vmatpush.bf16.msra.mxu0 %v401
      %475 = vmatpush.bf16.msra.mxu0 %v400
      %476 = vmatmul.bf16.gmra.mxu0 %v271
      %v477 = vpop.f32.mrf.mxu0
      %v478 = vadd.f32 %v465, %v477
      %v479 = vpop.f32.mrf.mxu0
      %480 = vdwg.mxu0
      %481 = vmatpush.bf16.msra.mxu0 0
      %482 = vmatpush.bf16.msra.mxu0 0
      %483 = vmatpush.bf16.msra.mxu0 0
      %484 = vmatpush.bf16.msra.mxu0 0
      %485 = vmatpush.bf16.msra.mxu0 0
      %486 = vmatpush.bf16.msra.mxu0 %v410
      %487 = vmatpush.bf16.msra.mxu0 %v409
      %488 = vmatpush.bf16.msra.mxu0 %v408
      %489 = vmatmul.bf16.gmra.mxu0 %v440
      %v490 = vpop.f32.mrf.mxu0
      %v491 = vadd.f32 %v478, %v490
      %v492 = vpop.f32.mrf.mxu0
      %493 = vdwg.mxu0
      %vm494 = vcmask 523264
      %v495 = vsel %vm494, %v491, 0.0
      %496 = vadd.xlane.f32.xlu0 %v495
      %v497 = vpop.xlane.xlu0 %496
      %v498 = vrcp.pop 64.0
      %v499 = vmul.f32 64.0, %v498
      %v500 = vsub.f32 1.0, %v499
      %v501 = vmul.f32 %v498, %v500
      %v502 = vadd.f32 %v498, %v501
      %vm503 = vweird.f32 %v498
      %v504 = vsel %vm503, %v498, %v502
      %v505 = vmul.f32 %v497, %v504
      %v506 = vsub.f32 %v491, %v505
      %v507 = vmul.f32 %v506, %v506
      %v508 = vsel %vm494, %v507, 0.0
      %509 = vadd.xlane.f32.xlu0 %v508
      %v510 = vpop.xlane.xlu0 %509
      %v511 = vmul.f32 %v510, %v504
      %v512 = vadd.f32 %v511, 1e-05
      %v513 = vrsqrt.pop %v512
      %v514 = vmul.f32 %v513, %v512
      %v515 = vmul.f32 %v514, %v513
      %v516 = vmul.f32 0.5, %v515
      %v517 = vsub.f32 1.5, %v516
      %v518 = vmul.f32 %v513, %v517
      %vm519 = vweird.f32 %v512
      %vm520 = vweird.f32 %v513
      %vm521 = vmor %vm519, %vm520
      %v522 = vsel %vm521, %v513, %v518
      %v523 = vmul.f32 %v506, %v522
      %vm524 = vcmp.ge.f32.partialorder %v523, 0.0
      %v525 = vmul.f32 %v523, 0.01
      %v526 = vsel %vm524, %v523, %v525
      %v527 = vpack.c.bf16 %v526, %v526
      %vm528 = vcmask 519168
      %529 = vst.msk [vmem:[%s199] sm:$0xf] %vm528, %v527
      %p530 = scmp.lt.s32.totalorder %s18, 1
      %s531 = scalar_select %p530, %s18, 1
      %p532 = scmp.lt.s32.totalorder %s19, 0
      %s533 = scalar_select %p532, %s19, 0
      %s534 = sadd.s32 %s533, %s531
      %s535 = smul.addr %s534, 4
      %s536 = scalar_lea.vmem %s3, %s535
      // Predicated region
      $region33: #{forward.20} parent=31 // pred_check
        %p537 = pneg %p116
      $region34: #{forward.20} parent=31 // pred_check_branch
        %539 = sbr.rel (%p537) target = $region36
      $region35: #{forward.20} parent=31 // pred_region
        _
      $region36: #{forward.20} parent=31 // pred_fallthru
        _
    $region32: #{forward.20} parent=5 // pred_fallthru
      _
    %p540 = scmp.le.s32.totalorder 2, %s9
    // Predicated region
    $region37: #{forward.20} parent=5 // pred_check
      %p541 = pneg %p540
    $region38: #{forward.20} parent=5 // pred_check_branch
      %543 = sbr.rel (%p541) target = $region40
    $region39: #{forward.20} parent=5 // pred_region
      %s544 = ssub.s32 %s9, 2
      // Predicated region
      $region41: #{forward.20} parent=39 // pred_check
        %p545 = pneg %p122
      $region42: #{forward.20} parent=39 // pred_check_branch
        %547 = sbr.rel (%p545) target = $region44
      $region43: #{forward.20} parent=39 // pred_region
        %p548 = scmp.lt.s32.totalorder %s20, 1
        %s549 = scalar_select %p548, %s20, 1
        %p550 = scmp.lt.s32.totalorder %s21, 0
        %s551 = scalar_select %p550, %s21, 0
        %s552 = sadd.s32 %s551, %s549
        %s553 = smul.addr %s552, 4
        %s554 = scalar_lea.vmem %s3, %s553
      $region44: #{forward.20} parent=39 // pred_fallthru
        _
    $region40: #{forward.20} parent=5 // pred_fallthru
      _
  $region6: #{forward.20} parent=0 // loop_footer
    %s13 = sadd.s32 1, %s9
  $region7: #{forward.20} parent=0 // loop_footer_branch
    %8 = sbr.rel target = $region3
  $region8: #{forward.20} parent=0 // loop_exit
    _

// kernel: forward.22
$region0: #{forward.22}
  #allocation0 [shape = 'u32[]', space=smem, size = 0x4, offset = 0x4, fixed_abs, tag = 'smem constant byte address 0x4 - core index']
  #allocation1 [shape = 'u32[72,128]{1,0:T(1,128)}', space=vmem, size = 0x9000, scoped, tag = 'internal scratch']
  %s0 = inlined_call_operand.vmem [shape: bf16[2,64,64], index: 0, kind: input, shape index: {}]
  %s1 = inlined_call_operand.vmem [shape: bf16[32,64], index: 1, kind: input, shape index: {}]
  %s2 = inlined_call_operand.vmem [shape: f32[32,1], index: 2, kind: input, shape index: {}]
  %s3 = inlined_call_operand.vmem [shape: bf16[2,32,64], index: 3, kind: output, shape index: {}]
  %s4 = sld [smem:[#allocation0]]
  $region45: #{forward.22} parent=0
    _
  %s6 = ssub.s32 1, %s4
  %s7 = scalar_select 0, %s6, %s4
  loop: start=0, step=1, limit=4
  $region2: #{forward.22} parent=0 // loop_pre_header
    _
  $region3: #{forward.22} parent=0 // loop_header
    %s9 = sphi 0, %s13
    %p10 = scmp.ge.s32.totalorder %s9, 4
    %s16 = sphi 0, %s28
    %s17 = sphi 0, %s24
    %s18 = sphi 0, %s16
    %s19 = sphi 0, %s17
    %s20 = sphi 0, %s18
    %s21 = sphi 0, %s19
    %s33 = sphi 0, %s35
    %s36 = sphi 0, %s33
    %s37 = sphi 0, %s36
    %s53 = sphi 0, %s37
    %s57 = sphi 0, %s57
    %s59 = sphi 0, %s57
    %s60 = sphi 0, %s59
    %s74 = sphi 0, %s60
    %s78 = sphi 0, %s78
    %s80 = sphi 0, %s78
    %s81 = sphi 0, %s80
    %s95 = sphi 0, %s81
    %s103 = sphi 0, %s105
    %s106 = sphi 0, %s103
    %s107 = sphi 0, %s106
    %s123 = sphi 0, %s107
  $region4: #{forward.22} parent=0 // loop_header_branch
    %12 = sbr.rel (%p10) target = $region8
  $region5: #{forward.22} parent=0 // loop_body
    %s14 = ssub.s32 %s9, 1
    %s15 = ssub.s32 %s9, 2
    %s22 = sadd.s32 1, %s17
    %p23 = scmp.ge.s32.totalorder %s22, 1
    %s24 = scalar_select %p23, 0, %s22
    %s25 = sadd.s32 1, %s16
    %s26 = scalar_select %p23, %s25, %s16
    %p27 = scmp.ge.s32.totalorder %s26, 2
    %s28 = scalar_select %p27, 0, %s26
    %s29 = ssub.s32 %s16, %s28
    %s30 = ssub.s32 %s17, %s24
    %s31 = sor.u32 %s29, %s30
    %p32 = scmp.eq.s32.totalorder %s31, 0
    %s34 = sadd.s32 %s33, 1
    %s35 = scalar_select %p32, %s33, %s34
    %p38 = pneg %p32
    %p39 = scmp.eq.s32.totalorder %s9, 1
    %p40 = por %p38, %p39
    %p41 = scmp.ne.s32.totalorder %s33, %s36
    %p42 = scmp.eq.s32.totalorder %s9, 0
    %p43 = por %p41, %p42
    %p44 = scmp.ne.s32.totalorder %s33, %s36
    %p45 = scmp.eq.s32.totalorder %s14, 1
    %p46 = por %p44, %p45
    %p47 = scmp.ne.s32.totalorder %s36, %s37
    %p48 = scmp.eq.s32.totalorder %s14, 0
    %p49 = por %p47, %p48
    %p50 = scmp.ne.s32.totalorder %s36, %s37
    %p51 = scmp.eq.s32.totalorder %s15, 1
    %p52 = por %p50, %p51
    %p54 = scmp.ne.s32.totalorder %s37, %s53
    %p55 = scmp.eq.s32.totalorder %s15, 0
    %p56 = por %p54, %p55
    %s58 = sadd.s32 %s57, 1
    %p61 = scmp.eq.s32.totalorder %s9, 1
    %p62 = scmp.ne.s32.totalorder %s57, %s59
    %p63 = scmp.eq.s32.totalorder %s9, 0
    %p64 = por %p62, %p63
    %p65 = scmp.ne.s32.totalorder %s57, %s59
    %p66 = scmp.eq.s32.totalorder %s14, 1
    %p67 = por %p65, %p66
    %p68 = scmp.ne.s32.totalorder %s59, %s60
    %p69 = scmp.eq.s32.totalorder %s14, 0
    %p70 = por %p68, %p69
    %p71 = scmp.ne.s32.totalorder %s59, %s60
    %p72 = scmp.eq.s32.totalorder %s15, 1
    %p73 = por %p71, %p72
    %p75 = scmp.ne.s32.totalorder %s60, %s74
    %p76 = scmp.eq.s32.totalorder %s15, 0
    %p77 = por %p75, %p76
    %s79 = sadd.s32 %s78, 1
    %p82 = scmp.eq.s32.totalorder %s9, 1
    %p83 = scmp.ne.s32.totalorder %s78, %s80
    %p84 = scmp.eq.s32.totalorder %s9, 0
    %p85 = por %p83, %p84
    %p86 = scmp.ne.s32.totalorder %s78, %s80
    %p87 = scmp.eq.s32.totalorder %s14, 1
    %p88 = por %p86, %p87
    %p89 = scmp.ne.s32.totalorder %s80, %s81
    %p90 = scmp.eq.s32.totalorder %s14, 0
    %p91 = por %p89, %p90
    %p92 = scmp.ne.s32.totalorder %s80, %s81
    %p93 = scmp.eq.s32.totalorder %s15, 1
    %p94 = por %p92, %p93
    %p96 = scmp.ne.s32.totalorder %s81, %s95
    %p97 = scmp.eq.s32.totalorder %s15, 0
    %p98 = por %p96, %p97
    %s99 = ssub.s32 %s16, %s28
    %s100 = ssub.s32 %s17, %s24
    %s101 = sor.u32 %s99, %s100
    %p102 = scmp.eq.s32.totalorder %s101, 0
    %s104 = sadd.s32 %s103, 1
    %s105 = scalar_select %p102, %s103, %s104
    %p108 = pneg %p102
    %p109 = scmp.eq.s32.totalorder %s9, 1
    %p110 = por %p108, %p109
    %p111 = scmp.ne.s32.totalorder %s103, %s106
    %p112 = scmp.eq.s32.totalorder %s9, 0
    %p113 = por %p111, %p112
    %p114 = scmp.ne.s32.totalorder %s103, %s106
    %p115 = scmp.eq.s32.totalorder %s14, 1
    %p116 = por %p114, %p115
    %p117 = scmp.ne.s32.totalorder %s106, %s107
    %p118 = scmp.eq.s32.totalorder %s14, 0
    %p119 = por %p117, %p118
    %p120 = scmp.ne.s32.totalorder %s106, %s107
    %p121 = scmp.eq.s32.totalorder %s15, 1
    %p122 = por %p120, %p121
    %p124 = scmp.ne.s32.totalorder %s107, %s123
    %p125 = scmp.eq.s32.totalorder %s15, 0
    %p126 = por %p124, %p125
    %p127 = scmp.le.s32.totalorder 1, %s9
    %p128 = scmp.lt.s32.totalorder %s9, 3
    %p129 = pnand %p127, %p128
    %p130 = pneg %p129
    // Predicated region
    $region9: #{forward.22} parent=5 // pred_check
      _
    $region10: #{forward.22} parent=5 // pred_check_branch
      %132 = sbr.rel (%p129) target = $region12
    $region11: #{forward.22} parent=5 // pred_region
      %s133 = ssub.s32 %s9, 1
      // Predicated region
      $region13: #{forward.22} parent=11 // pred_check
        %p134 = pneg %p70
      $region14: #{forward.22} parent=11 // pred_check_branch
        %136 = sbr.rel (%p134) target = $region16
      $region15: #{forward.22} parent=11 // pred_region
        _
      $region16: #{forward.22} parent=11 // pred_fallthru
        _
      // Predicated region
      $region17: #{forward.22} parent=11 // pred_check
        %p137 = pneg %p91
      $region18: #{forward.22} parent=11 // pred_check_branch
        %139 = sbr.rel (%p137) target = $region20
      $region19: #{forward.22} parent=11 // pred_region
        _
      $region20: #{forward.22} parent=11 // pred_fallthru
        _
    $region12: #{forward.22} parent=5 // pred_fallthru
      _
    %p140 = scmp.lt.s32.totalorder %s9, 2
    // Predicated region
    $region21: #{forward.22} parent=5 // pred_check
      %p141 = pneg %p140
    $region22: #{forward.22} parent=5 // pred_check_branch
      %143 = sbr.rel (%p141) target = $region24
    $region23: #{forward.22} parent=5 // pred_region
      // Predicated region
      $region25: #{forward.22} parent=23 // pred_check
        %p144 = pneg %p43
      $region26: #{forward.22} parent=23 // pred_check_branch
        %146 = sbr.rel (%p144) target = $region28
      $region27: #{forward.22} parent=23 // pred_region
        %p147 = scmp.lt.s32.totalorder %s16, 1
        %s148 = scalar_select %p147, %s16, 1
        %p149 = scmp.lt.s32.totalorder %s17, 0
        %s150 = scalar_select %p149, %s17, 0
        %s151 = smul.addr %s148, 8
        %s152 = sadd.s32 %s150, %s151
        %s153 = smul.addr %s152, 4
        %s154 = scalar_lea.vmem %s0, %s153
      $region28: #{forward.22} parent=23 // pred_fallthru
        _
    $region24: #{forward.22} parent=5 // pred_fallthru
      _
    %p155 = scmp.le.s32.totalorder 1, %s9
    %p156 = scmp.lt.s32.totalorder %s9, 3
    %p157 = pnand %p155, %p156
    %p158 = pneg %p157
    // Predicated region
    $region29: #{forward.22} parent=5 // pred_check
      _
    $region30: #{forward.22} parent=5 // pred_check_branch
      %160 = sbr.rel (%p157) target = $region32
    $region31: #{forward.22} parent=5 // pred_region
      %s161 = ssub.s32 %s9, 1
      %p162 = scmp.lt.s32.totalorder %s18, 1
      %s163 = scalar_select %p162, %s18, 1
      %p164 = scmp.lt.s32.totalorder %s19, 0
      %s165 = scalar_select %p164, %s19, 0
      %s166 = smul.addr %s163, 8
      %s167 = sadd.s32 %s165, %s166
      %s168 = smul.addr %s167, 4
      %s169 = scalar_lea.vmem %s0, %s168
      %p170 = pneg %p49
      %p171 = pneg %p46
      %p172 = pneg %p70
      %p173 = pneg %p67
      %p174 = pneg %p91
      %p175 = pneg %p88
      %p176 = pneg %p119
      %p177 = pneg %p116
      %p178 = scmp.lt.s32.totalorder %s18, 1
      %s179 = scalar_select %p178, %s18, 1
      %p180 = scmp.lt.s32.totalorder %s19, 0
      %s181 = scalar_select %p180, %s19, 0
      %s182 = smul.addr %s179, 4
      %s183 = sadd.s32 %s181, %s182
      %s184 = smul.addr %s183, 4
      %s185 = scalar_lea.vmem %s3, %s184
      %p186 = scmp.lt.s32.totalorder %s18, 1
      %s187 = scalar_select %p186, %s18, 1
      %p188 = scmp.lt.s32.totalorder %s19, 0
      %s189 = scalar_select %p188, %s19, 0
      %s190 = smul.addr %s187, 8
      %s191 = sadd.s32 %s189, %s190
      %s192 = smul.addr %s191, 4
      %s193 = scalar_lea.vmem %s0, %s192
      %p194 = scmp.lt.s32.totalorder %s18, 1
      %s195 = scalar_select %p194, %s18, 1
      %p196 = scmp.lt.s32.totalorder %s19, 0
      %s197 = scalar_select %p196, %s19, 0
      %s198 = smul.addr %s195, 4
      %s199 = sadd.s32 %s197, %s198
      %s200 = smul.addr %s199, 4
      %s201 = scalar_lea.vmem %s3, %s200
      %v203 = vld [vmem:[%s193] sm:$0xf]
      %v204 = vld [vmem:[%s193 + $0x4] sm:$0xf]
      %v205 = vld [vmem:[%s193 + $0x8] sm:$0xf]
      %v206 = vld [vmem:[%s193 + $0xc] sm:$0xf]
      %v207 = vld [vmem:[%s193 + $0x10] sm:$0xf]
      %v208 = vld [vmem:[%s193 + $0x14] sm:$0xf]
      %v209 = vld [vmem:[%s193 + $0x18] sm:$0xf]
      %v210 = vld [vmem:[%s193 + $0x1c] sm:$0xf]
      %v211 = vld [vmem:[%s1] sm:$0xf]
      %v212 = vld [vmem:[%s1 + $0x4] sm:$0xf]
      %v213 = vld [vmem:[%s1 + $0x8] sm:$0xf]
      %v214 = vld [vmem:[%s1 + $0xc] sm:$0xf]
      %v215 = vld [vmem:[%s2] sm:$0xff]
      %v216 = vld [vmem:[%s2 + $0x8] sm:$0xff]
      %v217 = vld [vmem:[%s2 + $0x10] sm:$0xff]
      %v218 = vld [vmem:[%s2 + $0x18] sm:$0xff]
      %220 = vset.pattern.permute.xlu0 0
      %221 = vperm.xlu0 %220, %v215
      %v222 = vpop.permute.xlu0 %221
      %225 = vset.pattern.permute.xlu0 0
      %226 = vperm.xlu0 %225, %v216
      %v227 = vpop.permute.xlu0 %226
      %230 = vset.pattern.permute.xlu0 0
      %231 = vperm.xlu0 %230, %v217
      %v232 = vpop.permute.xlu0 %231
      %235 = vset.pattern.permute.xlu0 0
      %236 = vperm.xlu0 %235, %v218
      %v237 = vpop.permute.xlu0 %236
      %v243 = vunpack.c.l.b16 %v211
      %v244 = vunpack.c.l.b16 %v212
      %v245 = vunpack.c.l.b16 %v213
      %v246 = vunpack.c.l.b16 %v214
      %v247 = vpack.c.b16 %v244, %v243
      %v248 = vpack.c.b16 %v246, %v245
      %v257 = vunpack.c.l.b16 %v203
      %v258 = vunpack.c.l.b16 %v204
      %v259 = vunpack.c.l.b16 %v205
      %v260 = vunpack.c.l.b16 %v206
      %v261 = vunpack.c.l.b16 %v207
      %v262 = vunpack.c.l.b16 %v208
      %v263 = vunpack.c.l.b16 %v209
      %v264 = vunpack.c.l.b16 %v210
      %v265 = vpack.c.b16 %v258, %v257
      %v266 = vpack.c.b16 %v260, %v259
      %v267 = vpack.c.b16 %v262, %v261
      %v268 = vpack.c.b16 %v264, %v263
      %vm273 = vcmask 523264
      %v275 = vsel %vm273, %v247, 0
      %v278 = vsel %vm273, %v248, 0
      %280 = vmatpush.bf16.msra.mxu0 0
      %281 = vmatpush.bf16.msra.mxu0 0
      %282 = vmatpush.bf16.msra.mxu0 0
      %283 = vmatpush.bf16.msra.mxu0 0
      %284 = vmatpush.bf16.msra.mxu0 %v268
      %285 = vmatpush.bf16.msra.mxu0 %v267
      %286 = vmatpush.bf16.msra.mxu0 %v266
      %287 = vmatpush.bf16.msra.mxu0 %v265
      %288 = vmatmul.bf16.gmra.mxu0 %v275
      %v289 = vpop.f32.mrf.mxu0
      %v290 = vadd.f32 %v222, %v289
      %v291 = vpop.f32.mrf.mxu0
      %v292 = vadd.f32 %v227, %v291
      %293 = vmatmul.bf16.gmra.mxu0 %v278
      %v294 = vpop.f32.mrf.mxu0
      %v295 = vadd.f32 %v232, %v294
      %v296 = vpop.f32.mrf.mxu0
      %v297 = vadd.f32 %v237, %v296
      %298 = vdwg.mxu0
      %v299 = vpack.c.bf16 %v290, %v290
      %v300 = vpack.c.bf16 %v292, %v292
      %v301 = vpack.c.bf16 %v295, %v295
      %v302 = vpack.c.bf16 %v297, %v297
      %vm303 = vcmask 519168
      %304 = vst.msk [vmem:[%s201] sm:$0xf] %vm303, %v299
      %305 = vst.msk [vmem:[%s201 + $0x4] sm:$0xf] %vm303, %v300
      %306 = vst.msk [vmem:[%s201 + $0x8] sm:$0xf] %vm303, %v301
      %307 = vst.msk [vmem:[%s201 + $0xc] sm:$0xf] %vm303, %v302
      %p308 = scmp.lt.s32.totalorder %s18, 1
      %s309 = scalar_select %p308, %s18, 1
      %p310 = scmp.lt.s32.totalorder %s19, 0
      %s311 = scalar_select %p310, %s19, 0
      %s312 = smul.addr %s309, 4
      %s313 = sadd.s32 %s311, %s312
      %s314 = smul.addr %s313, 4
      %s315 = scalar_lea.vmem %s3, %s314
      // Predicated region
      $region33: #{forward.22} parent=31 // pred_check
        %p316 = pneg %p116
      $region34: #{forward.22} parent=31 // pred_check_branch
        %318 = sbr.rel (%p316) target = $region36
      $region35: #{forward.22} parent=31 // pred_region
        _
      $region36: #{forward.22} parent=31 // pred_fallthru
        _
    $region32: #{forward.22} parent=5 // pred_fallthru
      _
    %p319 = scmp.le.s32.totalorder 2, %s9
    // Predicated region
    $region37: #{forward.22} parent=5 // pred_check
      %p320 = pneg %p319
    $region38: #{forward.22} parent=5 // pred_check_branch
      %322 = sbr.rel (%p320) target = $region40
    $region39: #{forward.22} parent=5 // pred_region
      %s323 = ssub.s32 %s9, 2
      // Predicated region
      $region41: #{forward.22} parent=39 // pred_check
        %p324 = pneg %p122
      $region42: #{forward.22} parent=39 // pred_check_branch
        %326 = sbr.rel (%p324) target = $region44
      $region43: #{forward.22} parent=39 // pred_region
        %p327 = scmp.lt.s32.totalorder %s20, 1
        %s328 = scalar_select %p327, %s20, 1
        %p329 = scmp.lt.s32.totalorder %s21, 0
        %s330 = scalar_select %p329, %s21, 0
        %s331 = smul.addr %s328, 4
        %s332 = sadd.s32 %s330, %s331
        %s333 = smul.addr %s332, 4
        %s334 = scalar_lea.vmem %s3, %s333
      $region44: #{forward.22} parent=39 // pred_fallthru
        _
    $region40: #{forward.22} parent=5 // pred_fallthru
      _
  $region6: #{forward.22} parent=0 // loop_footer
    %s13 = sadd.s32 1, %s9
  $region7: #{forward.22} parent=0 // loop_footer_branch
    %8 = sbr.rel target = $region3
  $region8: #{forward.22} parent=0 // loop_exit
    _

// kernel: forward.23
$region0: #{forward.23}
  #allocation0 [shape = 'u32[]', space=smem, size = 0x4, offset = 0x4, fixed_abs, tag = 'smem constant byte address 0x4 - core index']
  #allocation1 [shape = 'u32[72,128]{1,0:T(1,128)}', space=vmem, size = 0x9000, scoped, tag = 'internal scratch']
  %s0 = inlined_call_operand.vmem [shape: bf16[2,216,512], index: 0, kind: input, shape index: {}]
  %s1 = inlined_call_operand.vmem [shape: bf16[4,216], index: 1, kind: input, shape index: {}]
  %s2 = inlined_call_operand.vmem [shape: f32[4,1], index: 2, kind: input, shape index: {}]
  %s3 = inlined_call_operand.vmem [shape: bf16[2,4,512], index: 3, kind: output, shape index: {}]
  %s4 = sld [smem:[#allocation0]]
  $region45: #{forward.23} parent=0
    _
  %s6 = ssub.s32 1, %s4
  %s7 = scalar_select 0, %s6, %s4
  loop: start=0, step=1, limit=4
  $region2: #{forward.23} parent=0 // loop_pre_header
    _
  $region3: #{forward.23} parent=0 // loop_header
    %s9 = sphi 0, %s13
    %p10 = scmp.ge.s32.totalorder %s9, 4
    %s16 = sphi 0, %s28
    %s17 = sphi 0, %s24
    %s18 = sphi 0, %s16
    %s19 = sphi 0, %s17
    %s20 = sphi 0, %s18
    %s21 = sphi 0, %s19
    %s33 = sphi 0, %s35
    %s36 = sphi 0, %s33
    %s37 = sphi 0, %s36
    %s53 = sphi 0, %s37
    %s57 = sphi 0, %s57
    %s59 = sphi 0, %s57
    %s60 = sphi 0, %s59
    %s74 = sphi 0, %s60
    %s78 = sphi 0, %s78
    %s80 = sphi 0, %s78
    %s81 = sphi 0, %s80
    %s95 = sphi 0, %s81
    %s103 = sphi 0, %s105
    %s106 = sphi 0, %s103
    %s107 = sphi 0, %s106
    %s123 = sphi 0, %s107
  $region4: #{forward.23} parent=0 // loop_header_branch
    %12 = sbr.rel (%p10) target = $region8
  $region5: #{forward.23} parent=0 // loop_body
    %s14 = ssub.s32 %s9, 1
    %s15 = ssub.s32 %s9, 2
    %s22 = sadd.s32 1, %s17
    %p23 = scmp.ge.s32.totalorder %s22, 1
    %s24 = scalar_select %p23, 0, %s22
    %s25 = sadd.s32 1, %s16
    %s26 = scalar_select %p23, %s25, %s16
    %p27 = scmp.ge.s32.totalorder %s26, 2
    %s28 = scalar_select %p27, 0, %s26
    %s29 = ssub.s32 %s16, %s28
    %s30 = ssub.s32 %s17, %s24
    %s31 = sor.u32 %s29, %s30
    %p32 = scmp.eq.s32.totalorder %s31, 0
    %s34 = sadd.s32 %s33, 1
    %s35 = scalar_select %p32, %s33, %s34
    %p38 = pneg %p32
    %p39 = scmp.eq.s32.totalorder %s9, 1
    %p40 = por %p38, %p39
    %p41 = scmp.ne.s32.totalorder %s33, %s36
    %p42 = scmp.eq.s32.totalorder %s9, 0
    %p43 = por %p41, %p42
    %p44 = scmp.ne.s32.totalorder %s33, %s36
    %p45 = scmp.eq.s32.totalorder %s14, 1
    %p46 = por %p44, %p45
    %p47 = scmp.ne.s32.totalorder %s36, %s37
    %p48 = scmp.eq.s32.totalorder %s14, 0
    %p49 = por %p47, %p48
    %p50 = scmp.ne.s32.totalorder %s36, %s37
    %p51 = scmp.eq.s32.totalorder %s15, 1
    %p52 = por %p50, %p51
    %p54 = scmp.ne.s32.totalorder %s37, %s53
    %p55 = scmp.eq.s32.totalorder %s15, 0
    %p56 = por %p54, %p55
    %s58 = sadd.s32 %s57, 1
    %p61 = scmp.eq.s32.totalorder %s9, 1
    %p62 = scmp.ne.s32.totalorder %s57, %s59
    %p63 = scmp.eq.s32.totalorder %s9, 0
    %p64 = por %p62, %p63
    %p65 = scmp.ne.s32.totalorder %s57, %s59
    %p66 = scmp.eq.s32.totalorder %s14, 1
    %p67 = por %p65, %p66
    %p68 = scmp.ne.s32.totalorder %s59, %s60
    %p69 = scmp.eq.s32.totalorder %s14, 0
    %p70 = por %p68, %p69
    %p71 = scmp.ne.s32.totalorder %s59, %s60
    %p72 = scmp.eq.s32.totalorder %s15, 1
    %p73 = por %p71, %p72
    %p75 = scmp.ne.s32.totalorder %s60, %s74
    %p76 = scmp.eq.s32.totalorder %s15, 0
    %p77 = por %p75, %p76
    %s79 = sadd.s32 %s78, 1
    %p82 = scmp.eq.s32.totalorder %s9, 1
    %p83 = scmp.ne.s32.totalorder %s78, %s80
    %p84 = scmp.eq.s32.totalorder %s9, 0
    %p85 = por %p83, %p84
    %p86 = scmp.ne.s32.totalorder %s78, %s80
    %p87 = scmp.eq.s32.totalorder %s14, 1
    %p88 = por %p86, %p87
    %p89 = scmp.ne.s32.totalorder %s80, %s81
    %p90 = scmp.eq.s32.totalorder %s14, 0
    %p91 = por %p89, %p90
    %p92 = scmp.ne.s32.totalorder %s80, %s81
    %p93 = scmp.eq.s32.totalorder %s15, 1
    %p94 = por %p92, %p93
    %p96 = scmp.ne.s32.totalorder %s81, %s95
    %p97 = scmp.eq.s32.totalorder %s15, 0
    %p98 = por %p96, %p97
    %s99 = ssub.s32 %s16, %s28
    %s100 = ssub.s32 %s17, %s24
    %s101 = sor.u32 %s99, %s100
    %p102 = scmp.eq.s32.totalorder %s101, 0
    %s104 = sadd.s32 %s103, 1
    %s105 = scalar_select %p102, %s103, %s104
    %p108 = pneg %p102
    %p109 = scmp.eq.s32.totalorder %s9, 1
    %p110 = por %p108, %p109
    %p111 = scmp.ne.s32.totalorder %s103, %s106
    %p112 = scmp.eq.s32.totalorder %s9, 0
    %p113 = por %p111, %p112
    %p114 = scmp.ne.s32.totalorder %s103, %s106
    %p115 = scmp.eq.s32.totalorder %s14, 1
    %p116 = por %p114, %p115
    %p117 = scmp.ne.s32.totalorder %s106, %s107
    %p118 = scmp.eq.s32.totalorder %s14, 0
    %p119 = por %p117, %p118
    %p120 = scmp.ne.s32.totalorder %s106, %s107
    %p121 = scmp.eq.s32.totalorder %s15, 1
    %p122 = por %p120, %p121
    %p124 = scmp.ne.s32.totalorder %s107, %s123
    %p125 = scmp.eq.s32.totalorder %s15, 0
    %p126 = por %p124, %p125
    %p127 = scmp.le.s32.totalorder 1, %s9
    %p128 = scmp.lt.s32.totalorder %s9, 3
    %p129 = pnand %p127, %p128
    %p130 = pneg %p129
    // Predicated region
    $region9: #{forward.23} parent=5 // pred_check
      _
    $region10: #{forward.23} parent=5 // pred_check_branch
      %132 = sbr.rel (%p129) target = $region12
    $region11: #{forward.23} parent=5 // pred_region
      %s133 = ssub.s32 %s9, 1
      // Predicated region
      $region13: #{forward.23} parent=11 // pred_check
        %p134 = pneg %p70
      $region14: #{forward.23} parent=11 // pred_check_branch
        %136 = sbr.rel (%p134) target = $region16
      $region15: #{forward.23} parent=11 // pred_region
        _
      $region16: #{forward.23} parent=11 // pred_fallthru
        _
      // Predicated region
      $region17: #{forward.23} parent=11 // pred_check
        %p137 = pneg %p91
      $region18: #{forward.23} parent=11 // pred_check_branch
        %139 = sbr.rel (%p137) target = $region20
      $region19: #{forward.23} parent=11 // pred_region
        _
      $region20: #{forward.23} parent=11 // pred_fallthru
        _
    $region12: #{forward.23} parent=5 // pred_fallthru
      _
    %p140 = scmp.lt.s32.totalorder %s9, 2
    // Predicated region
    $region21: #{forward.23} parent=5 // pred_check
      %p141 = pneg %p140
    $region22: #{forward.23} parent=5 // pred_check_branch
      %143 = sbr.rel (%p141) target = $region24
    $region23: #{forward.23} parent=5 // pred_region
      // Predicated region
      $region25: #{forward.23} parent=23 // pred_check
        %p144 = pneg %p43
      $region26: #{forward.23} parent=23 // pred_check_branch
        %146 = sbr.rel (%p144) target = $region28
      $region27: #{forward.23} parent=23 // pred_region
        %s147 = smul.u32 4, %s17
        %p148 = scmp.lt.s32.totalorder %s16, 1
        %s149 = scalar_select %p148, %s16, 1
        %p150 = scmp.lt.s32.totalorder %s147, 3
        %s151 = scalar_select %p150, %s147, 3
        %s152 = smul.addr %s149, 108
        %s153 = sadd.s32 %s151, %s152
        %s154 = smul.addr %s153, 4
        %s155 = scalar_lea.vmem %s0, %s154
        %s156 = smul.u32 4, %s17
      $region28: #{forward.23} parent=23 // pred_fallthru
        _
    $region24: #{forward.23} parent=5 // pred_fallthru
      _
    %p157 = scmp.le.s32.totalorder 1, %s9
    %p158 = scmp.lt.s32.totalorder %s9, 3
    %p159 = pnand %p157, %p158
    %p160 = pneg %p159
    // Predicated region
    $region29: #{forward.23} parent=5 // pred_check
      _
    $region30: #{forward.23} parent=5 // pred_check_branch
      %162 = sbr.rel (%p159) target = $region32
    $region31: #{forward.23} parent=5 // pred_region
      %s163 = ssub.s32 %s9, 1
      %s164 = smul.u32 4, %s19
      %p165 = scmp.lt.s32.totalorder %s18, 1
      %s166 = scalar_select %p165, %s18, 1
      %p167 = scmp.lt.s32.totalorder %s164, 3
      %s168 = scalar_select %p167, %s164, 3
      %s169 = smul.addr %s166, 108
      %s170 = sadd.s32 %s168, %s169
      %s171 = smul.addr %s170, 4
      %s172 = scalar_lea.vmem %s0, %s171
      %p173 = pneg %p49
      %p174 = pneg %p46
      %p175 = pneg %p70
      %p176 = pneg %p67
      %p177 = pneg %p91
      %p178 = pneg %p88
      %p179 = pneg %p119
      %p180 = pneg %p116
      %s181 = smul.u32 4, %s19
      %p182 = scmp.lt.s32.totalorder %s18, 1
      %s183 = scalar_select %p182, %s18, 1
      %p184 = scmp.lt.s32.totalorder %s181, 3
      %s185 = scalar_select %p184, %s181, 3
      %s186 = smul.addr %s183, 4
      %s187 = sadd.s32 %s185, %s186
      %s188 = smul.addr %s187, 2
      %s189 = scalar_lea.vmem %s3, %s188
      %s190 = smul.u32 4, %s19
      %p191 = scmp.lt.s32.totalorder %s18, 1
      %s192 = scalar_select %p191, %s18, 1
      %p193 = scmp.lt.s32.totalorder %s190, 3
      %s194 = scalar_select %p193, %s190, 3
      %s195 = smul.addr %s192, 108
      %s196 = sadd.s32 %s194, %s195
      %s197 = smul.addr %s196, 4
      %s198 = scalar_lea.vmem %s0, %s197
      %s199 = smul.u32 4, %s19
      %s200 = smul.u32 4, %s19
      %p201 = scmp.lt.s32.totalorder %s18, 1
      %s202 = scalar_select %p201, %s18, 1
      %p203 = scmp.lt.s32.totalorder %s200, 3
      %s204 = scalar_select %p203, %s200, 3
      %s205 = smul.addr %s202, 4
      %s206 = sadd.s32 %s204, %s205
      %s207 = smul.addr %s206, 2
      %s208 = scalar_lea.vmem %s3, %s207
      %s209 = smul.u32 4, %s19
      %v211 = vld [vmem:[%s198] sm:$0xff]
      %v212 = vld [vmem:[%s198 + $0x8] sm:$0xff]
      %v213 = vld [vmem:[%s198 + $0x10] sm:$0xff]
      %v214 = vld [vmem:[%s198 + $0x18] sm:$0xff]
      %v215 = vld [vmem:[%s198 + $0x20] sm:$0xff]
      %v216 = vld [vmem:[%s198 + $0x28] sm:$0xff]
      %v217 = vld [vmem:[%s198 + $0x30] sm:$0xff]
      %v218 = vld [vmem:[%s198 + $0x38] sm:$0xff]
      %v219 = vld [vmem:[%s198 + $0x40] sm:$0xff]
      %v220 = vld [vmem:[%s198 + $0x48] sm:$0xff]
      %v221 = vld [vmem:[%s198 + $0x50] sm:$0xff]
      %v222 = vld [vmem:[%s198 + $0x58] sm:$0xff]
      %v223 = vld [vmem:[%s198 + $0x60] sm:$0xff]
      %v224 = vld [vmem:[%s198 + $0x68] sm:$0xff]
      %v225 = vld [vmem:[%s198 + $0x70] sm:$0xff]
      %v226 = vld [vmem:[%s198 + $0x78] sm:$0xff]
      %v227 = vld [vmem:[%s198 + $0x80] sm:$0xff]
      %v228 = vld [vmem:[%s198 + $0x88] sm:$0xff]
      %v229 = vld [vmem:[%s198 + $0x90] sm:$0xff]
      %v230 = vld [vmem:[%s198 + $0x98] sm:$0xff]
      %v231 = vld [vmem:[%s198 + $0xa0] sm:$0xff]
      %v232 = vld [vmem:[%s198 + $0xa8] sm:$0xff]
      %v233 = vld [vmem:[%s198 + $0xb0] sm:$0xff]
      %v234 = vld [vmem:[%s198 + $0xb8] sm:$0xff]
      %v235 = vld [vmem:[%s198 + $0xc0] sm:$0xff]
      %v236 = vld [vmem:[%s198 + $0xc8] sm:$0xff]
      %v237 = vld [vmem:[%s198 + $0xd0] sm:$0xff]
      %v238 = vld [vmem:[%s198 + $0xd8] sm:$0xff]
      %v239 = vld [vmem:[%s198 + $0xe0] sm:$0xff]
      %v240 = vld [vmem:[%s198 + $0xe8] sm:$0xff]
      %v241 = vld [vmem:[%s198 + $0xf0] sm:$0xff]
      %v242 = vld [vmem:[%s198 + $0xf8] sm:$0xff]
      %v243 = vld [vmem:[%s198 + $0x100] sm:$0xff]
      %v244 = vld [vmem:[%s198 + $0x108] sm:$0xff]
      %v245 = vld [vmem:[%s198 + $0x110] sm:$0xff]
      %v246 = vld [vmem:[%s198 + $0x118] sm:$0xff]
      %v247 = vld [vmem:[%s198 + $0x120] sm:$0xff]
      %v248 = vld [vmem:[%s198 + $0x128] sm:$0xff]
      %v249 = vld [vmem:[%s198 + $0x130] sm:$0xff]
      %v250 = vld [vmem:[%s198 + $0x138] sm:$0xff]
      %v251 = vld [vmem:[%s198 + $0x140] sm:$0xff]
      %v252 = vld [vmem:[%s198 + $0x148] sm:$0xff]
      %v253 = vld [vmem:[%s198 + $0x150] sm:$0xff]
      %v254 = vld [vmem:[%s198 + $0x158] sm:$0xff]
      %v255 = vld [vmem:[%s198 + $0x160] sm:$0xff]
      %v256 = vld [vmem:[%s198 + $0x168] sm:$0xff]
      %v257 = vld [vmem:[%s198 + $0x170] sm:$0xff]
      %v258 = vld [vmem:[%s198 + $0x178] sm:$0xff]
      %v259 = vld [vmem:[%s198 + $0x180] sm:$0xff]
      %v260 = vld [vmem:[%s198 + $0x188] sm:$0xff]
      %v261 = vld [vmem:[%s198 + $0x190] sm:$0xff]
      %v262 = vld [vmem:[%s198 + $0x198] sm:$0xff]
      %v263 = vld [vmem:[%s198 + $0x1a0] sm:$0xff]
      %v264 = vld [vmem:[%s198 + $0x1a8] sm:$0xff]
      %v265 = vld [vmem:[%s1] sm:$0xf]
      %v266 = vld [vmem:[%s2] sm:$0xf]
      %268 = vset.pattern.permute.xlu0 0
      %269 = vperm.xlu0 %268, %v266
      %v270 = vpop.permute.xlu0 %269
      %273 = vst [vmem:[#allocation1] ss:$4 sm:$0xff] %v265
      %v274 = vld.sshfl [vmem:[#allocation1] sm:$0xff pattern:$0x73625140]
      %v275 = vld.sshfl [vmem:[#allocation1 + $0x8] sm:$0xff pattern:$0x73625140]
      %v331 = vunpack.c.l.b16 %v211
      %v332 = vunpack.c.h.b16 %v211
      %v333 = vunpack.c.l.b16 %v212
      %v334 = vunpack.c.h.b16 %v212
      %v335 = vunpack.c.l.b16 %v213
      %v336 = vunpack.c.h.b16 %v213
      %v337 = vunpack.c.l.b16 %v214
      %v338 = vunpack.c.h.b16 %v214
      %v339 = vunpack.c.l.b16 %v215
      %v340 = vunpack.c.h.b16 %v215
      %v341 = vunpack.c.l.b16 %v216
      %v342 = vunpack.c.h.b16 %v216
      %v343 = vunpack.c.l.b16 %v217
      %v344 = vunpack.c.h.b16 %v217
      %v345 = vunpack.c.l.b16 %v218
      %v346 = vunpack.c.h.b16 %v218
      %v347 = vunpack.c.l.b16 %v219
      %v348 = vunpack.c.h.b16 %v219
      %v349 = vunpack.c.l.b16 %v220
      %v350 = vunpack.c.h.b16 %v220
      %v351 = vunpack.c.l.b16 %v221
      %v352 = vunpack.c.h.b16 %v221
      %v353 = vunpack.c.l.b16 %v222
      %v354 = vunpack.c.h.b16 %v222
      %v355 = vunpack.c.l.b16 %v223
      %v356 = vunpack.c.h.b16 %v223
      %v357 = vunpack.c.l.b16 %v224
      %v358 = vunpack.c.h.b16 %v224
      %v359 = vunpack.c.l.b16 %v225
      %v360 = vunpack.c.h.b16 %v225
      %v361 = vunpack.c.l.b16 %v226
      %v362 = vunpack.c.h.b16 %v226
      %v363 = vunpack.c.l.b16 %v227
      %v364 = vunpack.c.h.b16 %v227
      %v365 = vunpack.c.l.b16 %v228
      %v366 = vunpack.c.h.b16 %v228
      %v367 = vunpack.c.l.b16 %v229
      %v368 = vunpack.c.h.b16 %v229
      %v369 = vunpack.c.l.b16 %v230
      %v370 = vunpack.c.h.b16 %v230
      %v371 = vunpack.c.l.b16 %v231
      %v372 = vunpack.c.h.b16 %v231
      %v373 = vunpack.c.l.b16 %v232
      %v374 = vunpack.c.h.b16 %v232
      %v375 = vunpack.c.l.b16 %v233
      %v376 = vunpack.c.h.b16 %v233
      %v377 = vunpack.c.l.b16 %v234
      %v378 = vunpack.c.h.b16 %v234
      %v379 = vunpack.c.l.b16 %v235
      %v380 = vunpack.c.h.b16 %v235
      %v381 = vunpack.c.l.b16 %v236
      %v382 = vunpack.c.h.b16 %v236
      %v383 = vunpack.c.l.b16 %v237
      %v384 = vunpack.c.h.b16 %v237
      %v385 = vunpack.c.l.b16 %v238
      %v386 = vunpack.c.h.b16 %v238
      %v387 = vunpack.c.l.b16 %v239
      %v388 = vunpack.c.h.b16 %v239
      %v389 = vunpack.c.l.b16 %v240
      %v390 = vunpack.c.h.b16 %v240
      %v391 = vunpack.c.l.b16 %v241
      %v392 = vunpack.c.h.b16 %v241
      %v393 = vunpack.c.l.b16 %v242
      %v394 = vunpack.c.h.b16 %v242
      %v395 = vunpack.c.l.b16 %v243
      %v396 = vunpack.c.h.b16 %v243
      %v397 = vunpack.c.l.b16 %v244
      %v398 = vunpack.c.h.b16 %v244
      %v399 = vunpack.c.l.b16 %v245
      %v400 = vunpack.c.h.b16 %v245
      %v401 = vunpack.c.l.b16 %v246
      %v402 = vunpack.c.h.b16 %v246
      %v403 = vunpack.c.l.b16 %v247
      %v404 = vunpack.c.h.b16 %v247
      %v405 = vunpack.c.l.b16 %v248
      %v406 = vunpack.c.h.b16 %v248
      %v407 = vunpack.c.l.b16 %v249
      %v408 = vunpack.c.h.b16 %v249
      %v409 = vunpack.c.l.b16 %v250
      %v410 = vunpack.c.h.b16 %v250
      %v411 = vunpack.c.l.b16 %v251
      %v412 = vunpack.c.h.b16 %v251
      %v413 = vunpack.c.l.b16 %v252
      %v414 = vunpack.c.h.b16 %v252
      %v415 = vunpack.c.l.b16 %v253
      %v416 = vunpack.c.h.b16 %v253
      %v417 = vunpack.c.l.b16 %v254
      %v418 = vunpack.c.h.b16 %v254
      %v419 = vunpack.c.l.b16 %v255
      %v420 = vunpack.c.h.b16 %v255
      %v421 = vunpack.c.l.b16 %v256
      %v422 = vunpack.c.h.b16 %v256
      %v423 = vunpack.c.l.b16 %v257
      %v424 = vunpack.c.h.b16 %v257
      %v425 = vunpack.c.l.b16 %v258
      %v426 = vunpack.c.h.b16 %v258
      %v427 = vunpack.c.l.b16 %v259
      %v428 = vunpack.c.h.b16 %v259
      %v429 = vunpack.c.l.b16 %v260
      %v430 = vunpack.c.h.b16 %v260
      %v431 = vunpack.c.l.b16 %v261
      %v432 = vunpack.c.h.b16 %v261
      %v433 = vunpack.c.l.b16 %v262
      %v434 = vunpack.c.h.b16 %v262
      %v435 = vunpack.c.l.b16 %v263
      %v436 = vunpack.c.h.b16 %v263
      %v437 = vunpack.c.l.b16 %v264
      %v438 = vunpack.c.h.b16 %v264
      %v439 = vpack.c.b16 %v335, %v331
      %v440 = vpack.c.b16 %v336, %v332
      %v441 = vpack.c.b16 %v337, %v333
      %v442 = vpack.c.b16 %v338, %v334
      %v443 = vpack.c.b16 %v343, %v339
      %v444 = vpack.c.b16 %v344, %v340
      %v445 = vpack.c.b16 %v345, %v341
      %v446 = vpack.c.b16 %v346, %v342
      %v447 = vpack.c.b16 %v351, %v347
      %v448 = vpack.c.b16 %v352, %v348
      %v449 = vpack.c.b16 %v353, %v349
      %v450 = vpack.c.b16 %v354, %v350
      %v451 = vpack.c.b16 %v359, %v355
      %v452 = vpack.c.b16 %v360, %v356
      %v453 = vpack.c.b16 %v361, %v357
      %v454 = vpack.c.b16 %v362, %v358
      %v455 = vpack.c.b16 %v367, %v363
      %v456 = vpack.c.b16 %v368, %v364
      %v457 = vpack.c.b16 %v369, %v365
      %v458 = vpack.c.b16 %v370, %v366
      %v459 = vpack.c.b16 %v375, %v371
      %v460 = vpack.c.b16 %v376, %v372
      %v461 = vpack.c.b16 %v377, %v373
      %v462 = vpack.c.b16 %v378, %v374
      %v463 = vpack.c.b16 %v383, %v379
      %v464 = vpack.c.b16 %v384, %v380
      %v465 = vpack.c.b16 %v385, %v381
      %v466 = vpack.c.b16 %v386, %v382
      %v467 = vpack.c.b16 %v391, %v387
      %v468 = vpack.c.b16 %v392, %v388
      %v469 = vpack.c.b16 %v393, %v389
      %v470 = vpack.c.b16 %v394, %v390
      %v471 = vpack.c.b16 %v399, %v395
      %v472 = vpack.c.b16 %v400, %v396
      %v473 = vpack.c.b16 %v401, %v397
      %v474 = vpack.c.b16 %v402, %v398
      %v475 = vpack.c.b16 %v407, %v403
      %v476 = vpack.c.b16 %v408, %v404
      %v477 = vpack.c.b16 %v409, %v405
      %v478 = vpack.c.b16 %v410, %v406
      %v479 = vpack.c.b16 %v415, %v411
      %v480 = vpack.c.b16 %v416, %v412
      %v481 = vpack.c.b16 %v417, %v413
      %v482 = vpack.c.b16 %v418, %v414
      %v483 = vpack.c.b16 %v423, %v419
      %v484 = vpack.c.b16 %v424, %v420
      %v485 = vpack.c.b16 %v425, %v421
      %v486 = vpack.c.b16 %v426, %v422
      %v487 = vpack.c.b16 %v431, %v427
      %v488 = vpack.c.b16 %v432, %v428
      %v489 = vpack.c.b16 %v433, %v429
      %v490 = vpack.c.b16 %v434, %v430
      %v491 = vpack.c.b16 %v435, %v435
      %v492 = vpack.c.b16 %v436, %v436
      %v493 = vpack.c.b16 %v437, %v437
      %v494 = vpack.c.b16 %v438, %v438
      %vm547 = vcmask 719872
      %v548 = vsel %vm547, %v275, 0
      %vm550 = vcmask 1043456
      %v552 = vsel %vm550, %v491, 0
      %v555 = vsel %vm550, %v492, 0
      %v558 = vsel %vm550, %v493, 0
      %v561 = vsel %vm550, %v494, 0
      %563 = vmatpush.bf16.msra.mxu0 %v467
      %564 = vmatpush.bf16.msra.mxu0 %v463
      %565 = vmatpush.bf16.msra.mxu0 %v459
      %566 = vmatpush.bf16.msra.mxu0 %v455
      %567 = vmatpush.bf16.msra.mxu0 %v451
      %568 = vmatpush.bf16.msra.mxu0 %v447
      %569 = vmatpush.bf16.msra.mxu0 %v443
      %570 = vmatpush.bf16.msra.mxu0 %v439
      %571 = vmatmul.bf16.gmra.mxu0 %v274
      %v572 = vpop.f32.mrf.mxu0
      %v573 = vadd.f32 %v270, %v572
      %v574 = vpop.f32.mrf.mxu0
      %575 = vdwg.mxu0
      %576 = vmatpush.bf16.msra.mxu0 0
      %577 = vmatpush.bf16.msra.mxu0 0
      %578 = vmatpush.bf16.msra.mxu0 %v552
      %579 = vmatpush.bf16.msra.mxu0 %v487
      %580 = vmatpush.bf16.msra.mxu0 %v483
      %581 = vmatpush.bf16.msra.mxu0 %v479
      %582 = vmatpush.bf16.msra.mxu0 %v475
      %583 = vmatpush.bf16.msra.mxu0 %v471
      %584 = vmatmul.bf16.gmra.mxu0 %v548
      %v585 = vpop.f32.mrf.mxu0
      %v586 = vadd.f32 %v573, %v585
      %v587 = vpop.f32.mrf.mxu0
      %588 = vdwg.mxu0
      %589 = vmatpush.bf16.msra.mxu0 %v468
      %590 = vmatpush.bf16.msra.mxu0 %v464
      %591 = vmatpush.bf16.msra.mxu0 %v460
      %592 = vmatpush.bf16.msra.mxu0 %v456
      %593 = vmatpush.bf16.msra.mxu0 %v452
      %594 = vmatpush.bf16.msra.mxu0 %v448
      %595 = vmatpush.bf16.msra.mxu0 %v444
      %596 = vmatpush.bf16.msra.mxu0 %v440
      %597 = vmatmul.bf16.gmra.mxu0 %v274
      %v598 = vpop.f32.mrf.mxu0
      %v599 = vadd.f32 %v270, %v598
      %v600 = vpop.f32.mrf.mxu0
      %601 = vdwg.mxu0
      %602 = vmatpush.bf16.msra.mxu0 0
      %603 = vmatpush.bf16.msra.mxu0 0
      %604 = vmatpush.bf16.msra.mxu0 %v555
      %605 = vmatpush.bf16.msra.mxu0 %v488
      %606 = vmatpush.bf16.msra.mxu0 %v484
      %607 = vmatpush.bf16.msra.mxu0 %v480
      %608 = vmatpush.bf16.msra.mxu0 %v476
      %609 = vmatpush.bf16.msra.mxu0 %v472
      %610 = vmatmul.bf16.gmra.mxu0 %v548
      %v611 = vpop.f32.mrf.mxu0
      %v612 = vadd.f32 %v599, %v611
      %v613 = vpop.f32.mrf.mxu0
      %614 = vdwg.mxu0
      %615 = vmatpush.bf16.msra.mxu0 %v469
      %616 = vmatpush.bf16.msra.mxu0 %v465
      %617 = vmatpush.bf16.msra.mxu0 %v461
      %618 = vmatpush.bf16.msra.mxu0 %v457
      %619 = vmatpush.bf16.msra.mxu0 %v453
      %620 = vmatpush.bf16.msra.mxu0 %v449
      %621 = vmatpush.bf16.msra.mxu0 %v445
      %622 = vmatpush.bf16.msra.mxu0 %v441
      %623 = vmatmul.bf16.gmra.mxu0 %v274
      %v624 = vpop.f32.mrf.mxu0
      %v625 = vadd.f32 %v270, %v624
      %v626 = vpop.f32.mrf.mxu0
      %627 = vdwg.mxu0
      %628 = vmatpush.bf16.msra.mxu0 0
      %629 = vmatpush.bf16.msra.mxu0 0
      %630 = vmatpush.bf16.msra.mxu0 %v558
      %631 = vmatpush.bf16.msra.mxu0 %v489
      %632 = vmatpush.bf16.msra.mxu0 %v485
      %633 = vmatpush.bf16.msra.mxu0 %v481
      %634 = vmatpush.bf16.msra.mxu0 %v477
      %635 = vmatpush.bf16.msra.mxu0 %v473
      %636 = vmatmul.bf16.gmra.mxu0 %v548
      %v637 = vpop.f32.mrf.mxu0
      %v638 = vadd.f32 %v625, %v637
      %v639 = vpop.f32.mrf.mxu0
      %640 = vdwg.mxu0
      %641 = vmatpush.bf16.msra.mxu0 %v470
      %642 = vmatpush.bf16.msra.mxu0 %v466
      %643 = vmatpush.bf16.msra.mxu0 %v462
      %644 = vmatpush.bf16.msra.mxu0 %v458
      %645 = vmatpush.bf16.msra.mxu0 %v454
      %646 = vmatpush.bf16.msra.mxu0 %v450
      %647 = vmatpush.bf16.msra.mxu0 %v446
      %648 = vmatpush.bf16.msra.mxu0 %v442
      %649 = vmatmul.bf16.gmra.mxu0 %v274
      %v650 = vpop.f32.mrf.mxu0
      %v651 = vadd.f32 %v270, %v650
      %v652 = vpop.f32.mrf.mxu0
      %653 = vdwg.mxu0
      %654 = vmatpush.bf16.msra.mxu0 0
      %655 = vmatpush.bf16.msra.mxu0 0
      %656 = vmatpush.bf16.msra.mxu0 %v561
      %657 = vmatpush.bf16.msra.mxu0 %v490
      %658 = vmatpush.bf16.msra.mxu0 %v486
      %659 = vmatpush.bf16.msra.mxu0 %v482
      %660 = vmatpush.bf16.msra.mxu0 %v478
      %661 = vmatpush.bf16.msra.mxu0 %v474
      %662 = vmatmul.bf16.gmra.mxu0 %v548
      %v663 = vpop.f32.mrf.mxu0
      %v664 = vadd.f32 %v651, %v663
      %v665 = vpop.f32.mrf.mxu0
      %666 = vdwg.mxu0
      %v667 = vsel %vm550, %v586, 0.0
      %v668 = vsel %vm550, %v612, 0.0
      %v669 = vadd.f32 %v667, %v668
      %v670 = vsel %vm550, %v638, 0.0
      %v671 = vadd.f32 %v669, %v670
      %v672 = vsel %vm550, %v664, 0.0
      %v673 = vadd.f32 %v671, %v672
      %674 = vadd.xlane.f32.xlu0 %v673
      %v675 = vpop.xlane.xlu0 %674
      %v676 = vrcp.pop 512.0
      %v677 = vmul.f32 512.0, %v676
      %v678 = vsub.f32 1.0, %v677
      %v679 = vmul.f32 %v676, %v678
      %v680 = vadd.f32 %v676, %v679
      %vm681 = vweird.f32 %v676
      %v682 = vsel %vm681, %v676, %v680
      %v683 = vmul.f32 %v675, %v682
      %v684 = vsub.f32 %v586, %v683
      %v685 = vsub.f32 %v612, %v683
      %v686 = vsub.f32 %v638, %v683
      %v687 = vsub.f32 %v664, %v683
      %v688 = vmul.f32 %v684, %v684
      %v689 = vmul.f32 %v685, %v685
      %v690 = vmul.f32 %v686, %v686
      %v691 = vmul.f32 %v687, %v687
      %v692 = vsel %vm550, %v688, 0.0
      %v693 = vsel %vm550, %v689, 0.0
      %v694 = vadd.f32 %v692, %v693
      %v695 = vsel %vm550, %v690, 0.0
      %v696 = vadd.f32 %v694, %v695
      %v697 = vsel %vm550, %v691, 0.0
      %v698 = vadd.f32 %v696, %v697
      %699 = vadd.xlane.f32.xlu0 %v698
      %v700 = vpop.xlane.xlu0 %699
      %v701 = vmul.f32 %v700, %v682
      %v702 = vadd.f32 %v701, 1e-05
      %v703 = vrsqrt.pop %v702
      %v704 = vmul.f32 %v703, %v702
      %v705 = vmul.f32 %v704, %v703
      %v706 = vmul.f32 0.5, %v705
      %v707 = vsub.f32 1.5, %v706
      %v708 = vmul.f32 %v703, %v707
      %vm709 = vweird.f32 %v702
      %vm710 = vweird.f32 %v703
      %vm711 = vmor %vm709, %vm710
      %v712 = vsel %vm711, %v703, %v708
      %v713 = vmul.f32 %v684, %v712
      %v714 = vmul.f32 %v685, %v712
      %v715 = vmul.f32 %v686, %v712
      %v716 = vmul.f32 %v687, %v712
      %vm717 = vcmp.ge.f32.partialorder %v713, 0.0
      %vm718 = vcmp.ge.f32.partialorder %v714, 0.0
      %vm719 = vcmp.ge.f32.partialorder %v715, 0.0
      %vm720 = vcmp.ge.f32.partialorder %v716, 0.0
      %v721 = vmul.f32 %v713, 0.01
      %v722 = vmul.f32 %v714, 0.01
      %v723 = vmul.f32 %v715, 0.01
      %v724 = vmul.f32 %v716, 0.01
      %v725 = vsel %vm717, %v713, %v721
      %v726 = vsel %vm718, %v714, %v722
      %v727 = vsel %vm719, %v715, %v723
      %v728 = vsel %vm720, %v716, %v724
      %v729 = vpack.c.bf16 %v726, %v725
      %v730 = vpack.c.bf16 %v728, %v727
      %v733 = vrot.slane %v729, 2
      %v734 = vrot.slane %v730, 4
      %v735 = vrot.slane %v730, 6
      %vm736 = vcmask 1041408
      %v739 = vsel %vm736, %v729, %v733
      %vm740 = vcmask 1045508
      %v743 = vsel %vm740, %v734, %v735
      %v744 = vsel %vm550, %v739, %v743
      %746 = vst [vmem:[%s208] sm:$0xff] %v744
      %s747 = smul.u32 4, %s19
      %p748 = scmp.lt.s32.totalorder %s18, 1
      %s749 = scalar_select %p748, %s18, 1
      %p750 = scmp.lt.s32.totalorder %s747, 3
      %s751 = scalar_select %p750, %s747, 3
      %s752 = smul.addr %s749, 4
      %s753 = sadd.s32 %s751, %s752
      %s754 = smul.addr %s753, 2
      %s755 = scalar_lea.vmem %s3, %s754
      // Predicated region
      $region33: #{forward.23} parent=31 // pred_check
        %p756 = pneg %p116
      $region34: #{forward.23} parent=31 // pred_check_branch
        %758 = sbr.rel (%p756) target = $region36
      $region35: #{forward.23} parent=31 // pred_region
        %s759 = smul.u32 4, %s19
      $region36: #{forward.23} parent=31 // pred_fallthru
        _
    $region32: #{forward.23} parent=5 // pred_fallthru
      _
    %p760 = scmp.le.s32.totalorder 2, %s9
    // Predicated region
    $region37: #{forward.23} parent=5 // pred_check
      %p761 = pneg %p760
    $region38: #{forward.23} parent=5 // pred_check_branch
      %763 = sbr.rel (%p761) target = $region40
    $region39: #{forward.23} parent=5 // pred_region
      %s764 = ssub.s32 %s9, 2
      // Predicated region
      $region41: #{forward.23} parent=39 // pred_check
        %p765 = pneg %p122
      $region42: #{forward.23} parent=39 // pred_check_branch
        %767 = sbr.rel (%p765) target = $region44
      $region43: #{forward.23} parent=39 // pred_region
        %s768 = smul.u32 4, %s21
        %p769 = scmp.lt.s32.totalorder %s20, 1
        %s770 = scalar_select %p769, %s20, 1
        %p771 = scmp.lt.s32.totalorder %s768, 3
        %s772 = scalar_select %p771, %s768, 3
        %s773 = smul.addr %s770, 4
        %s774 = sadd.s32 %s772, %s773
        %s775 = smul.addr %s774, 2
        %s776 = scalar_lea.vmem %s3, %s775
      $region44: #{forward.23} parent=39 // pred_fallthru
        _
    $region40: #{forward.23} parent=5 // pred_fallthru
      _
  $region6: #{forward.23} parent=0 // loop_footer
    %s13 = sadd.s32 1, %s9
  $region7: #{forward.23} parent=0 // loop_footer_branch
    %8 = sbr.rel target = $region3
  $region8: #{forward.23} parent=0 // loop_exit
    _

// kernel: forward.25
$region0: #{forward.25}
  #allocation0 [shape = 'u32[]', space=smem, size = 0x4, offset = 0x4, fixed_abs, tag = 'smem constant byte address 0x4 - core index']
  #allocation1 [shape = 'u32[72,128]{1,0:T(1,128)}', space=vmem, size = 0x9000, scoped, tag = 'internal scratch']
  %s0 = inlined_call_operand.vmem [shape: bf16[2,4,512], index: 0, kind: input, shape index: {}]
  %s1 = inlined_call_operand.vmem [shape: bf16[7,4], index: 1, kind: input, shape index: {}]
  %s2 = inlined_call_operand.vmem [shape: f32[2,7,1], index: 2, kind: input, shape index: {}]
  %s3 = inlined_call_operand.vmem [shape: bf16[7,7], index: 3, kind: input, shape index: {}]
  %s4 = inlined_call_operand.vmem [shape: f32[7,1], index: 4, kind: input, shape index: {}]
  %s5 = inlined_call_operand.vmem [shape: bf16[2,7], index: 5, kind: input, shape index: {}]
  %s6 = inlined_call_operand.vmem [shape: f32[2,1], index: 6, kind: input, shape index: {}]
  %s7 = inlined_call_operand.vmem [shape: f32[2,2,512], index: 7, kind: output, shape index: {}]
  %s8 = sld [smem:[#allocation0]]
  $region61: #{forward.25} parent=0
    _
  %s10 = ssub.s32 1, %s8
  %s11 = scalar_select 0, %s10, %s8
  loop: start=0, step=1, limit=6
  $region2: #{forward.25} parent=0 // loop_pre_header
    _
  $region3: #{forward.25} parent=0 // loop_header
    %s13 = sphi 0, %s17
    %p14 = scmp.ge.s32.totalorder %s13, 6
    %s20 = sphi 0, %s32
    %s21 = sphi 0, %s28
    %s22 = sphi 0, %s20
    %s23 = sphi 0, %s21
    %s24 = sphi 0, %s22
    %s25 = sphi 0, %s23
    %s37 = sphi 0, %s39
    %s40 = sphi 0, %s37
    %s41 = sphi 0, %s40
    %s57 = sphi 0, %s41
    %s61 = sphi 0, %s61
    %s63 = sphi 0, %s61
    %s64 = sphi 0, %s63
    %s78 = sphi 0, %s64
    %s84 = sphi 0, %s86
    %s87 = sphi 0, %s84
    %s88 = sphi 0, %s87
    %s104 = sphi 0, %s88
    %s108 = sphi 0, %s108
    %s110 = sphi 0, %s108
    %s111 = sphi 0, %s110
    %s125 = sphi 0, %s111
    %s129 = sphi 0, %s129
    %s131 = sphi 0, %s129
    %s132 = sphi 0, %s131
    %s146 = sphi 0, %s132
    %s150 = sphi 0, %s150
    %s152 = sphi 0, %s150
    %s153 = sphi 0, %s152
    %s167 = sphi 0, %s153
    %s171 = sphi 0, %s171
    %s173 = sphi 0, %s171
    %s174 = sphi 0, %s173
    %s188 = sphi 0, %s174
    %s196 = sphi 0, %s198
    %s199 = sphi 0, %s196
    %s200 = sphi 0, %s199
    %s216 = sphi 0, %s200
  $region4: #{forward.25} parent=0 // loop_header_branch
    %16 = sbr.rel (%p14) target = $region8
  $region5: #{forward.25} parent=0 // loop_body
    %s18 = ssub.s32 %s13, 1
    %s19 = ssub.s32 %s13, 2
    %s26 = sadd.s32 1, %s21
    %p27 = scmp.ge.s32.totalorder %s26, 2
    %s28 = scalar_select %p27, 0, %s26
    %s29 = sadd.s32 1, %s20
    %s30 = scalar_select %p27, %s29, %s20
    %p31 = scmp.ge.s32.totalorder %s30, 2
    %s32 = scalar_select %p31, 0, %s30
    %s33 = ssub.s32 %s20, %s32
    %s34 = ssub.s32 %s21, %s28
    %s35 = sor.u32 %s33, %s34
    %p36 = scmp.eq.s32.totalorder %s35, 0
    %s38 = sadd.s32 %s37, 1
    %s39 = scalar_select %p36, %s37, %s38
    %p42 = pneg %p36
    %p43 = scmp.eq.s32.totalorder %s13, 3
    %p44 = por %p42, %p43
    %p45 = scmp.ne.s32.totalorder %s37, %s40
    %p46 = scmp.eq.s32.totalorder %s13, 0
    %p47 = por %p45, %p46
    %p48 = scmp.ne.s32.totalorder %s37, %s40
    %p49 = scmp.eq.s32.totalorder %s18, 3
    %p50 = por %p48, %p49
    %p51 = scmp.ne.s32.totalorder %s40, %s41
    %p52 = scmp.eq.s32.totalorder %s18, 0
    %p53 = por %p51, %p52
    %p54 = scmp.ne.s32.totalorder %s40, %s41
    %p55 = scmp.eq.s32.totalorder %s19, 3
    %p56 = por %p54, %p55
    %p58 = scmp.ne.s32.totalorder %s41, %s57
    %p59 = scmp.eq.s32.totalorder %s19, 0
    %p60 = por %p58, %p59
    %s62 = sadd.s32 %s61, 1
    %p65 = scmp.eq.s32.totalorder %s13, 3
    %p66 = scmp.ne.s32.totalorder %s61, %s63
    %p67 = scmp.eq.s32.totalorder %s13, 0
    %p68 = por %p66, %p67
    %p69 = scmp.ne.s32.totalorder %s61, %s63
    %p70 = scmp.eq.s32.totalorder %s18, 3
    %p71 = por %p69, %p70
    %p72 = scmp.ne.s32.totalorder %s63, %s64
    %p73 = scmp.eq.s32.totalorder %s18, 0
    %p74 = por %p72, %p73
    %p75 = scmp.ne.s32.totalorder %s63, %s64
    %p76 = scmp.eq.s32.totalorder %s19, 3
    %p77 = por %p75, %p76
    %p79 = scmp.ne.s32.totalorder %s64, %s78
    %p80 = scmp.eq.s32.totalorder %s19, 0
    %p81 = por %p79, %p80
    %s82 = ssub.s32 %s20, %s32
    %p83 = scmp.eq.s32.totalorder %s82, 0
    %s85 = sadd.s32 %s84, 1
    %s86 = scalar_select %p83, %s84, %s85
    %p89 = pneg %p83
    %p90 = scmp.eq.s32.totalorder %s13, 3
    %p91 = por %p89, %p90
    %p92 = scmp.ne.s32.totalorder %s84, %s87
    %p93 = scmp.eq.s32.totalorder %s13, 0
    %p94 = por %p92, %p93
    %p95 = scmp.ne.s32.totalorder %s84, %s87
    %p96 = scmp.eq.s32.totalorder %s18, 3
    %p97 = por %p95, %p96
    %p98 = scmp.ne.s32.totalorder %s87, %s88
    %p99 = scmp.eq.s32.totalorder %s18, 0
    %p100 = por %p98, %p99
    %p101 = scmp.ne.s32.totalorder %s87, %s88
    %p102 = scmp.eq.s32.totalorder %s19, 3
    %p103 = por %p101, %p102
    %p105 = scmp.ne.s32.totalorder %s88, %s104
    %p106 = scmp.eq.s32.totalorder %s19, 0
    %p107 = por %p105, %p106
    %s109 = sadd.s32 %s108, 1
    %p112 = scmp.eq.s32.totalorder %s13, 3
    %p113 = scmp.ne.s32.totalorder %s108, %s110
    %p114 = scmp.eq.s32.totalorder %s13, 0
    %p115 = por %p113, %p114
    %p116 = scmp.ne.s32.totalorder %s108, %s110
    %p117 = scmp.eq.s32.totalorder %s18, 3
    %p118 = por %p116, %p117
    %p119 = scmp.ne.s32.totalorder %s110, %s111
    %p120 = scmp.eq.s32.totalorder %s18, 0
    %p121 = por %p119, %p120
    %p122 = scmp.ne.s32.totalorder %s110, %s111
    %p123 = scmp.eq.s32.totalorder %s19, 3
    %p124 = por %p122, %p123
    %p126 = scmp.ne.s32.totalorder %s111, %s125
    %p127 = scmp.eq.s32.totalorder %s19, 0
    %p128 = por %p126, %p127
    %s130 = sadd.s32 %s129, 1
    %p133 = scmp.eq.s32.totalorder %s13, 3
    %p134 = scmp.ne.s32.totalorder %s129, %s131
    %p135 = scmp.eq.s32.totalorder %s13, 0
    %p136 = por %p134, %p135
    %p137 = scmp.ne.s32.totalorder %s129, %s131
    %p138 = scmp.eq.s32.totalorder %s18, 3
    %p139 = por %p137, %p138
    %p140 = scmp.ne.s32.totalorder %s131, %s132
    %p141 = scmp.eq.s32.totalorder %s18, 0
    %p142 = por %p140, %p141
    %p143 = scmp.ne.s32.totalorder %s131, %s132
    %p144 = scmp.eq.s32.totalorder %s19, 3
    %p145 = por %p143, %p144
    %p147 = scmp.ne.s32.totalorder %s132, %s146
    %p148 = scmp.eq.s32.totalorder %s19, 0
    %p149 = por %p147, %p148
    %s151 = sadd.s32 %s150, 1
    %p154 = scmp.eq.s32.totalorder %s13, 3
    %p155 = scmp.ne.s32.totalorder %s150, %s152
    %p156 = scmp.eq.s32.totalorder %s13, 0
    %p157 = por %p155, %p156
    %p158 = scmp.ne.s32.totalorder %s150, %s152
    %p159 = scmp.eq.s32.totalorder %s18, 3
    %p160 = por %p158, %p159
    %p161 = scmp.ne.s32.totalorder %s152, %s153
    %p162 = scmp.eq.s32.totalorder %s18, 0
    %p163 = por %p161, %p162
    %p164 = scmp.ne.s32.totalorder %s152, %s153
    %p165 = scmp.eq.s32.totalorder %s19, 3
    %p166 = por %p164, %p165
    %p168 = scmp.ne.s32.totalorder %s153, %s167
    %p169 = scmp.eq.s32.totalorder %s19, 0
    %p170 = por %p168, %p169
    %s172 = sadd.s32 %s171, 1
    %p175 = scmp.eq.s32.totalorder %s13, 3
    %p176 = scmp.ne.s32.totalorder %s171, %s173
    %p177 = scmp.eq.s32.totalorder %s13, 0
    %p178 = por %p176, %p177
    %p179 = scmp.ne.s32.totalorder %s171, %s173
    %p180 = scmp.eq.s32.totalorder %s18, 3
    %p181 = por %p179, %p180
    %p182 = scmp.ne.s32.totalorder %s173, %s174
    %p183 = scmp.eq.s32.totalorder %s18, 0
    %p184 = por %p182, %p183
    %p185 = scmp.ne.s32.totalorder %s173, %s174
    %p186 = scmp.eq.s32.totalorder %s19, 3
    %p187 = por %p185, %p186
    %p189 = scmp.ne.s32.totalorder %s174, %s188
    %p190 = scmp.eq.s32.totalorder %s19, 0
    %p191 = por %p189, %p190
    %s192 = ssub.s32 %s20, %s32
    %s193 = ssub.s32 %s21, %s28
    %s194 = sor.u32 %s192, %s193
    %p195 = scmp.eq.s32.totalorder %s194, 0
    %s197 = sadd.s32 %s196, 1
    %s198 = scalar_select %p195, %s196, %s197
    %p201 = pneg %p195
    %p202 = scmp.eq.s32.totalorder %s13, 3
    %p203 = por %p201, %p202
    %p204 = scmp.ne.s32.totalorder %s196, %s199
    %p205 = scmp.eq.s32.totalorder %s13, 0
    %p206 = por %p204, %p205
    %p207 = scmp.ne.s32.totalorder %s196, %s199
    %p208 = scmp.eq.s32.totalorder %s18, 3
    %p209 = por %p207, %p208
    %p210 = scmp.ne.s32.totalorder %s199, %s200
    %p211 = scmp.eq.s32.totalorder %s18, 0
    %p212 = por %p210, %p211
    %p213 = scmp.ne.s32.totalorder %s199, %s200
    %p214 = scmp.eq.s32.totalorder %s19, 3
    %p215 = por %p213, %p214
    %p217 = scmp.ne.s32.totalorder %s200, %s216
    %p218 = scmp.eq.s32.totalorder %s19, 0
    %p219 = por %p217, %p218
    %p220 = scmp.le.s32.totalorder 1, %s13
    %p221 = scmp.lt.s32.totalorder %s13, 5
    %p222 = pnand %p220, %p221
    %p223 = pneg %p222
    // Predicated region
    $region9: #{forward.25} parent=5 // pred_check
      _
    $region10: #{forward.25} parent=5 // pred_check_branch
      %225 = sbr.rel (%p222) target = $region12
    $region11: #{forward.25} parent=5 // pred_region
      %s226 = ssub.s32 %s13, 1
      // Predicated region
      $region13: #{forward.25} parent=11 // pred_check
        %p227 = pneg %p74
      $region14: #{forward.25} parent=11 // pred_check_branch
        %229 = sbr.rel (%p227) target = $region16
      $region15: #{forward.25} parent=11 // pred_region
        _
      $region16: #{forward.25} parent=11 // pred_fallthru
        _
      // Predicated region
      $region17: #{forward.25} parent=11 // pred_check
        %p230 = pneg %p121
      $region18: #{forward.25} parent=11 // pred_check_branch
        %232 = sbr.rel (%p230) target = $region20
      $region19: #{forward.25} parent=11 // pred_region
        _
      $region20: #{forward.25} parent=11 // pred_fallthru
        _
      // Predicated region
      $region21: #{forward.25} parent=11 // pred_check
        %p233 = pneg %p142
      $region22: #{forward.25} parent=11 // pred_check_branch
        %235 = sbr.rel (%p233) target = $region24
      $region23: #{forward.25} parent=11 // pred_region
        _
      $region24: #{forward.25} parent=11 // pred_fallthru
        _
      // Predicated region
      $region25: #{forward.25} parent=11 // pred_check
        %p236 = pneg %p163
      $region26: #{forward.25} parent=11 // pred_check_branch
        %238 = sbr.rel (%p236) target = $region28
      $region27: #{forward.25} parent=11 // pred_region
        _
      $region28: #{forward.25} parent=11 // pred_fallthru
        _
      // Predicated region
      $region29: #{forward.25} parent=11 // pred_check
        %p239 = pneg %p184
      $region30: #{forward.25} parent=11 // pred_check_branch
        %241 = sbr.rel (%p239) target = $region32
      $region31: #{forward.25} parent=11 // pred_region
        _
      $region32: #{forward.25} parent=11 // pred_fallthru
        _
    $region12: #{forward.25} parent=5 // pred_fallthru
      _
    %p242 = scmp.lt.s32.totalorder %s13, 4
    // Predicated region
    $region33: #{forward.25} parent=5 // pred_check
      %p243 = pneg %p242
    $region34: #{forward.25} parent=5 // pred_check_branch
      %245 = sbr.rel (%p243) target = $region36
    $region35: #{forward.25} parent=5 // pred_region
      // Predicated region
      $region37: #{forward.25} parent=35 // pred_check
        %p246 = pneg %p47
      $region38: #{forward.25} parent=35 // pred_check_branch
        %248 = sbr.rel (%p246) target = $region40
      $region39: #{forward.25} parent=35 // pred_region
        %s249 = smul.u32 2, %s21
        %p250 = scmp.lt.s32.totalorder %s20, 1
        %s251 = scalar_select %p250, %s20, 1
        %p252 = scmp.lt.s32.totalorder %s249, 3
        %s253 = scalar_select %p252, %s249, 3
        %s254 = smul.addr %s251, 4
        %s255 = sadd.s32 %s253, %s254
        %s256 = smul.addr %s255, 2
        %s257 = scalar_lea.vmem %s0, %s256
        %s258 = smul.u32 2, %s21
      $region40: #{forward.25} parent=35 // pred_fallthru
        _
      // Predicated region
      $region41: #{forward.25} parent=35 // pred_check
        %p259 = pneg %p94
      $region42: #{forward.25} parent=35 // pred_check_branch
        %261 = sbr.rel (%p259) target = $region44
      $region43: #{forward.25} parent=35 // pred_region
        %p262 = scmp.lt.s32.totalorder %s20, 1
        %s263 = scalar_select %p262, %s20, 1
        %s264 = smul.addr %s263, 8
        %s265 = scalar_lea.vmem %s2, %s264
      $region44: #{forward.25} parent=35 // pred_fallthru
        _
    $region36: #{forward.25} parent=5 // pred_fallthru
      _
    %p266 = scmp.le.s32.totalorder 1, %s13
    %p267 = scmp.lt.s32.totalorder %s13, 5
    %p268 = pnand %p266, %p267
    %p269 = pneg %p268
    // Predicated region
    $region45: #{forward.25} parent=5 // pred_check
      _
    $region46: #{forward.25} parent=5 // pred_check_branch
      %271 = sbr.rel (%p268) target = $region48
    $region47: #{forward.25} parent=5 // pred_region
      %s272 = ssub.s32 %s13, 1
      %s273 = smul.u32 2, %s23
      %p274 = scmp.lt.s32.totalorder %s22, 1
      %s275 = scalar_select %p274, %s22, 1
      %p276 = scmp.lt.s32.totalorder %s273, 3
      %s277 = scalar_select %p276, %s273, 3
      %s278 = smul.addr %s275, 4
      %s279 = sadd.s32 %s277, %s278
      %s280 = smul.addr %s279, 2
      %s281 = scalar_lea.vmem %s0, %s280
      %p282 = pneg %p53
      %p283 = pneg %p50
      %p284 = pneg %p74
      %p285 = pneg %p71
      %p286 = scmp.lt.s32.totalorder %s22, 1
      %s287 = scalar_select %p286, %s22, 1
      %s288 = smul.addr %s287, 8
      %s289 = scalar_lea.vmem %s2, %s288
      %p290 = pneg %p100
      %p291 = pneg %p97
      %p292 = pneg %p121
      %p293 = pneg %p118
      %p294 = pneg %p142
      %p295 = pneg %p139
      %p296 = pneg %p163
      %p297 = pneg %p160
      %p298 = pneg %p184
      %p299 = pneg %p181
      %p300 = pneg %p212
      %p301 = pneg %p209
      %s302 = smul.u32 2, %s23
      %p303 = scmp.lt.s32.totalorder %s22, 1
      %s304 = scalar_select %p303, %s22, 1
      %p305 = scmp.lt.s32.totalorder %s302, 3
      %s306 = scalar_select %p305, %s302, 3
      %s307 = smul.addr %s304, 4
      %s308 = sadd.s32 %s306, %s307
      %s309 = smul.addr %s308, 2
      %s310 = scalar_lea.vmem %s7, %s309
      %s311 = smul.u32 2, %s23
      %p312 = scmp.lt.s32.totalorder %s22, 1
      %s313 = scalar_select %p312, %s22, 1
      %p314 = scmp.lt.s32.totalorder %s311, 3
      %s315 = scalar_select %p314, %s311, 3
      %s316 = smul.addr %s313, 4
      %s317 = sadd.s32 %s315, %s316
      %s318 = smul.addr %s317, 2
      %s319 = scalar_lea.vmem %s0, %s318
      %s320 = smul.u32 2, %s23
      %p321 = scmp.lt.s32.totalorder %s22, 1
      %s322 = scalar_select %p321, %s22, 1
      %s323 = smul.addr %s322, 8
      %s324 = scalar_lea.vmem %s2, %s323
      %s325 = smul.u32 2, %s23
      %p326 = scmp.lt.s32.totalorder %s22, 1
      %s327 = scalar_select %p326, %s22, 1
      %p328 = scmp.lt.s32.totalorder %s325, 3
      %s329 = scalar_select %p328, %s325, 3
      %s330 = smul.addr %s327, 4
      %s331 = sadd.s32 %s329, %s330
      %s332 = smul.addr %s331, 2
      %s333 = scalar_lea.vmem %s7, %s332
      %s334 = smul.u32 2, %s23
      %v336 = vld [vmem:[%s319] sm:$0xf]
      %v337 = vld [vmem:[%s1] sm:$0xf]
      %v338 = vld [vmem:[%s324] sm:$0x7f]
      %340 = vset.pattern.permute.xlu0 0
      %341 = vperm.xlu0 %340, %v338
      %v342 = vpop.permute.xlu0 %341
      %345 = vst [vmem:[#allocation1] ss:$4 sm:$0xff] %v336
      %v346 = vld.sshfl [vmem:[#allocation1] sm:$0xff pattern:$0x73625140]
      %v347 = vld.sshfl [vmem:[#allocation1 + $0x8] sm:$0xff pattern:$0x73625140]
      %vm348 = vcmask 31744
      %v350 = vsel %vm348, %v337, 0
      %vm352 = vcmask 1041408
      %v353 = vsel %vm352, %v346, 0
      %v355 = vsel %vm352, %v347, 0
      %357 = vmatpush.bf16.msra.mxu0 0
      %358 = vmatpush.bf16.msra.mxu0 0
      %359 = vmatpush.bf16.msra.mxu0 0
      %360 = vmatpush.bf16.msra.mxu0 0
      %361 = vmatpush.bf16.msra.mxu0 0
      %362 = vmatpush.bf16.msra.mxu0 0
      %363 = vmatpush.bf16.msra.mxu0 0
      %364 = vmatpush.bf16.msra.mxu0 %v353
      %365 = vmatmul.bf16.gmra.mxu0 %v350
      %v366 = vpop.f32.mrf.mxu0
      %v367 = vadd.f32 %v342, %v366
      %v368 = vpop.f32.mrf.mxu0
      %369 = vdwg.mxu0
      %370 = vmatpush.bf16.msra.mxu0 0
      %371 = vmatpush.bf16.msra.mxu0 0
      %372 = vmatpush.bf16.msra.mxu0 0
      %373 = vmatpush.bf16.msra.mxu0 0
      %374 = vmatpush.bf16.msra.mxu0 0
      %375 = vmatpush.bf16.msra.mxu0 0
      %376 = vmatpush.bf16.msra.mxu0 0
      %377 = vmatpush.bf16.msra.mxu0 %v355
      %378 = vmatmul.bf16.gmra.mxu0 %v350
      %v379 = vpop.f32.mrf.mxu0
      %v380 = vadd.f32 %v342, %v379
      %v381 = vpop.f32.mrf.mxu0
      %382 = vdwg.mxu0
      %vm383 = vcmp.ge.f32.partialorder %v367, 0.0
      %vm384 = vcmp.ge.f32.partialorder %v380, 0.0
      %v385 = vmul.f32 %v367, 0.01
      %v386 = vmul.f32 %v380, 0.01
      %v387 = vsel %vm383, %v367, %v385
      %v388 = vsel %vm384, %v380, %v386
      %v389 = vld [vmem:[%s3] sm:$0xf]
      %v390 = vpack.c.bf16 %v387, %v387
      %v391 = vpack.c.bf16 %v388, %v388
      %v392 = vld [vmem:[%s4] sm:$0x7f]
      %394 = vset.pattern.permute.xlu0 0
      %395 = vperm.xlu0 %394, %v392
      %v396 = vpop.permute.xlu0 %395
      %vm398 = vcmask 56320
      %v400 = vsel %vm398, %v389, 0
      %vm402 = vcmask 1042432
      %vm403 = vcmask 1043456
      %v404 = vsel %vm402, 4294967295, 65535
      %v405 = vsel %vm403, %v404, 0
      %v407 = vand.u32 %v390, %v405
      %v410 = vand.u32 %v391, %v405
      %412 = vmatpush.bf16.msra.mxu0 0
      %413 = vmatpush.bf16.msra.mxu0 0
      %414 = vmatpush.bf16.msra.mxu0 0
      %415 = vmatpush.bf16.msra.mxu0 0
      %416 = vmatpush.bf16.msra.mxu0 0
      %417 = vmatpush.bf16.msra.mxu0 0
      %418 = vmatpush.bf16.msra.mxu0 0
      %419 = vmatpush.bf16.msra.mxu0 %v407
      %420 = vmatmul.bf16.gmra.mxu0 %v400
      %v421 = vpop.f32.mrf.mxu0
      %v422 = vadd.f32 %v396, %v421
      %v423 = vpop.f32.mrf.mxu0
      %424 = vdwg.mxu0
      %425 = vmatpush.bf16.msra.mxu0 0
      %426 = vmatpush.bf16.msra.mxu0 0
      %427 = vmatpush.bf16.msra.mxu0 0
      %428 = vmatpush.bf16.msra.mxu0 0
      %429 = vmatpush.bf16.msra.mxu0 0
      %430 = vmatpush.bf16.msra.mxu0 0
      %431 = vmatpush.bf16.msra.mxu0 0
      %432 = vmatpush.bf16.msra.mxu0 %v410
      %433 = vmatmul.bf16.gmra.mxu0 %v400
      %v434 = vpop.f32.mrf.mxu0
      %v435 = vadd.f32 %v396, %v434
      %v436 = vpop.f32.mrf.mxu0
      %437 = vdwg.mxu0
      %vm438 = vcmp.ge.f32.partialorder %v422, 0.0
      %vm439 = vcmp.ge.f32.partialorder %v435, 0.0
      %v440 = vmul.f32 %v422, 0.01
      %v441 = vmul.f32 %v435, 0.01
      %v442 = vsel %vm438, %v422, %v440
      %v443 = vsel %vm439, %v435, %v441
      %v444 = vld [vmem:[%s5] sm:$0x1]
      %v445 = vpack.c.bf16 %v442, %v442
      %v446 = vpack.c.bf16 %v443, %v443
      %v447 = vld [vmem:[%s6] sm:$0x3]
      %449 = vset.pattern.permute.xlu0 0
      %450 = vperm.xlu0 %449, %v447
      %v451 = vpop.permute.xlu0 %450
      %v454 = vsel %vm398, %v444, 0
      %v457 = vand.u32 %v445, %v405
      %v460 = vand.u32 %v446, %v405
      %462 = vmatpush.bf16.msra.mxu0 0
      %463 = vmatpush.bf16.msra.mxu0 0
      %464 = vmatpush.bf16.msra.mxu0 0
      %465 = vmatpush.bf16.msra.mxu0 0
      %466 = vmatpush.bf16.msra.mxu0 0
      %467 = vmatpush.bf16.msra.mxu0 0
      %468 = vmatpush.bf16.msra.mxu0 0
      %469 = vmatpush.bf16.msra.mxu0 %v457
      %470 = vmatmul.bf16.gmra.mxu0 %v454
      %v471 = vpop.f32.mrf.mxu0
      %v472 = vadd.f32 %v451, %v471
      %v473 = vpop.f32.mrf.mxu0
      %474 = vdwg.mxu0
      %475 = vmatpush.bf16.msra.mxu0 0
      %476 = vmatpush.bf16.msra.mxu0 0
      %477 = vmatpush.bf16.msra.mxu0 0
      %478 = vmatpush.bf16.msra.mxu0 0
      %479 = vmatpush.bf16.msra.mxu0 0
      %480 = vmatpush.bf16.msra.mxu0 0
      %481 = vmatpush.bf16.msra.mxu0 0
      %482 = vmatpush.bf16.msra.mxu0 %v460
      %483 = vmatmul.bf16.gmra.mxu0 %v454
      %v484 = vpop.f32.mrf.mxu0
      %v485 = vadd.f32 %v451, %v484
      %v486 = vpop.f32.mrf.mxu0
      %487 = vdwg.mxu0
      %v490 = vrot.slane %v485, 6
      %v491 = vsel %vm352, %v472, %v490
      %493 = vst [vmem:[%s333] sm:$0xf] %v491
      %s494 = smul.u32 2, %s23
      %p495 = scmp.lt.s32.totalorder %s22, 1
      %s496 = scalar_select %p495, %s22, 1
      %p497 = scmp.lt.s32.totalorder %s494, 3
      %s498 = scalar_select %p497, %s494, 3
      %s499 = smul.addr %s496, 4
      %s500 = sadd.s32 %s498, %s499
      %s501 = smul.addr %s500, 2
      %s502 = scalar_lea.vmem %s7, %s501
      // Predicated region
      $region49: #{forward.25} parent=47 // pred_check
        %p503 = pneg %p209
      $region50: #{forward.25} parent=47 // pred_check_branch
        %505 = sbr.rel (%p503) target = $region52
      $region51: #{forward.25} parent=47 // pred_region
        %s506 = smul.u32 2, %s23
      $region52: #{forward.25} parent=47 // pred_fallthru
        _
    $region48: #{forward.25} parent=5 // pred_fallthru
      _
    %p507 = scmp.le.s32.totalorder 2, %s13
    // Predicated region
    $region53: #{forward.25} parent=5 // pred_check
      %p508 = pneg %p507
    $region54: #{forward.25} parent=5 // pred_check_branch
      %510 = sbr.rel (%p508) target = $region56
    $region55: #{forward.25} parent=5 // pred_region
      %s511 = ssub.s32 %s13, 2
      // Predicated region
      $region57: #{forward.25} parent=55 // pred_check
        %p512 = pneg %p215
      $region58: #{forward.25} parent=55 // pred_check_branch
        %514 = sbr.rel (%p512) target = $region60
      $region59: #{forward.25} parent=55 // pred_region
        %s515 = smul.u32 2, %s25
        %p516 = scmp.lt.s32.totalorder %s24, 1
        %s517 = scalar_select %p516, %s24, 1
        %p518 = scmp.lt.s32.totalorder %s515, 3
        %s519 = scalar_select %p518, %s515, 3
        %s520 = smul.addr %s517, 4
        %s521 = sadd.s32 %s519, %s520
        %s522 = smul.addr %s521, 2
        %s523 = scalar_lea.vmem %s7, %s522
      $region60: #{forward.25} parent=55 // pred_fallthru
        _
    $region56: #{forward.25} parent=5 // pred_fallthru
      _
  $region6: #{forward.25} parent=0 // loop_footer
    %s17 = sadd.s32 1, %s13
  $region7: #{forward.25} parent=0 // loop_footer_branch
    %12 = sbr.rel target = $region3
  $region8: #{forward.25} parent=0 // loop_exit
    _

</llo_original>
